<compile_context>
chip_gen: v7x
topology: tpu7x:2x2x1
jax: 0.10.0
libtpu: 0.0.40
codegen_flags: <defaults>
</compile_context>

<pallas_src>
import functools

import jax
import jax.numpy as jnp
from jax import lax
from jax.experimental import pallas as pl
from jax.experimental.pallas import tpu as pltpu

EPS = 1e-5  # PyTorch BatchNorm2d default eps


def _fold_bn(gamma, beta, mean, var):
    """Fold eval-mode BatchNorm into a per-channel scale/shift (f32)."""
    scale = gamma / jnp.sqrt(var + EPS)
    shift = beta - mean * scale
    return (scale.reshape(1, -1).astype(jnp.float32),
            shift.reshape(1, -1).astype(jnp.float32))


def _pack_grouped_weight(w_oihw, groups, target_k=256):
    """PyTorch OIHW grouped 3x3 weight -> (n_sg, 3, 3*Cin_sg, Cout_sg).

    Groups are blocked into super-groups so each matmul's contraction depth is
    ~target_k (block-diagonal only within a super-group), and the kw taps are
    folded into the contraction axis (K = 3 * Cin_sg, kw-major ordering).
    This keeps the MXU deep without the ~groups-x zero-FLOP / zero-VMEM waste
    of a fully dense block-diagonal expansion.
    """
    cout, cin_g, _, _ = w_oihw.shape
    cout_g = cout // groups
    gps = min(groups, max(1, target_k // max(cin_g, 1)))   # groups per super-group
    while groups % gps != 0:
        gps -= 1
    n_sg = groups // gps
    cin_sg = cin_g * gps
    cout_sg = cout_g * gps
    w_t = jnp.transpose(w_oihw, (2, 3, 1, 0))               # (3, 3, Cin_g, Cout)
    packed = jnp.zeros((n_sg, 3, 3 * cin_sg, cout_sg), w_t.dtype)
    for sg in range(n_sg):
        for gl in range(gps):
            g = sg * gps + gl
            for kw in range(3):
                packed = packed.at[
                    sg, :,
                    kw * cin_sg + gl * cin_g: kw * cin_sg + (gl + 1) * cin_g,
                    gl * cout_g:(gl + 1) * cout_g].set(
                        w_t[:, kw, :, g * cout_g:(g + 1) * cout_g])
    return packed


# --------------------------------------------------------------------------
# Kernel 1: 1x1 conv as matmul (BN scale pre-folded into w) + shift (+ ReLU)
# --------------------------------------------------------------------------
def _matmul_bias_kernel(x_ref, w_ref, b_ref, o_ref, *, relu):
    acc = jnp.dot(x_ref[...], w_ref[...], preferred_element_type=jnp.float32)
    y = acc + b_ref[...]
    if relu:
        y = jnp.maximum(y, 0.0)
    o_ref[...] = y.astype(o_ref.dtype)


def pointwise_conv_bn(x2d, w, shift, *, relu, out_dtype=jnp.bfloat16, tm=1024):
    """x2d: (M, Cin) bf16, w: (Cin, Cout) bf16 (BN-scale folded), shift: (1, Cout) f32.

    NOTE: masked tail blocks (M % tm != 0) matmul over padded/undefined rows;
    results are discarded by the masked store.  Do NOT add a cross-row
    reduction inside this kernel (the GAP-fused variant below masks rows).
    """
    M, Cin = x2d.shape
    Cout = w.shape[1]
    tm = M if M <= tm else tm
    grid = (pl.cdiv(M, tm),)
    return pl.pallas_call(
        functools.partial(_matmul_bias_kernel, relu=relu),
        out_shape=jax.ShapeDtypeStruct((M, Cout), out_dtype),
        grid=grid,
        in_specs=[
            pl.BlockSpec((tm, Cin), lambda i: (i, 0)),
            pl.BlockSpec((Cin, Cout), lambda i: (0, 0)),
            pl.BlockSpec((1, Cout), lambda i: (0, 0)),
        ],
        out_specs=pl.BlockSpec((tm, Cout), lambda i: (i, 0)),
        compiler_params=pltpu.CompilerParams(dimension_semantics=("parallel",)),
    )(x2d, w, shift)


# --------------------------------------------------------------------------
# Kernel 2: 1x1 conv + shift fused with SE global-average-pool partial sums.
#           Grid (N, HW blocks); pooled sums accumulated on an "arbitrary"
#           HW axis (pl.when init) -> saves a full HBM re-read of out3.
# --------------------------------------------------------------------------
def _conv1x1_gap_kernel(x_ref, w_ref, b_ref, o_ref, psum_ref, *, hw_total):
    j = pl.program_id(1)
    thw = x_ref.shape[1]
    y = jnp.dot(x_ref[0, :, :], w_ref[...],
                preferred_element_type=jnp.float32) + b_ref[...]
    if hw_total % thw != 0:
        # Mask rows past the real extent so the pooled sum stays exact.
        rows = j * thw + lax.broadcasted_iota(jnp.int32, (thw, 1), 0)
        y = jnp.where(rows < hw_total, y, 0.0)
    o_ref[0, :, :] = y.astype(o_ref.dtype)          # conv3 has no ReLU

    @pl.when(j == 0)
    def _init():
        psum_ref[...] = jnp.zeros_like(psum_ref)

    psum_ref[...] += jnp.sum(y, axis=0).reshape(1, 1, -1)


def conv1x1_bn_gap(x3d, w, shift, *, out_dtype=jnp.bfloat16, thw=512):
    """x3d: (N, HW, Cin) bf16; returns ((N, HW, Cout) bf16, (N, 1, Cout) f32 sums)."""
    N, HW, Cin = x3d.shape
    Cout = w.shape[1]
    thw = HW if HW <= thw else thw
    # TODO(synk): for very large Cout on v7x, add a lane-dense Cout grid axis
    # (512-1024 wide) to bound the per-step weight/output VMEM footprint.
    return pl.pallas_call(
        functools.partial(_conv1x1_gap_kernel, hw_total=HW),
        out_shape=(jax.ShapeDtypeStruct((N, HW, Cout), out_dtype),
                   jax.ShapeDtypeStruct((N, 1, Cout), jnp.float32)),
        grid=(N, pl.cdiv(HW, thw)),
        in_specs=[
            pl.BlockSpec((1, thw, Cin), lambda n, j: (n, j, 0)),
            pl.BlockSpec((Cin, Cout), lambda n, j: (0, 0)),
            pl.BlockSpec((1, Cout), lambda n, j: (0, 0)),
        ],
        out_specs=(
            pl.BlockSpec((1, thw, Cout), lambda n, j: (n, j, 0)),
            pl.BlockSpec((1, 1, Cout), lambda n, j: (n, 0, 0)),
        ),
        compiler_params=pltpu.CompilerParams(
            dimension_semantics=("parallel", "arbitrary")),
    )(x3d, w, shift)


# --------------------------------------------------------------------------
# Kernel 3: 3x3 grouped (super-grouped) conv + shift + ReLU.
#           Grid (N, output-row blocks); kw folded into the contraction.
# --------------------------------------------------------------------------
def _conv3x3_bn_relu_kernel(x_ref, w_ref, b_ref, o_ref, *, stride, dilation):
    _, hb, Wo, _ = o_ref.shape
    n_sg, _, k3, cout_sg = w_ref.shape
    cin_sg = k3 // 3
    j = pl.program_id(1)
    row_span = (hb - 1) * stride + 1
    col_span = (Wo - 1) * stride + 1

    for sg in range(n_sg):
        c0 = sg * cin_sg
        acc = jnp.zeros((hb * Wo, cout_sg), jnp.float32)
        for kh in range(3):
            h0 = j * (hb * stride) + kh * dilation
            if n_sg == 1:
                rows = x_ref[0, pl.ds(h0, row_span), :, :]
            else:
                rows = x_ref[0, pl.ds(h0, row_span), :, c0:c0 + cin_sg]
            if stride > 1:
                # TODO(synk): pre-split x into spatial phases in the wrapper to
                # avoid the in-kernel strided relayout for stride=2 stages.
                rows = rows[::stride]
            taps = []
            for kw in range(3):
                w0 = kw * dilation
                t = rows[:, w0:w0 + col_span, :]
                if stride > 1:
                    t = t[:, ::stride, :]
                taps.append(t)
            patch = jnp.concatenate(taps, axis=-1).reshape(hb * Wo, 3 * cin_sg)
            acc = acc + jnp.dot(patch, w_ref[sg, kh, :, :],
                                preferred_element_type=jnp.float32)
        y = acc + b_ref[:, sg * cout_sg:(sg + 1) * cout_sg]
        res = jnp.maximum(y, 0.0).reshape(hb, Wo, cout_sg).astype(o_ref.dtype)
        if n_sg == 1:
            o_ref[0, :, :, :] = res
        else:
            o_ref[0, :, :, sg * cout_sg:(sg + 1) * cout_sg] = res


def conv3x3_bn_relu(x_nhwc, w_packed, shift, *, stride, dilation,
                    out_dtype=jnp.bfloat16):
    """x_nhwc bf16, w_packed (n_sg, 3, 3*Cin_sg, Cout_sg) bf16 (BN-scale folded),
    shift (1, Cout) f32."""
    N, H, W, Cin = x_nhwc.shape
    n_sg, _, k3, cout_sg = w_packed.shape
    Cout = n_sg * cout_sg
    pad = dilation                               # PyTorch module uses padding=dilation
    Ho = (H + 2 * pad - dilation * 2 - 1) // stride + 1
    Wo = (W + 2 * pad - dilation * 2 - 1) // stride + 1
    x_pad = jnp.pad(x_nhwc, ((0, 0), (pad, pad), (pad, pad), (0, 0)))
    Hp, Wp = H + 2 * pad, W + 2 * pad

    hb = Ho                                      # output-row block (parallel axis)
    for cand in (8, 16, 4, 2):
        if Ho % cand == 0:
            hb = cand
            break

    # TODO(synk): halo-windowed input blocks (pl.Element over Hp) would bound
    # per-step activation VMEM further; the full padded image per batch is kept
    # resident here and only the output is row-tiled.
    # TODO(synk): pipeline_mode=pl.Buffered(1) on the constant weight/shift
    # specs would save one duplicate buffer (small after super-grouping).
    return pl.pallas_call(
        functools.partial(_conv3x3_bn_relu_kernel,
                          stride=stride, dilation=dilation),
        out_shape=jax.ShapeDtypeStruct((N, Ho, Wo, Cout), out_dtype),
        grid=(N, Ho // hb),
        in_specs=[
            pl.BlockSpec((1, Hp, Wp, Cin), lambda n, j: (n, 0, 0, 0)),
            pl.BlockSpec((n_sg, 3, k3, cout_sg), lambda n, j: (0, 0, 0, 0)),
            pl.BlockSpec((1, Cout), lambda n, j: (0, 0)),
        ],
        out_specs=pl.BlockSpec((1, hb, Wo, Cout), lambda n, j: (n, j, 0, 0)),
        compiler_params=pltpu.CompilerParams(
            dimension_semantics=("parallel", "parallel")),
    )(x_pad, w_packed, shift)


# --------------------------------------------------------------------------
# Kernel 4: SE channel scale + residual add + final ReLU (elementwise, tiled)
# --------------------------------------------------------------------------
def _se_scale_residual_kernel(x_ref, id_ref, s_ref, o_ref):
    y = (x_ref[...].astype(jnp.float32) * s_ref[...]
         + id_ref[...].astype(jnp.float32))
    o_ref[...] = jnp.maximum(y, 0.0).astype(o_ref.dtype)


def se_scale_residual(x3, identity, gate, *, thw=512, out_dtype=jnp.bfloat16):
    """x3, identity: (N, HW, C) bf16; gate: (N, 1, C) f32. bf16 output halves
    the HBM writeback + the following layout-transpose traffic."""
    N, HW, C = x3.shape
    thw = HW if HW <= thw else thw
    return pl.pallas_call(
        _se_scale_residual_kernel,
        out_shape=jax.ShapeDtypeStruct((N, HW, C), out_dtype),
        grid=(N, pl.cdiv(HW, thw)),
        in_specs=[
            pl.BlockSpec((1, thw, C), lambda n, j: (n, j, 0)),
            pl.BlockSpec((1, thw, C), lambda n, j: (n, j, 0)),
            pl.BlockSpec((1, 1, C), lambda n, j: (n, 0, 0)),
        ],
        out_specs=pl.BlockSpec((1, thw, C), lambda n, j: (n, j, 0)),
        compiler_params=pltpu.CompilerParams(
            dimension_semantics=("parallel", "parallel")),
    )(x3, identity, gate)


# --------------------------------------------------------------------------
# Full Bottleneck forward (downsample=None path: stride=1, Cin == 4*out_channel)
# --------------------------------------------------------------------------
def bottleneck_forward(x_nchw, p, *, stride=1, dilation=1, groups=1):
    # Cast first, then layout-change: the NCHW->NHWC transpose moves bf16.
    x_bf = jnp.transpose(x_nchw.astype(jnp.bfloat16), (0, 2, 3, 1))
    N, H, W, Cin = x_bf.shape

    s1, b1 = _fold_bn(*p["bn1"])
    s2, b2 = _fold_bn(*p["bn2"])
    s3, b3 = _fold_bn(*p["bn3"])

    # Conv weights with BN scale folded into the output channels, cast to bf16.
    w1 = (p["conv1_w"][:, :, 0, 0].T * s1).astype(jnp.bfloat16)        # (Cin, width)
    w2_scaled = p["conv2_w"] * s2[0][:, None, None, None]
    w2 = _pack_grouped_weight(w2_scaled, groups).astype(jnp.bfloat16)  # super-grouped
    w3 = (p["conv3_w"][:, :, 0, 0].T * s3).astype(jnp.bfloat16)        # (width, Cexp)
    se_w1 = p["se_w1"][:, :, 0, 0].T                                   # (Cexp, Cexp//16)
    se_w2 = p["se_w2"][:, :, 0, 0].T                                   # (Cexp//16, Cexp)
    # TODO(synk): fp8 weight quantization for w1/w3 on v7x (bf16+fp8 MXU) if
    # the accuracy budget allows.

    width = w1.shape[1]
    Cexp = w3.shape[1]

    # downsample is None in this configuration -> identity is the raw input.
    # TODO(synk): a non-None downsample is an external nn.Module argument; only
    # the identity residual path is implemented here.
    assert stride == 1 and Cin == Cexp, "downsample residual path not implemented"

    # conv1 (1x1) + bn1 + relu
    out1 = pointwise_conv_bn(x_bf.reshape(N * H * W, Cin), w1, b1, relu=True)
    out1 = out1.reshape(N, H, W, width)

    # conv2 (3x3, super-grouped / strided / dilated) + bn2 + relu
    out2 = conv3x3_bn_relu(out1, w2, b2, stride=stride, dilation=dilation)
    _, Ho, Wo, _ = out2.shape
    HW = Ho * Wo

    # conv3 (1x1) + bn3 (no relu), fused with SE global-average-pool sums (f32)
    out3, psum = conv1x1_bn_gap(out2.reshape(N, HW, width), w3, b3)

    # SE gate (FC -> ReLU -> FC -> sigmoid): lane-sparse tiny FCs in plain JAX.
    pooled = psum.reshape(N, Cexp) / float(HW)
    h = jnp.maximum(pooled @ se_w1 + p["se_b1"][None, :], 0.0)
    gate = jax.nn.sigmoid(h @ se_w2 + p["se_b2"][None, :])             # (N, Cexp) f32

    identity = x_bf.reshape(N, H * W, Cin)
    out = se_scale_residual(out3, identity, gate.reshape(N, 1, Cexp))  # bf16
    out_nchw = jnp.transpose(out.reshape(N, Ho, Wo, Cexp), (0, 3, 1, 2))
    return out_nchw.astype(jnp.float32)          # f32 cast only after the transpose


# --------------------------------------------------------------------------
# Pure-JAX (lax.conv, f32) NCHW reference for correctness checking
# --------------------------------------------------------------------------
def ref_forward(x, p, *, stride=1, dilation=1, groups=1):
    def conv(inp, w, stride=1, dilation=1, groups=1, padding=0):
        return lax.conv_general_dilated(
            inp, w, window_strides=(stride, stride),
            padding=((padding, padding), (padding, padding)),
            rhs_dilation=(dilation, dilation),
            dimension_numbers=("NCHW", "OIHW", "NCHW"),
            feature_group_count=groups)

    def bn(y, params):
        g, b, m, v = params
        return (g[None, :, None, None] * (y - m[None, :, None, None])
                / jnp.sqrt(v[None, :, None, None] + EPS) + b[None, :, None, None])

    relu = lambda t: jnp.maximum(t, 0.0)
    out = relu(bn(conv(x, p["conv1_w"]), p["bn1"]))
    out = relu(bn(conv(out, p["conv2_w"], stride=stride, dilation=dilation,
                       groups=groups, padding=dilation), p["bn2"]))
    out = bn(conv(out, p["conv3_w"]), p["bn3"])
    pooled = jnp.mean(out, axis=(2, 3), keepdims=True)
    h = relu(conv(pooled, p["se_w1"]) + p["se_b1"][None, :, None, None])
    s = jax.nn.sigmoid(conv(h, p["se_w2"]) + p["se_b2"][None, :, None, None])
    out = out * s + x
    return relu(out)


# --------------------------------------------------------------------------
# Deterministic parameter init (PyTorch shapes, OIHW)
# --------------------------------------------------------------------------
def init_params(key, in_channel, out_channel, groups=1, width_per_group=64):
    width = int(out_channel * (width_per_group / 64.0)) * groups
    cexp = out_channel * 4
    cred = cexp // 16
    ks = jax.random.split(key, 10)

    def w(k, shape, fan_in):
        return jax.random.normal(k, shape, jnp.float32) / jnp.sqrt(fan_in)

    def bnp(k, c):
        k1, k2, k3, k4 = jax.random.split(k, 4)
        gamma = 1.0 + 0.1 * jax.random.normal(k1, (c,), jnp.float32)
        beta = 0.1 * jax.random.normal(k2, (c,), jnp.float32)
        mean = 0.1 * jax.random.normal(k3, (c,), jnp.float32)
        var = jnp.abs(jax.random.normal(k4, (c,), jnp.float32)) + 0.5
        return (gamma, beta, mean, var)

    return dict(
        conv1_w=w(ks[0], (width, in_channel, 1, 1), in_channel),
        bn1=bnp(ks[1], width),
        conv2_w=w(ks[2], (width, width // groups, 3, 3), (width // groups) * 9),
        bn2=bnp(ks[3], width),
        conv3_w=w(ks[4], (cexp, width, 1, 1), width),
        bn3=bnp(ks[5], cexp),
        se_w1=w(ks[6], (cred, cexp, 1, 1), cexp),
        se_b1=0.1 * jax.random.normal(ks[7], (cred,), jnp.float32),
        se_w2=w(ks[8], (cexp, cred, 1, 1), cred),
        se_b2=0.1 * jax.random.normal(ks[9], (cexp,), jnp.float32),
    )


if __name__ == "__main__":
    key = jax.random.PRNGKey(0)
    kx, kp = jax.random.split(key)

    # Small config consistent with the module:
    #   in_channel = 64, out_channel = 16 -> width = 16, expansion output = 64
    #   (== in_channel, so downsample=None / identity residual is valid).
    N, in_channel, H, W = 2, 64, 16, 16
    out_channel = 16
    x = jax.random.normal(kx, (N, in_channel, H, W), jnp.float32)
    params = init_params(kp, in_channel, out_channel)

    fwd = jax.jit(functools.partial(bottleneck_forward,
                                    stride=1, dilation=1, groups=1))
    out = jax.block_until_ready(fwd(x, params))

    assert out.shape == (N, out_channel * 4, H, W)
    ref = ref_forward(x, params, stride=1, dilation=1, groups=1)
    # Kernels use bf16 operands / intermediates; compare to the f32 reference
    # with a bf16-appropriate tolerance.
    max_err = float(jnp.max(jnp.abs(out - ref)))
    assert jnp.allclose(out, ref, atol=0.25, rtol=0.05), max_err

    print("KERNEL_OK")
</pallas_src>

<mosaic_0001>
module attributes {stable_mosaic.version = 11 : i64} {
  func.func @_matmul_bias_kernel(%arg0: i32, %arg1: memref<512x64xbf16, #tpu.memory_space<vmem>>, %arg2: memref<64x16xbf16, #tpu.memory_space<vmem>>, %arg3: memref<1x16xf32, #tpu.memory_space<vmem>>, %arg4: memref<512x16xbf16, #tpu.memory_space<vmem>>) attributes {dimension_semantics = [#tpu.dimension_semantics<parallel>], iteration_bounds = array<i64: 1>, scalar_prefetch = 0 : i64, scratch_operands = 0 : i64, tpu.core_type = #tpu.core_type<tc>, window_params = [{transform_indices = @transform_0, window_bounds = array<i64: 512, 64>}, {pipeline_mode = #tpu.pipeline_mode<synchronous>, transform_indices = @transform_1, window_bounds = array<i64: 64, 16>}, {pipeline_mode = #tpu.pipeline_mode<synchronous>, transform_indices = @transform_2, window_bounds = array<i64: 1, 16>}, {transform_indices = @transform_3, window_bounds = array<i64: 512, 16>}]} {
    %c0 = arith.constant 0 : index
    %c0_0 = arith.constant 0 : index
    %0 = vector.load %arg1[%c0, %c0_0] : memref<512x64xbf16, #tpu.memory_space<vmem>>, vector<512x64xbf16>
    %c0_1 = arith.constant 0 : index
    %c0_2 = arith.constant 0 : index
    %1 = vector.load %arg2[%c0_1, %c0_2] : memref<64x16xbf16, #tpu.memory_space<vmem>>, vector<64x16xbf16>
    %cst = arith.constant dense<0.000000e+00> : vector<512x16xf32>
    %2 = tpu.matmul %0, %1, %cst {dimension_numbers = #tpu.dot_dimension_numbers<[1], [0], [0], [1], [0, 0, 1, 1], [], []>} : vector<512x64xbf16>, vector<64x16xbf16>, vector<512x16xf32> -> vector<512x16xf32>
    %c0_3 = arith.constant 0 : index
    %c0_4 = arith.constant 0 : index
    %3 = vector.load %arg3[%c0_3, %c0_4] : memref<1x16xf32, #tpu.memory_space<vmem>>, vector<1x16xf32>
    %4 = vector.broadcast %3 : vector<1x16xf32> to vector<512x16xf32>
    %5 = arith.addf %2, %4 : vector<512x16xf32>
    %cst_5 = arith.constant 0.000000e+00 : f32
    %6 = vector.broadcast %cst_5 : f32 to vector<512x16xf32>
    %7 = arith.maximumf %5, %6 : vector<512x16xf32>
    %8 = arith.truncf %7 : vector<512x16xf32> to vector<512x16xbf16>
    %c0_6 = arith.constant 0 : index
    %c0_7 = arith.constant 0 : index
    %9 = vector.load %arg4[%c0_6, %c0_7] : memref<512x16xbf16, #tpu.memory_space<vmem>>, vector<512x16xbf16>
    tpu.vector_store %arg4[%c0_6, %c0_7], %8 {strides = array<i32>} : memref<512x16xbf16, #tpu.memory_space<vmem>>, vector<512x16xbf16>,
    return
  }
  func.func @transform_0(%arg0: i32) -> (i32, i32) {
    %c0_i32 = arith.constant 0 : i32
    %c0_i32_0 = arith.constant 0 : i32
    return %arg0, %c0_i32 : i32, i32
  }
  func.func @transform_1(%arg0: i32) -> (i32, i32) {
    %c0_i32 = arith.constant 0 : i32
    %c0_i32_0 = arith.constant 0 : i32
    %c0_i32_1 = arith.constant 0 : i32
    return %c0_i32, %c0_i32_0 : i32, i32
  }
  func.func @transform_2(%arg0: i32) -> (i32, i32) {
    %c0_i32 = arith.constant 0 : i32
    %c0_i32_0 = arith.constant 0 : i32
    %c0_i32_1 = arith.constant 0 : i32
    return %c0_i32, %c0_i32_0 : i32, i32
  }
  func.func @transform_3(%arg0: i32) -> (i32, i32) {
    %c0_i32 = arith.constant 0 : i32
    %c0_i32_0 = arith.constant 0 : i32
    return %arg0, %c0_i32 : i32, i32
  }
}

module attributes {stable_mosaic.version = 11 : i64} {
  func.func @_conv1x1_gap_kernel(%arg0: i32, %arg1: i32, %arg2: memref<1x256x16xbf16, #tpu.memory_space<vmem>>, %arg3: memref<16x64xbf16, #tpu.memory_space<vmem>>, %arg4: memref<1x64xf32, #tpu.memory_space<vmem>>, %arg5: memref<1x256x64xbf16, #tpu.memory_space<vmem>>, %arg6: memref<1x1x64xf32, #tpu.memory_space<vmem>>) attributes {dimension_semantics = [#tpu.dimension_semantics<parallel>, #tpu.dimension_semantics<arbitrary>], iteration_bounds = array<i64: 2, 1>, scalar_prefetch = 0 : i64, scratch_operands = 0 : i64, tpu.core_type = #tpu.core_type<tc>, window_params = [{transform_indices = @transform_0, window_bounds = array<i64: 1, 256, 16>}, {pipeline_mode = #tpu.pipeline_mode<synchronous>, transform_indices = @transform_1, window_bounds = array<i64: 16, 64>}, {pipeline_mode = #tpu.pipeline_mode<synchronous>, transform_indices = @transform_2, window_bounds = array<i64: 1, 64>}, {transform_indices = @transform_3, window_bounds = array<i64: 1, 256, 64>}, {transform_indices = @transform_4, window_bounds = array<i64: 1, 1, 64>}]} {
    %c0 = arith.constant 0 : index
    %c0_0 = arith.constant 0 : index
    %c0_1 = arith.constant 0 : index
    %0 = vector.load %arg2[%c0, %c0_0, %c0_1] : memref<1x256x16xbf16, #tpu.memory_space<vmem>>, vector<1x256x16xbf16>
    %1 = vector.shape_cast %0 : vector<1x256x16xbf16> to vector<256x16xbf16>
    %c0_2 = arith.constant 0 : index
    %c0_3 = arith.constant 0 : index
    %2 = vector.load %arg3[%c0_2, %c0_3] : memref<16x64xbf16, #tpu.memory_space<vmem>>, vector<16x64xbf16>
    %cst = arith.constant dense<0.000000e+00> : vector<256x64xf32>
    %3 = tpu.matmul %1, %2, %cst {dimension_numbers = #tpu.dot_dimension_numbers<[1], [0], [0], [1], [0, 0, 1, 1], [], []>} : vector<256x16xbf16>, vector<16x64xbf16>, vector<256x64xf32> -> vector<256x64xf32>
    %c0_4 = arith.constant 0 : index
    %c0_5 = arith.constant 0 : index
    %4 = vector.load %arg4[%c0_4, %c0_5] : memref<1x64xf32, #tpu.memory_space<vmem>>, vector<1x64xf32>
    %5 = vector.broadcast %4 : vector<1x64xf32> to vector<256x64xf32>
    %6 = arith.addf %3, %5 : vector<256x64xf32>
    %7 = arith.truncf %6 : vector<256x64xf32> to vector<256x64xbf16>
    %c0_6 = arith.constant 0 : index
    %c0_7 = arith.constant 0 : index
    %c0_8 = arith.constant 0 : index
    %8 = vector.load %arg5[%c0_6, %c0_7, %c0_8] : memref<1x256x64xbf16, #tpu.memory_space<vmem>>, vector<1x256x64xbf16>
    %9 = vector.shape_cast %8 : vector<1x256x64xbf16> to vector<256x64xbf16>
    %10 = vector.shape_cast %7 : vector<256x64xbf16> to vector<1x256x64xbf16>
    tpu.vector_store %arg5[%c0_6, %c0_7, %c0_8], %10 {strides = array<i32>} : memref<1x256x64xbf16, #tpu.memory_space<vmem>>, vector<1x256x64xbf16>,
    %c0_i32 = arith.constant 0 : i32
    %11 = arith.cmpi eq, %arg1, %c0_i32 : i32
    %12 = arith.extui %11 : i1 to i32
    %c0_i32_9 = arith.constant 0 : i32
    %13 = arith.cmpi ne, %12, %c0_i32_9 : i32
    scf.if %13 {
      %cst_17 = arith.constant 0.000000e+00 : f32
      %19 = vector.broadcast %cst_17 : f32 to vector<1x1x64xf32>
      %c0_18 = arith.constant 0 : index
      %c0_19 = arith.constant 0 : index
      %c0_20 = arith.constant 0 : index
      %20 = vector.load %arg6[%c0_18, %c0_19, %c0_20] : memref<1x1x64xf32, #tpu.memory_space<vmem>>, vector<1x1x64xf32>
      tpu.vector_store %arg6[%c0_18, %c0_19, %c0_20], %19 {strides = array<i32>} : memref<1x1x64xf32, #tpu.memory_space<vmem>>, vector<1x1x64xf32>,
    } else {
    }
    %c0_10 = arith.constant 0 : index
    %c0_11 = arith.constant 0 : index
    %c0_12 = arith.constant 0 : index
    %14 = vector.load %arg6[%c0_10, %c0_11, %c0_12] : memref<1x1x64xf32, #tpu.memory_space<vmem>>, vector<1x1x64xf32>
    %cst_13 = arith.constant dense<0.000000e+00> : vector<64xf32>
    %15 = vector.multi_reduction <add>, %6, %cst_13 [0] : vector<256x64xf32> to vector<64xf32>
    %16 = vector.shape_cast %15 : vector<64xf32> to vector<1x1x64xf32>
    %17 = arith.addf %14, %16 : vector<1x1x64xf32>
    %c0_14 = arith.constant 0 : index
    %c0_15 = arith.constant 0 : index
    %c0_16 = arith.constant 0 : index
    %18 = vector.load %arg6[%c0_14, %c0_15, %c0_16] : memref<1x1x64xf32, #tpu.memory_space<vmem>>, vector<1x1x64xf32>
    tpu.vector_store %arg6[%c0_14, %c0_15, %c0_16], %17 {strides = array<i32>} : memref<1x1x64xf32, #tpu.memory_space<vmem>>, vector<1x1x64xf32>,
    return
  }
  func.func @transform_0(%arg0: i32, %arg1: i32) -> (i32, i32, i32) {
    %c0_i32 = arith.constant 0 : i32
    %c0_i32_0 = arith.constant 0 : i32
    return %arg0, %arg1, %c0_i32 : i32, i32, i32
  }
  func.func @transform_1(%arg0: i32, %arg1: i32) -> (i32, i32) {
    %c0_i32 = arith.constant 0 : i32
    %c0_i32_0 = arith.constant 0 : i32
    %c0_i32_1 = arith.constant 0 : i32
    return %c0_i32, %c0_i32_0 : i32, i32
  }
  func.func @transform_2(%arg0: i32, %arg1: i32) -> (i32, i32) {
    %c0_i32 = arith.constant 0 : i32
    %c0_i32_0 = arith.constant 0 : i32
    %c0_i32_1 = arith.constant 0 : i32
    return %c0_i32, %c0_i32_0 : i32, i32
  }
  func.func @transform_3(%arg0: i32, %arg1: i32) -> (i32, i32, i32) {
    %c0_i32 = arith.constant 0 : i32
    %c0_i32_0 = arith.constant 0 : i32
    return %arg0, %arg1, %c0_i32 : i32, i32, i32
  }
  func.func @transform_4(%arg0: i32, %arg1: i32) -> (i32, i32, i32) {
    %c0_i32 = arith.constant 0 : i32
    %c0_i32_0 = arith.constant 0 : i32
    %c0_i32_1 = arith.constant 0 : i32
    return %arg0, %c0_i32, %c0_i32_0 : i32, i32, i32
  }
}

module attributes {stable_mosaic.version = 11 : i64} {
  func.func @_conv3x3_bn_relu_kernel(%arg0: i32, %arg1: i32, %arg2: memref<1x18x18x16xbf16, #tpu.memory_space<vmem>>, %arg3: memref<1x3x48x16xbf16, #tpu.memory_space<vmem>>, %arg4: memref<1x16xf32, #tpu.memory_space<vmem>>, %arg5: memref<1x8x16x16xbf16, #tpu.memory_space<vmem>>) attributes {dimension_semantics = [#tpu.dimension_semantics<parallel>, #tpu.dimension_semantics<parallel>], iteration_bounds = array<i64: 2, 2>, scalar_prefetch = 0 : i64, scratch_operands = 0 : i64, tpu.core_type = #tpu.core_type<tc>, window_params = [{transform_indices = @transform_0, window_bounds = array<i64: 1, 18, 18, 16>}, {pipeline_mode = #tpu.pipeline_mode<synchronous>, transform_indices = @transform_1, window_bounds = array<i64: 1, 3, 48, 16>}, {pipeline_mode = #tpu.pipeline_mode<synchronous>, transform_indices = @transform_2, window_bounds = array<i64: 1, 16>}, {transform_indices = @transform_3, window_bounds = array<i64: 1, 8, 16, 16>}]} {
    %cst = arith.constant 0.000000e+00 : f32
    %0 = vector.broadcast %cst : f32 to vector<128x16xf32>
    %c8_i32 = arith.constant 8 : i32
    %1 = arith.muli %arg1, %c8_i32 : i32
    %c0_i32 = arith.constant 0 : i32
    %2 = arith.addi %1, %c0_i32 : i32
    %c0 = arith.constant 0 : index
    %3 = arith.index_cast %2 : i32 to index
    %c0_0 = arith.constant 0 : index
    %c0_1 = arith.constant 0 : index
    %4 = vector.load %arg2[%c0, %3, %c0_0, %c0_1] : memref<1x18x18x16xbf16, #tpu.memory_space<vmem>>, vector<1x8x18x16xbf16>
    %5 = vector.shape_cast %4 : vector<1x8x18x16xbf16> to vector<8x18x16xbf16>
    %6 = vector.extract_strided_slice %5 {offsets = [0, 0, 0], sizes = [8, 16, 16], strides = [1, 1, 1]} : vector<8x18x16xbf16> to vector<8x16x16xbf16>
    %7 = vector.extract_strided_slice %5 {offsets = [0, 1, 0], sizes = [8, 16, 16], strides = [1, 1, 1]} : vector<8x18x16xbf16> to vector<8x16x16xbf16>
    %8 = vector.extract_strided_slice %5 {offsets = [0, 2, 0], sizes = [8, 16, 16], strides = [1, 1, 1]} : vector<8x18x16xbf16> to vector<8x16x16xbf16>
    %9 = tpu.concatenate %6, %7, %8 in 2 : vector<8x16x16xbf16>, vector<8x16x16xbf16>, vector<8x16x16xbf16> -> vector<8x16x48xbf16>
    %10 = vector.shape_cast %9 : vector<8x16x48xbf16> to vector<128x48xbf16>
    %c0_2 = arith.constant 0 : index
    %c0_3 = arith.constant 0 : index
    %c0_4 = arith.constant 0 : index
    %c0_5 = arith.constant 0 : index
    %11 = vector.load %arg3[%c0_2, %c0_3, %c0_4, %c0_5] : memref<1x3x48x16xbf16, #tpu.memory_space<vmem>>, vector<1x1x48x16xbf16>
    %12 = vector.shape_cast %11 : vector<1x1x48x16xbf16> to vector<48x16xbf16>
    %cst_6 = arith.constant dense<0.000000e+00> : vector<128x16xf32>
    %13 = tpu.matmul %10, %12, %cst_6 {dimension_numbers = #tpu.dot_dimension_numbers<[1], [0], [0], [1], [0, 0, 1, 1], [], []>} : vector<128x48xbf16>, vector<48x16xbf16>, vector<128x16xf32> -> vector<128x16xf32>
    %14 = arith.addf %0, %13 : vector<128x16xf32>
    %c8_i32_7 = arith.constant 8 : i32
    %15 = arith.muli %arg1, %c8_i32_7 : i32
    %c1_i32 = arith.constant 1 : i32
    %16 = arith.addi %15, %c1_i32 : i32
    %c0_8 = arith.constant 0 : index
    %17 = arith.index_cast %16 : i32 to index
    %c0_9 = arith.constant 0 : index
    %c0_10 = arith.constant 0 : index
    %18 = vector.load %arg2[%c0_8, %17, %c0_9, %c0_10] : memref<1x18x18x16xbf16, #tpu.memory_space<vmem>>, vector<1x8x18x16xbf16>
    %19 = vector.shape_cast %18 : vector<1x8x18x16xbf16> to vector<8x18x16xbf16>
    %20 = vector.extract_strided_slice %19 {offsets = [0, 0, 0], sizes = [8, 16, 16], strides = [1, 1, 1]} : vector<8x18x16xbf16> to vector<8x16x16xbf16>
    %21 = vector.extract_strided_slice %19 {offsets = [0, 1, 0], sizes = [8, 16, 16], strides = [1, 1, 1]} : vector<8x18x16xbf16> to vector<8x16x16xbf16>
    %22 = vector.extract_strided_slice %19 {offsets = [0, 2, 0], sizes = [8, 16, 16], strides = [1, 1, 1]} : vector<8x18x16xbf16> to vector<8x16x16xbf16>
    %23 = tpu.concatenate %20, %21, %22 in 2 : vector<8x16x16xbf16>, vector<8x16x16xbf16>, vector<8x16x16xbf16> -> vector<8x16x48xbf16>
    %24 = vector.shape_cast %23 : vector<8x16x48xbf16> to vector<128x48xbf16>
    %c0_11 = arith.constant 0 : index
    %c1 = arith.constant 1 : index
    %c0_12 = arith.constant 0 : index
    %c0_13 = arith.constant 0 : index
    %25 = vector.load %arg3[%c0_11, %c1, %c0_12, %c0_13] : memref<1x3x48x16xbf16, #tpu.memory_space<vmem>>, vector<1x1x48x16xbf16>
    %26 = vector.shape_cast %25 : vector<1x1x48x16xbf16> to vector<48x16xbf16>
    %cst_14 = arith.constant dense<0.000000e+00> : vector<128x16xf32>
    %27 = tpu.matmul %24, %26, %cst_14 {dimension_numbers = #tpu.dot_dimension_numbers<[1], [0], [0], [1], [0, 0, 1, 1], [], []>} : vector<128x48xbf16>, vector<48x16xbf16>, vector<128x16xf32> -> vector<128x16xf32>
    %28 = arith.addf %14, %27 : vector<128x16xf32>
    %c8_i32_15 = arith.constant 8 : i32
    %29 = arith.muli %arg1, %c8_i32_15 : i32
    %c2_i32 = arith.constant 2 : i32
    %30 = arith.addi %29, %c2_i32 : i32
    %c0_16 = arith.constant 0 : index
    %31 = arith.index_cast %30 : i32 to index
    %c0_17 = arith.constant 0 : index
    %c0_18 = arith.constant 0 : index
    %32 = vector.load %arg2[%c0_16, %31, %c0_17, %c0_18] : memref<1x18x18x16xbf16, #tpu.memory_space<vmem>>, vector<1x8x18x16xbf16>
    %33 = vector.shape_cast %32 : vector<1x8x18x16xbf16> to vector<8x18x16xbf16>
    %34 = vector.extract_strided_slice %33 {offsets = [0, 0, 0], sizes = [8, 16, 16], strides = [1, 1, 1]} : vector<8x18x16xbf16> to vector<8x16x16xbf16>
    %35 = vector.extract_strided_slice %33 {offsets = [0, 1, 0], sizes = [8, 16, 16], strides = [1, 1, 1]} : vector<8x18x16xbf16> to vector<8x16x16xbf16>
    %36 = vector.extract_strided_slice %33 {offsets = [0, 2, 0], sizes = [8, 16, 16], strides = [1, 1, 1]} : vector<8x18x16xbf16> to vector<8x16x16xbf16>
    %37 = tpu.concatenate %34, %35, %36 in 2 : vector<8x16x16xbf16>, vector<8x16x16xbf16>, vector<8x16x16xbf16> -> vector<8x16x48xbf16>
    %38 = vector.shape_cast %37 : vector<8x16x48xbf16> to vector<128x48xbf16>
    %c0_19 = arith.constant 0 : index
    %c2 = arith.constant 2 : index
    %c0_20 = arith.constant 0 : index
    %c0_21 = arith.constant 0 : index
    %39 = vector.load %arg3[%c0_19, %c2, %c0_20, %c0_21] : memref<1x3x48x16xbf16, #tpu.memory_space<vmem>>, vector<1x1x48x16xbf16>
    %40 = vector.shape_cast %39 : vector<1x1x48x16xbf16> to vector<48x16xbf16>
    %cst_22 = arith.constant dense<0.000000e+00> : vector<128x16xf32>
    %41 = tpu.matmul %38, %40, %cst_22 {dimension_numbers = #tpu.dot_dimension_numbers<[1], [0], [0], [1], [0, 0, 1, 1], [], []>} : vector<128x48xbf16>, vector<48x16xbf16>, vector<128x16xf32> -> vector<128x16xf32>
    %42 = arith.addf %28, %41 : vector<128x16xf32>
    %c0_23 = arith.constant 0 : index
    %c0_24 = arith.constant 0 : index
    %43 = vector.load %arg4[%c0_23, %c0_24] : memref<1x16xf32, #tpu.memory_space<vmem>>, vector<1x16xf32>
    %44 = vector.broadcast %43 : vector<1x16xf32> to vector<128x16xf32>
    %45 = arith.addf %42, %44 : vector<128x16xf32>
    %cst_25 = arith.constant 0.000000e+00 : f32
    %46 = vector.broadcast %cst_25 : f32 to vector<128x16xf32>
    %47 = arith.maximumf %45, %46 : vector<128x16xf32>
    %48 = vector.shape_cast %47 : vector<128x16xf32> to vector<8x16x16xf32>
    %49 = arith.truncf %48 : vector<8x16x16xf32> to vector<8x16x16xbf16>
    %c0_26 = arith.constant 0 : index
    %c0_27 = arith.constant 0 : index
    %c0_28 = arith.constant 0 : index
    %c0_29 = arith.constant 0 : index
    %50 = vector.load %arg5[%c0_26, %c0_27, %c0_28, %c0_29] : memref<1x8x16x16xbf16, #tpu.memory_space<vmem>>, vector<1x8x16x16xbf16>
    %51 = vector.shape_cast %50 : vector<1x8x16x16xbf16> to vector<8x16x16xbf16>
    %52 = vector.shape_cast %49 : vector<8x16x16xbf16> to vector<1x8x16x16xbf16>
    tpu.vector_store %arg5[%c0_26, %c0_27, %c0_28, %c0_29], %52 {strides = array<i32>} : memref<1x8x16x16xbf16, #tpu.memory_space<vmem>>, vector<1x8x16x16xbf16>,
    return
  }
  func.func @transform_0(%arg0: i32, %arg1: i32) -> (i32, i32, i32, i32) {
    %c0_i32 = arith.constant 0 : i32
    %c0_i32_0 = arith.constant 0 : i32
    %c0_i32_1 = arith.constant 0 : i32
    %c0_i32_2 = arith.constant 0 : i32
    return %arg0, %c0_i32, %c0_i32_0, %c0_i32_1 : i32, i32, i32, i32
  }
  func.func @transform_1(%arg0: i32, %arg1: i32) -> (i32, i32, i32, i32) {
    %c0_i32 = arith.constant 0 : i32
    %c0_i32_0 = arith.constant 0 : i32
    %c0_i32_1 = arith.constant 0 : i32
    %c0_i32_2 = arith.constant 0 : i32
    %c0_i32_3 = arith.constant 0 : i32
    return %c0_i32, %c0_i32_0, %c0_i32_1, %c0_i32_2 : i32, i32, i32, i32
  }
  func.func @transform_2(%arg0: i32, %arg1: i32) -> (i32, i32) {
    %c0_i32 = arith.constant 0 : i32
    %c0_i32_0 = arith.constant 0 : i32
    %c0_i32_1 = arith.constant 0 : i32
    return %c0_i32, %c0_i32_0 : i32, i32
  }
  func.func @transform_3(%arg0: i32, %arg1: i32) -> (i32, i32, i32, i32) {
    %c0_i32 = arith.constant 0 : i32
    %c0_i32_0 = arith.constant 0 : i32
    %c0_i32_1 = arith.constant 0 : i32
    return %arg0, %arg1, %c0_i32, %c0_i32_0 : i32, i32, i32, i32
  }
}

module attributes {stable_mosaic.version = 11 : i64} {
  func.func @_se_scale_residual_kernel(%arg0: i32, %arg1: i32, %arg2: memref<1x256x64xbf16, #tpu.memory_space<vmem>>, %arg3: memref<1x256x64xbf16, #tpu.memory_space<vmem>>, %arg4: memref<1x1x64xf32, #tpu.memory_space<vmem>>, %arg5: memref<1x256x64xbf16, #tpu.memory_space<vmem>>) attributes {dimension_semantics = [#tpu.dimension_semantics<parallel>, #tpu.dimension_semantics<parallel>], iteration_bounds = array<i64: 2, 1>, scalar_prefetch = 0 : i64, scratch_operands = 0 : i64, tpu.core_type = #tpu.core_type<tc>, window_params = [{transform_indices = @transform_0, window_bounds = array<i64: 1, 256, 64>}, {transform_indices = @transform_1, window_bounds = array<i64: 1, 256, 64>}, {transform_indices = @transform_2, window_bounds = array<i64: 1, 1, 64>}, {transform_indices = @transform_3, window_bounds = array<i64: 1, 256, 64>}]} {
    %c0 = arith.constant 0 : index
    %c0_0 = arith.constant 0 : index
    %c0_1 = arith.constant 0 : index
    %0 = vector.load %arg2[%c0, %c0_0, %c0_1] : memref<1x256x64xbf16, #tpu.memory_space<vmem>>, vector<1x256x64xbf16>
    %1 = arith.extf %0 : vector<1x256x64xbf16> to vector<1x256x64xf32>
    %c0_2 = arith.constant 0 : index
    %c0_3 = arith.constant 0 : index
    %c0_4 = arith.constant 0 : index
    %2 = vector.load %arg4[%c0_2, %c0_3, %c0_4] : memref<1x1x64xf32, #tpu.memory_space<vmem>>, vector<1x1x64xf32>
    %3 = vector.broadcast %2 : vector<1x1x64xf32> to vector<1x256x64xf32>
    %4 = arith.mulf %1, %3 : vector<1x256x64xf32>
    %c0_5 = arith.constant 0 : index
    %c0_6 = arith.constant 0 : index
    %c0_7 = arith.constant 0 : index
    %5 = vector.load %arg3[%c0_5, %c0_6, %c0_7] : memref<1x256x64xbf16, #tpu.memory_space<vmem>>, vector<1x256x64xbf16>
    %6 = arith.extf %5 : vector<1x256x64xbf16> to vector<1x256x64xf32>
    %7 = arith.addf %4, %6 : vector<1x256x64xf32>
    %cst = arith.constant 0.000000e+00 : f32
    %8 = vector.broadcast %cst : f32 to vector<1x256x64xf32>
    %9 = arith.maximumf %7, %8 : vector<1x256x64xf32>
    %10 = arith.truncf %9 : vector<1x256x64xf32> to vector<1x256x64xbf16>
    %c0_8 = arith.constant 0 : index
    %c0_9 = arith.constant 0 : index
    %c0_10 = arith.constant 0 : index
    %11 = vector.load %arg5[%c0_8, %c0_9, %c0_10] : memref<1x256x64xbf16, #tpu.memory_space<vmem>>, vector<1x256x64xbf16>
    tpu.vector_store %arg5[%c0_8, %c0_9, %c0_10], %10 {strides = array<i32>} : memref<1x256x64xbf16, #tpu.memory_space<vmem>>, vector<1x256x64xbf16>,
    return
  }
  func.func @transform_0(%arg0: i32, %arg1: i32) -> (i32, i32, i32) {
    %c0_i32 = arith.constant 0 : i32
    %c0_i32_0 = arith.constant 0 : i32
    return %arg0, %arg1, %c0_i32 : i32, i32, i32
  }
  func.func @transform_1(%arg0: i32, %arg1: i32) -> (i32, i32, i32) {
    %c0_i32 = arith.constant 0 : i32
    %c0_i32_0 = arith.constant 0 : i32
    return %arg0, %arg1, %c0_i32 : i32, i32, i32
  }
  func.func @transform_2(%arg0: i32, %arg1: i32) -> (i32, i32, i32) {
    %c0_i32 = arith.constant 0 : i32
    %c0_i32_0 = arith.constant 0 : i32
    %c0_i32_1 = arith.constant 0 : i32
    return %arg0, %c0_i32, %c0_i32_0 : i32, i32, i32
  }
  func.func @transform_3(%arg0: i32, %arg1: i32) -> (i32, i32, i32) {
    %c0_i32 = arith.constant 0 : i32
    %c0_i32_0 = arith.constant 0 : i32
    return %arg0, %arg1, %c0_i32 : i32, i32, i32
  }
}

</mosaic_0001>

<llo_original>
// kernel: bottleneck_forward.6
$region0: #{bottleneck_forward.6}
  #allocation0 [shape = 'u32[]', space=smem, size = 0x4, offset = 0x4, fixed_abs, tag = 'smem constant byte address 0x4 - core index']
  #allocation1 [shape = 'u32[144,128]{1,0:T(1,128)}', space=vmem, size = 0x12000, scoped, tag = 'internal scratch']
  %s0 = inlined_call_operand.vmem [shape: bf16[2,256,16], index: 0, kind: input, shape index: {}]
  %s1 = inlined_call_operand.vmem [shape: bf16[16,64], index: 1, kind: input, shape index: {}]
  %s2 = inlined_call_operand.vmem [shape: f32[1,64], index: 2, kind: input, shape index: {}]
  %s3 = inlined_call_operand.vmem [shape: bf16[2,256,64], index: 3, kind: output, shape index: {0}]
  %s4 = inlined_call_operand.vmem [shape: f32[2,1,64], index: 4, kind: output, shape index: {1}]
  %5 = xla_tuple %s3, %s4
  %s6 = sld [smem:[#allocation0]]
  $region57: #{bottleneck_forward.6} parent=0
    _
  %s8 = ssub.s32 1, %s6
  %s9 = scalar_select 0, %s8, %s6
  loop: start=0, step=1, limit=4
  $region2: #{bottleneck_forward.6} parent=0 // loop_pre_header
    _
  $region3: #{bottleneck_forward.6} parent=0 // loop_header
    %s11 = sphi 0, %s15
    %p12 = scmp.ge.s32.totalorder %s11, 4
    %s18 = sphi 0, %s30
    %s19 = sphi 0, %s26
    %s20 = sphi 0, %s18
    %s21 = sphi 0, %s19
    %s22 = sphi 0, %s20
    %s23 = sphi 0, %s21
    %s35 = sphi 0, %s37
    %s38 = sphi 0, %s35
    %s39 = sphi 0, %s38
    %s55 = sphi 0, %s39
    %s59 = sphi 0, %s59
    %s61 = sphi 0, %s59
    %s62 = sphi 0, %s61
    %s76 = sphi 0, %s62
    %s80 = sphi 0, %s80
    %s82 = sphi 0, %s80
    %s83 = sphi 0, %s82
    %s97 = sphi 0, %s83
    %s105 = sphi 0, %s107
    %s108 = sphi 0, %s105
    %s109 = sphi 0, %s108
    %s125 = sphi 0, %s109
    %s131 = sphi 0, %s133
    %s134 = sphi 0, %s131
    %s135 = sphi 0, %s134
    %s151 = sphi 0, %s135
  $region4: #{bottleneck_forward.6} parent=0 // loop_header_branch
    %14 = sbr.rel (%p12) target = $region8
  $region5: #{bottleneck_forward.6} parent=0 // loop_body
    %s16 = ssub.s32 %s11, 1
    %s17 = ssub.s32 %s11, 2
    %s24 = sadd.s32 1, %s19
    %p25 = scmp.ge.s32.totalorder %s24, 1
    %s26 = scalar_select %p25, 0, %s24
    %s27 = sadd.s32 1, %s18
    %s28 = scalar_select %p25, %s27, %s18
    %p29 = scmp.ge.s32.totalorder %s28, 2
    %s30 = scalar_select %p29, 0, %s28
    %s31 = ssub.s32 %s18, %s30
    %s32 = ssub.s32 %s19, %s26
    %s33 = sor.u32 %s31, %s32
    %p34 = scmp.eq.s32.totalorder %s33, 0
    %s36 = sadd.s32 %s35, 1
    %s37 = scalar_select %p34, %s35, %s36
    %p40 = pneg %p34
    %p41 = scmp.eq.s32.totalorder %s11, 1
    %p42 = por %p40, %p41
    %p43 = scmp.ne.s32.totalorder %s35, %s38
    %p44 = scmp.eq.s32.totalorder %s11, 0
    %p45 = por %p43, %p44
    %p46 = scmp.ne.s32.totalorder %s35, %s38
    %p47 = scmp.eq.s32.totalorder %s16, 1
    %p48 = por %p46, %p47
    %p49 = scmp.ne.s32.totalorder %s38, %s39
    %p50 = scmp.eq.s32.totalorder %s16, 0
    %p51 = por %p49, %p50
    %p52 = scmp.ne.s32.totalorder %s38, %s39
    %p53 = scmp.eq.s32.totalorder %s17, 1
    %p54 = por %p52, %p53
    %p56 = scmp.ne.s32.totalorder %s39, %s55
    %p57 = scmp.eq.s32.totalorder %s17, 0
    %p58 = por %p56, %p57
    %s60 = sadd.s32 %s59, 1
    %p63 = scmp.eq.s32.totalorder %s11, 1
    %p64 = scmp.ne.s32.totalorder %s59, %s61
    %p65 = scmp.eq.s32.totalorder %s11, 0
    %p66 = por %p64, %p65
    %p67 = scmp.ne.s32.totalorder %s59, %s61
    %p68 = scmp.eq.s32.totalorder %s16, 1
    %p69 = por %p67, %p68
    %p70 = scmp.ne.s32.totalorder %s61, %s62
    %p71 = scmp.eq.s32.totalorder %s16, 0
    %p72 = por %p70, %p71
    %p73 = scmp.ne.s32.totalorder %s61, %s62
    %p74 = scmp.eq.s32.totalorder %s17, 1
    %p75 = por %p73, %p74
    %p77 = scmp.ne.s32.totalorder %s62, %s76
    %p78 = scmp.eq.s32.totalorder %s17, 0
    %p79 = por %p77, %p78
    %s81 = sadd.s32 %s80, 1
    %p84 = scmp.eq.s32.totalorder %s11, 1
    %p85 = scmp.ne.s32.totalorder %s80, %s82
    %p86 = scmp.eq.s32.totalorder %s11, 0
    %p87 = por %p85, %p86
    %p88 = scmp.ne.s32.totalorder %s80, %s82
    %p89 = scmp.eq.s32.totalorder %s16, 1
    %p90 = por %p88, %p89
    %p91 = scmp.ne.s32.totalorder %s82, %s83
    %p92 = scmp.eq.s32.totalorder %s16, 0
    %p93 = por %p91, %p92
    %p94 = scmp.ne.s32.totalorder %s82, %s83
    %p95 = scmp.eq.s32.totalorder %s17, 1
    %p96 = por %p94, %p95
    %p98 = scmp.ne.s32.totalorder %s83, %s97
    %p99 = scmp.eq.s32.totalorder %s17, 0
    %p100 = por %p98, %p99
    %s101 = ssub.s32 %s18, %s30
    %s102 = ssub.s32 %s19, %s26
    %s103 = sor.u32 %s101, %s102
    %p104 = scmp.eq.s32.totalorder %s103, 0
    %s106 = sadd.s32 %s105, 1
    %s107 = scalar_select %p104, %s105, %s106
    %p110 = pneg %p104
    %p111 = scmp.eq.s32.totalorder %s11, 1
    %p112 = por %p110, %p111
    %p113 = scmp.ne.s32.totalorder %s105, %s108
    %p114 = scmp.eq.s32.totalorder %s11, 0
    %p115 = por %p113, %p114
    %p116 = scmp.ne.s32.totalorder %s105, %s108
    %p117 = scmp.eq.s32.totalorder %s16, 1
    %p118 = por %p116, %p117
    %p119 = scmp.ne.s32.totalorder %s108, %s109
    %p120 = scmp.eq.s32.totalorder %s16, 0
    %p121 = por %p119, %p120
    %p122 = scmp.ne.s32.totalorder %s108, %s109
    %p123 = scmp.eq.s32.totalorder %s17, 1
    %p124 = por %p122, %p123
    %p126 = scmp.ne.s32.totalorder %s109, %s125
    %p127 = scmp.eq.s32.totalorder %s17, 0
    %p128 = por %p126, %p127
    %s129 = ssub.s32 %s18, %s30
    %p130 = scmp.eq.s32.totalorder %s129, 0
    %s132 = sadd.s32 %s131, 1
    %s133 = scalar_select %p130, %s131, %s132
    %p136 = pneg %p130
    %p137 = scmp.eq.s32.totalorder %s11, 1
    %p138 = por %p136, %p137
    %p139 = scmp.ne.s32.totalorder %s131, %s134
    %p140 = scmp.eq.s32.totalorder %s11, 0
    %p141 = por %p139, %p140
    %p142 = scmp.ne.s32.totalorder %s131, %s134
    %p143 = scmp.eq.s32.totalorder %s16, 1
    %p144 = por %p142, %p143
    %p145 = scmp.ne.s32.totalorder %s134, %s135
    %p146 = scmp.eq.s32.totalorder %s16, 0
    %p147 = por %p145, %p146
    %p148 = scmp.ne.s32.totalorder %s134, %s135
    %p149 = scmp.eq.s32.totalorder %s17, 1
    %p150 = por %p148, %p149
    %p152 = scmp.ne.s32.totalorder %s135, %s151
    %p153 = scmp.eq.s32.totalorder %s17, 0
    %p154 = por %p152, %p153
    %p155 = scmp.le.s32.totalorder 1, %s11
    %p156 = scmp.lt.s32.totalorder %s11, 3
    %p157 = pnand %p155, %p156
    %p158 = pneg %p157
    // Predicated region
    $region9: #{bottleneck_forward.6} parent=5 // pred_check
      _
    $region10: #{bottleneck_forward.6} parent=5 // pred_check_branch
      %160 = sbr.rel (%p157) target = $region12
    $region11: #{bottleneck_forward.6} parent=5 // pred_region
      %s161 = ssub.s32 %s11, 1
      // Predicated region
      $region13: #{bottleneck_forward.6} parent=11 // pred_check
        %p162 = pneg %p72
      $region14: #{bottleneck_forward.6} parent=11 // pred_check_branch
        %164 = sbr.rel (%p162) target = $region16
      $region15: #{bottleneck_forward.6} parent=11 // pred_region
        _
      $region16: #{bottleneck_forward.6} parent=11 // pred_fallthru
        _
      // Predicated region
      $region17: #{bottleneck_forward.6} parent=11 // pred_check
        %p165 = pneg %p93
      $region18: #{bottleneck_forward.6} parent=11 // pred_check_branch
        %167 = sbr.rel (%p165) target = $region20
      $region19: #{bottleneck_forward.6} parent=11 // pred_region
        _
      $region20: #{bottleneck_forward.6} parent=11 // pred_fallthru
        _
    $region12: #{bottleneck_forward.6} parent=5 // pred_fallthru
      _
    %p168 = scmp.lt.s32.totalorder %s11, 2
    // Predicated region
    $region21: #{bottleneck_forward.6} parent=5 // pred_check
      %p169 = pneg %p168
    $region22: #{bottleneck_forward.6} parent=5 // pred_check_branch
      %171 = sbr.rel (%p169) target = $region24
    $region23: #{bottleneck_forward.6} parent=5 // pred_region
      // Predicated region
      $region25: #{bottleneck_forward.6} parent=23 // pred_check
        %p172 = pneg %p45
      $region26: #{bottleneck_forward.6} parent=23 // pred_check_branch
        %174 = sbr.rel (%p172) target = $region28
      $region27: #{bottleneck_forward.6} parent=23 // pred_region
        %s175 = smul.u32 32, %s19
        %p176 = scmp.lt.s32.totalorder %s18, 1
        %s177 = scalar_select %p176, %s18, 1
        %p178 = scmp.lt.s32.totalorder %s175, 31
        %s179 = scalar_select %p178, %s175, 31
        %s180 = smul.addr %s177, 32
        %s181 = sadd.s32 %s179, %s180
        %s182 = smul.addr %s181, 4
        %s183 = scalar_lea.vmem %s0, %s182
        %s184 = smul.u32 32, %s19
      $region28: #{bottleneck_forward.6} parent=23 // pred_fallthru
        _
    $region24: #{bottleneck_forward.6} parent=5 // pred_fallthru
      _
    %p185 = scmp.le.s32.totalorder 1, %s11
    %p186 = scmp.lt.s32.totalorder %s11, 3
    %p187 = pnand %p185, %p186
    %p188 = pneg %p187
    // Predicated region
    $region29: #{bottleneck_forward.6} parent=5 // pred_check
      _
    $region30: #{bottleneck_forward.6} parent=5 // pred_check_branch
      %190 = sbr.rel (%p187) target = $region32
    $region31: #{bottleneck_forward.6} parent=5 // pred_region
      %s191 = ssub.s32 %s11, 1
      %s192 = smul.u32 32, %s21
      %p193 = scmp.lt.s32.totalorder %s20, 1
      %s194 = scalar_select %p193, %s20, 1
      %p195 = scmp.lt.s32.totalorder %s192, 31
      %s196 = scalar_select %p195, %s192, 31
      %s197 = smul.addr %s194, 32
      %s198 = sadd.s32 %s196, %s197
      %s199 = smul.addr %s198, 4
      %s200 = scalar_lea.vmem %s0, %s199
      %p201 = pneg %p51
      %p202 = pneg %p48
      %p203 = pneg %p72
      %p204 = pneg %p69
      %p205 = pneg %p93
      %p206 = pneg %p90
      %p207 = pneg %p121
      %p208 = pneg %p118
      %s209 = smul.u32 32, %s21
      %p210 = scmp.lt.s32.totalorder %s20, 1
      %s211 = scalar_select %p210, %s20, 1
      %p212 = scmp.lt.s32.totalorder %s209, 31
      %s213 = scalar_select %p212, %s209, 31
      %s214 = smul.addr %s211, 32
      %s215 = sadd.s32 %s213, %s214
      %s216 = smul.addr %s215, 4
      %s217 = scalar_lea.vmem %s3, %s216
      %p218 = pneg %p147
      %p219 = pneg %p144
      %p220 = scmp.lt.s32.totalorder %s20, 1
      %s221 = scalar_select %p220, %s20, 1
      %s222 = scalar_lea.vmem %s4, %s221
      %s223 = smul.u32 32, %s21
      %p224 = scmp.lt.s32.totalorder %s20, 1
      %s225 = scalar_select %p224, %s20, 1
      %p226 = scmp.lt.s32.totalorder %s223, 31
      %s227 = scalar_select %p226, %s223, 31
      %s228 = smul.addr %s225, 32
      %s229 = sadd.s32 %s227, %s228
      %s230 = smul.addr %s229, 4
      %s231 = scalar_lea.vmem %s0, %s230
      %s232 = smul.u32 32, %s21
      %s233 = smul.u32 32, %s21
      %p234 = scmp.lt.s32.totalorder %s20, 1
      %s235 = scalar_select %p234, %s20, 1
      %p236 = scmp.lt.s32.totalorder %s233, 31
      %s237 = scalar_select %p236, %s233, 31
      %s238 = smul.addr %s235, 32
      %s239 = sadd.s32 %s237, %s238
      %s240 = smul.addr %s239, 4
      %s241 = scalar_lea.vmem %s3, %s240
      %s242 = smul.u32 32, %s21
      %p243 = scmp.lt.s32.totalorder %s20, 1
      %s244 = scalar_select %p243, %s20, 1
      %s245 = scalar_lea.vmem %s4, %s244
      %v247 = vld [vmem:[%s231] sm:$0xf]
      %v248 = vld [vmem:[%s231 + $0x4] sm:$0xf]
      %v249 = vld [vmem:[%s231 + $0x8] sm:$0xf]
      %v250 = vld [vmem:[%s231 + $0xc] sm:$0xf]
      %v251 = vld [vmem:[%s231 + $0x10] sm:$0xf]
      %v252 = vld [vmem:[%s231 + $0x14] sm:$0xf]
      %v253 = vld [vmem:[%s231 + $0x18] sm:$0xf]
      %v254 = vld [vmem:[%s231 + $0x1c] sm:$0xf]
      %v255 = vld [vmem:[%s231 + $0x20] sm:$0xf]
      %v256 = vld [vmem:[%s231 + $0x24] sm:$0xf]
      %v257 = vld [vmem:[%s231 + $0x28] sm:$0xf]
      %v258 = vld [vmem:[%s231 + $0x2c] sm:$0xf]
      %v259 = vld [vmem:[%s231 + $0x30] sm:$0xf]
      %v260 = vld [vmem:[%s231 + $0x34] sm:$0xf]
      %v261 = vld [vmem:[%s231 + $0x38] sm:$0xf]
      %v262 = vld [vmem:[%s231 + $0x3c] sm:$0xf]
      %v263 = vld [vmem:[%s231 + $0x40] sm:$0xf]
      %v264 = vld [vmem:[%s231 + $0x44] sm:$0xf]
      %v265 = vld [vmem:[%s231 + $0x48] sm:$0xf]
      %v266 = vld [vmem:[%s231 + $0x4c] sm:$0xf]
      %v267 = vld [vmem:[%s231 + $0x50] sm:$0xf]
      %v268 = vld [vmem:[%s231 + $0x54] sm:$0xf]
      %v269 = vld [vmem:[%s231 + $0x58] sm:$0xf]
      %v270 = vld [vmem:[%s231 + $0x5c] sm:$0xf]
      %v271 = vld [vmem:[%s231 + $0x60] sm:$0xf]
      %v272 = vld [vmem:[%s231 + $0x64] sm:$0xf]
      %v273 = vld [vmem:[%s231 + $0x68] sm:$0xf]
      %v274 = vld [vmem:[%s231 + $0x6c] sm:$0xf]
      %v275 = vld [vmem:[%s231 + $0x70] sm:$0xf]
      %v276 = vld [vmem:[%s231 + $0x74] sm:$0xf]
      %v277 = vld [vmem:[%s231 + $0x78] sm:$0xf]
      %v278 = vld [vmem:[%s231 + $0x7c] sm:$0xf]
      %v279 = vld [vmem:[%s1] sm:$0xf]
      %v280 = vld [vmem:[%s1 + $0x4] sm:$0xf]
      %v281 = vld [vmem:[%s2] sm:$0x1]
      %v283 = vlaneseq
      %v284 = vshrl.u32 %v283, 7
      %v285 = vsub.s32 0, %v284
      %v286 = vrot.slane %v281, %v285
      %v320 = vunpack.c.l.b16 %v247
      %v321 = vunpack.c.l.b16 %v248
      %v322 = vunpack.c.l.b16 %v249
      %v323 = vunpack.c.l.b16 %v250
      %v324 = vunpack.c.l.b16 %v251
      %v325 = vunpack.c.l.b16 %v252
      %v326 = vunpack.c.l.b16 %v253
      %v327 = vunpack.c.l.b16 %v254
      %v328 = vunpack.c.l.b16 %v255
      %v329 = vunpack.c.l.b16 %v256
      %v330 = vunpack.c.l.b16 %v257
      %v331 = vunpack.c.l.b16 %v258
      %v332 = vunpack.c.l.b16 %v259
      %v333 = vunpack.c.l.b16 %v260
      %v334 = vunpack.c.l.b16 %v261
      %v335 = vunpack.c.l.b16 %v262
      %v336 = vunpack.c.l.b16 %v263
      %v337 = vunpack.c.l.b16 %v264
      %v338 = vunpack.c.l.b16 %v265
      %v339 = vunpack.c.l.b16 %v266
      %v340 = vunpack.c.l.b16 %v267
      %v341 = vunpack.c.l.b16 %v268
      %v342 = vunpack.c.l.b16 %v269
      %v343 = vunpack.c.l.b16 %v270
      %v344 = vunpack.c.l.b16 %v271
      %v345 = vunpack.c.l.b16 %v272
      %v346 = vunpack.c.l.b16 %v273
      %v347 = vunpack.c.l.b16 %v274
      %v348 = vunpack.c.l.b16 %v275
      %v349 = vunpack.c.l.b16 %v276
      %v350 = vunpack.c.l.b16 %v277
      %v351 = vunpack.c.l.b16 %v278
      %v352 = vpack.c.b16 %v321, %v320
      %v353 = vpack.c.b16 %v323, %v322
      %v354 = vpack.c.b16 %v325, %v324
      %v355 = vpack.c.b16 %v327, %v326
      %v356 = vpack.c.b16 %v329, %v328
      %v357 = vpack.c.b16 %v331, %v330
      %v358 = vpack.c.b16 %v333, %v332
      %v359 = vpack.c.b16 %v335, %v334
      %v360 = vpack.c.b16 %v337, %v336
      %v361 = vpack.c.b16 %v339, %v338
      %v362 = vpack.c.b16 %v341, %v340
      %v363 = vpack.c.b16 %v343, %v342
      %v364 = vpack.c.b16 %v345, %v344
      %v365 = vpack.c.b16 %v347, %v346
      %v366 = vpack.c.b16 %v349, %v348
      %v367 = vpack.c.b16 %v351, %v350
      %v370 = vunpack.c.l.b16 %v279
      %v371 = vunpack.c.l.b16 %v280
      %v372 = vpack.c.b16 %v371, %v370
      %vm374 = vcmask 130048
      %v376 = vsel %vm374, %v352, 0
      %v379 = vsel %vm374, %v353, 0
      %v382 = vsel %vm374, %v354, 0
      %v385 = vsel %vm374, %v355, 0
      %v388 = vsel %vm374, %v356, 0
      %v391 = vsel %vm374, %v357, 0
      %v394 = vsel %vm374, %v358, 0
      %v397 = vsel %vm374, %v359, 0
      %v400 = vsel %vm374, %v360, 0
      %v403 = vsel %vm374, %v361, 0
      %v406 = vsel %vm374, %v362, 0
      %v409 = vsel %vm374, %v363, 0
      %v412 = vsel %vm374, %v364, 0
      %v415 = vsel %vm374, %v365, 0
      %v418 = vsel %vm374, %v366, 0
      %v421 = vsel %vm374, %v367, 0
      %423 = vmatprep.subr.bf16.mxu0 0
      %424 = vmatpush1.bf16.msra.mxu0 %v372
      %425 = vmatprep.subr.bf16.mxu0 0
      %426 = vmatpush1.bf16.msra.mxu0 0
      %427 = vmatprep.subr.bf16.mxu0 0
      %428 = vmatpush1.bf16.msra.mxu0 0
      %429 = vmatprep.subr.bf16.mxu0 0
      %430 = vmatpush1.bf16.msra.mxu0 0
      %431 = vmatprep.subr.bf16.mxu0 0
      %432 = vmatpush1.bf16.msra.mxu0 0
      %433 = vmatprep.subr.bf16.mxu0 0
      %434 = vmatpush1.bf16.msra.mxu0 0
      %435 = vmatprep.subr.bf16.mxu0 0
      %436 = vmatpush1.bf16.msra.mxu0 0
      %437 = vmatprep.subr.bf16.mxu0 0
      %438 = vmatpush1.bf16.msra.mxu0 0
      %439 = vmatprep.subr.bf16.mxu0 0
      %440 = vmatpush1.bf16.msra.mxu0 0
      %441 = vmatprep.subr.bf16.mxu0 0
      %442 = vmatpush1.bf16.msra.mxu0 0
      %443 = vmatprep.subr.bf16.mxu0 0
      %444 = vmatpush1.bf16.msra.mxu0 0
      %445 = vmatprep.subr.bf16.mxu0 0
      %446 = vmatpush1.bf16.msra.mxu0 0
      %447 = vmatprep.subr.bf16.mxu0 0
      %448 = vmatpush1.bf16.msra.mxu0 0
      %449 = vmatprep.subr.bf16.mxu0 0
      %450 = vmatpush1.bf16.msra.mxu0 0
      %451 = vmatprep.subr.bf16.mxu0 0
      %452 = vmatpush1.bf16.msra.mxu0 0
      %453 = vmatprep.subr.bf16.mxu0 0
      %454 = vmatpush1.bf16.msra.mxu0 0
      %455 = vmatprep.mubr.bf16.mxu0 0
      %456 = vmatmul.mubr.bf16.gmra.mrb[0].mxu0 %v376
      %v457 = vpop.f32.mrb[0].mxu0
      %v458 = vadd.f32 %v286, %v457
      %v459 = vpop.f32.mrb[0].mxu0
      %v460 = vpop.f32.mrb[0].mxu0
      %v461 = vadd.f32 %v286, %v460
      %v462 = vpop.f32.mrb[0].mxu0
      %463 = vmatprep.mubr.bf16.mxu0 0
      %464 = vmatmul.mubr.bf16.gmra.mrb[0].mxu0 %v379
      %v465 = vpop.f32.mrb[0].mxu0
      %v466 = vadd.f32 %v286, %v465
      %v467 = vpop.f32.mrb[0].mxu0
      %v468 = vpop.f32.mrb[0].mxu0
      %v469 = vadd.f32 %v286, %v468
      %v470 = vpop.f32.mrb[0].mxu0
      %471 = vmatprep.mubr.bf16.mxu0 0
      %472 = vmatmul.mubr.bf16.gmra.mrb[0].mxu0 %v382
      %v473 = vpop.f32.mrb[0].mxu0
      %v474 = vadd.f32 %v286, %v473
      %v475 = vpop.f32.mrb[0].mxu0
      %v476 = vpop.f32.mrb[0].mxu0
      %v477 = vadd.f32 %v286, %v476
      %v478 = vpop.f32.mrb[0].mxu0
      %479 = vmatprep.mubr.bf16.mxu0 0
      %480 = vmatmul.mubr.bf16.gmra.mrb[0].mxu0 %v385
      %v481 = vpop.f32.mrb[0].mxu0
      %v482 = vadd.f32 %v286, %v481
      %v483 = vpop.f32.mrb[0].mxu0
      %v484 = vpop.f32.mrb[0].mxu0
      %v485 = vadd.f32 %v286, %v484
      %v486 = vpop.f32.mrb[0].mxu0
      %487 = vmatprep.mubr.bf16.mxu0 0
      %488 = vmatmul.mubr.bf16.gmra.mrb[0].mxu0 %v388
      %v489 = vpop.f32.mrb[0].mxu0
      %v490 = vadd.f32 %v286, %v489
      %v491 = vpop.f32.mrb[0].mxu0
      %v492 = vpop.f32.mrb[0].mxu0
      %v493 = vadd.f32 %v286, %v492
      %v494 = vpop.f32.mrb[0].mxu0
      %495 = vmatprep.mubr.bf16.mxu0 0
      %496 = vmatmul.mubr.bf16.gmra.mrb[0].mxu0 %v391
      %v497 = vpop.f32.mrb[0].mxu0
      %v498 = vadd.f32 %v286, %v497
      %v499 = vpop.f32.mrb[0].mxu0
      %v500 = vpop.f32.mrb[0].mxu0
      %v501 = vadd.f32 %v286, %v500
      %v502 = vpop.f32.mrb[0].mxu0
      %503 = vmatprep.mubr.bf16.mxu0 0
      %504 = vmatmul.mubr.bf16.gmra.mrb[0].mxu0 %v394
      %v505 = vpop.f32.mrb[0].mxu0
      %v506 = vadd.f32 %v286, %v505
      %v507 = vpop.f32.mrb[0].mxu0
      %v508 = vpop.f32.mrb[0].mxu0
      %v509 = vadd.f32 %v286, %v508
      %v510 = vpop.f32.mrb[0].mxu0
      %511 = vmatprep.mubr.bf16.mxu0 0
      %512 = vmatmul.mubr.bf16.gmra.mrb[0].mxu0 %v397
      %v513 = vpop.f32.mrb[0].mxu0
      %v514 = vadd.f32 %v286, %v513
      %v515 = vpop.f32.mrb[0].mxu0
      %v516 = vpop.f32.mrb[0].mxu0
      %v517 = vadd.f32 %v286, %v516
      %v518 = vpop.f32.mrb[0].mxu0
      %519 = vmatprep.mubr.bf16.mxu0 0
      %520 = vmatmul.mubr.bf16.gmra.mrb[0].mxu0 %v400
      %v521 = vpop.f32.mrb[0].mxu0
      %v522 = vadd.f32 %v286, %v521
      %v523 = vpop.f32.mrb[0].mxu0
      %v524 = vpop.f32.mrb[0].mxu0
      %v525 = vadd.f32 %v286, %v524
      %v526 = vpop.f32.mrb[0].mxu0
      %527 = vmatprep.mubr.bf16.mxu0 0
      %528 = vmatmul.mubr.bf16.gmra.mrb[0].mxu0 %v403
      %v529 = vpop.f32.mrb[0].mxu0
      %v530 = vadd.f32 %v286, %v529
      %v531 = vpop.f32.mrb[0].mxu0
      %v532 = vpop.f32.mrb[0].mxu0
      %v533 = vadd.f32 %v286, %v532
      %v534 = vpop.f32.mrb[0].mxu0
      %535 = vmatprep.mubr.bf16.mxu0 0
      %536 = vmatmul.mubr.bf16.gmra.mrb[0].mxu0 %v406
      %v537 = vpop.f32.mrb[0].mxu0
      %v538 = vadd.f32 %v286, %v537
      %v539 = vpop.f32.mrb[0].mxu0
      %v540 = vpop.f32.mrb[0].mxu0
      %v541 = vadd.f32 %v286, %v540
      %v542 = vpop.f32.mrb[0].mxu0
      %543 = vmatprep.mubr.bf16.mxu0 0
      %544 = vmatmul.mubr.bf16.gmra.mrb[0].mxu0 %v409
      %v545 = vpop.f32.mrb[0].mxu0
      %v546 = vadd.f32 %v286, %v545
      %v547 = vpop.f32.mrb[0].mxu0
      %v548 = vpop.f32.mrb[0].mxu0
      %v549 = vadd.f32 %v286, %v548
      %v550 = vpop.f32.mrb[0].mxu0
      %551 = vmatprep.mubr.bf16.mxu0 0
      %552 = vmatmul.mubr.bf16.gmra.mrb[0].mxu0 %v412
      %v553 = vpop.f32.mrb[0].mxu0
      %v554 = vadd.f32 %v286, %v553
      %v555 = vpop.f32.mrb[0].mxu0
      %v556 = vpop.f32.mrb[0].mxu0
      %v557 = vadd.f32 %v286, %v556
      %v558 = vpop.f32.mrb[0].mxu0
      %559 = vmatprep.mubr.bf16.mxu0 0
      %560 = vmatmul.mubr.bf16.gmra.mrb[0].mxu0 %v415
      %v561 = vpop.f32.mrb[0].mxu0
      %v562 = vadd.f32 %v286, %v561
      %v563 = vpop.f32.mrb[0].mxu0
      %v564 = vpop.f32.mrb[0].mxu0
      %v565 = vadd.f32 %v286, %v564
      %v566 = vpop.f32.mrb[0].mxu0
      %567 = vmatprep.mubr.bf16.mxu0 0
      %568 = vmatmul.mubr.bf16.gmra.mrb[0].mxu0 %v418
      %v569 = vpop.f32.mrb[0].mxu0
      %v570 = vadd.f32 %v286, %v569
      %v571 = vpop.f32.mrb[0].mxu0
      %v572 = vpop.f32.mrb[0].mxu0
      %v573 = vadd.f32 %v286, %v572
      %v574 = vpop.f32.mrb[0].mxu0
      %575 = vmatprep.mubr.bf16.mxu0 0
      %576 = vmatmul.mubr.bf16.gmra.mrb[0].mxu0 %v421
      %v577 = vpop.f32.mrb[0].mxu0
      %v578 = vadd.f32 %v286, %v577
      %v579 = vpop.f32.mrb[0].mxu0
      %v580 = vpop.f32.mrb[0].mxu0
      %v581 = vadd.f32 %v286, %v580
      %v582 = vpop.f32.mrb[0].mxu0
      %583 = vdwg.mxu0
      %v584 = vpack.c.bf16 %v461, %v458
      %v585 = vpack.c.bf16 %v469, %v466
      %v586 = vpack.c.bf16 %v477, %v474
      %v587 = vpack.c.bf16 %v485, %v482
      %v588 = vpack.c.bf16 %v493, %v490
      %v589 = vpack.c.bf16 %v501, %v498
      %v590 = vpack.c.bf16 %v509, %v506
      %v591 = vpack.c.bf16 %v517, %v514
      %v592 = vpack.c.bf16 %v525, %v522
      %v593 = vpack.c.bf16 %v533, %v530
      %v594 = vpack.c.bf16 %v541, %v538
      %v595 = vpack.c.bf16 %v549, %v546
      %v596 = vpack.c.bf16 %v557, %v554
      %v597 = vpack.c.bf16 %v565, %v562
      %v598 = vpack.c.bf16 %v573, %v570
      %v599 = vpack.c.bf16 %v581, %v578
      %v616 = vunpack.c.l.b16 %v584
      %v617 = vunpack.c.h.b16 %v584
      %v618 = vunpack.c.l.b16 %v585
      %v619 = vunpack.c.h.b16 %v585
      %v620 = vunpack.c.l.b16 %v586
      %v621 = vunpack.c.h.b16 %v586
      %v622 = vunpack.c.l.b16 %v587
      %v623 = vunpack.c.h.b16 %v587
      %v624 = vunpack.c.l.b16 %v588
      %v625 = vunpack.c.h.b16 %v588
      %v626 = vunpack.c.l.b16 %v589
      %v627 = vunpack.c.h.b16 %v589
      %v628 = vunpack.c.l.b16 %v590
      %v629 = vunpack.c.h.b16 %v590
      %v630 = vunpack.c.l.b16 %v591
      %v631 = vunpack.c.h.b16 %v591
      %v632 = vunpack.c.l.b16 %v592
      %v633 = vunpack.c.h.b16 %v592
      %v634 = vunpack.c.l.b16 %v593
      %v635 = vunpack.c.h.b16 %v593
      %v636 = vunpack.c.l.b16 %v594
      %v637 = vunpack.c.h.b16 %v594
      %v638 = vunpack.c.l.b16 %v595
      %v639 = vunpack.c.h.b16 %v595
      %v640 = vunpack.c.l.b16 %v596
      %v641 = vunpack.c.h.b16 %v596
      %v642 = vunpack.c.l.b16 %v597
      %v643 = vunpack.c.h.b16 %v597
      %v644 = vunpack.c.l.b16 %v598
      %v645 = vunpack.c.h.b16 %v598
      %v646 = vunpack.c.l.b16 %v599
      %v647 = vunpack.c.h.b16 %v599
      %v648 = vpack.c.b16 %v616, %v616
      %v649 = vpack.c.b16 %v617, %v617
      %v650 = vpack.c.b16 %v618, %v618
      %v651 = vpack.c.b16 %v619, %v619
      %v652 = vpack.c.b16 %v620, %v620
      %v653 = vpack.c.b16 %v621, %v621
      %v654 = vpack.c.b16 %v622, %v622
      %v655 = vpack.c.b16 %v623, %v623
      %v656 = vpack.c.b16 %v624, %v624
      %v657 = vpack.c.b16 %v625, %v625
      %v658 = vpack.c.b16 %v626, %v626
      %v659 = vpack.c.b16 %v627, %v627
      %v660 = vpack.c.b16 %v628, %v628
      %v661 = vpack.c.b16 %v629, %v629
      %v662 = vpack.c.b16 %v630, %v630
      %v663 = vpack.c.b16 %v631, %v631
      %v664 = vpack.c.b16 %v632, %v632
      %v665 = vpack.c.b16 %v633, %v633
      %v666 = vpack.c.b16 %v634, %v634
      %v667 = vpack.c.b16 %v635, %v635
      %v668 = vpack.c.b16 %v636, %v636
      %v669 = vpack.c.b16 %v637, %v637
      %v670 = vpack.c.b16 %v638, %v638
      %v671 = vpack.c.b16 %v639, %v639
      %v672 = vpack.c.b16 %v640, %v640
      %v673 = vpack.c.b16 %v641, %v641
      %v674 = vpack.c.b16 %v642, %v642
      %v675 = vpack.c.b16 %v643, %v643
      %v676 = vpack.c.b16 %v644, %v644
      %v677 = vpack.c.b16 %v645, %v645
      %v678 = vpack.c.b16 %v646, %v646
      %v679 = vpack.c.b16 %v647, %v647
      %vm712 = vcmask 519168
      %713 = vst.msk [vmem:[%s241] sm:$0xf] %vm712, %v648
      %714 = vst.msk [vmem:[%s241 + $0x4] sm:$0xf] %vm712, %v649
      %715 = vst.msk [vmem:[%s241 + $0x8] sm:$0xf] %vm712, %v650
      %716 = vst.msk [vmem:[%s241 + $0xc] sm:$0xf] %vm712, %v651
      %717 = vst.msk [vmem:[%s241 + $0x10] sm:$0xf] %vm712, %v652
      %718 = vst.msk [vmem:[%s241 + $0x14] sm:$0xf] %vm712, %v653
      %719 = vst.msk [vmem:[%s241 + $0x18] sm:$0xf] %vm712, %v654
      %720 = vst.msk [vmem:[%s241 + $0x1c] sm:$0xf] %vm712, %v655
      %721 = vst.msk [vmem:[%s241 + $0x20] sm:$0xf] %vm712, %v656
      %722 = vst.msk [vmem:[%s241 + $0x24] sm:$0xf] %vm712, %v657
      %723 = vst.msk [vmem:[%s241 + $0x28] sm:$0xf] %vm712, %v658
      %724 = vst.msk [vmem:[%s241 + $0x2c] sm:$0xf] %vm712, %v659
      %725 = vst.msk [vmem:[%s241 + $0x30] sm:$0xf] %vm712, %v660
      %726 = vst.msk [vmem:[%s241 + $0x34] sm:$0xf] %vm712, %v661
      %727 = vst.msk [vmem:[%s241 + $0x38] sm:$0xf] %vm712, %v662
      %728 = vst.msk [vmem:[%s241 + $0x3c] sm:$0xf] %vm712, %v663
      %729 = vst.msk [vmem:[%s241 + $0x40] sm:$0xf] %vm712, %v664
      %730 = vst.msk [vmem:[%s241 + $0x44] sm:$0xf] %vm712, %v665
      %731 = vst.msk [vmem:[%s241 + $0x48] sm:$0xf] %vm712, %v666
      %732 = vst.msk [vmem:[%s241 + $0x4c] sm:$0xf] %vm712, %v667
      %733 = vst.msk [vmem:[%s241 + $0x50] sm:$0xf] %vm712, %v668
      %734 = vst.msk [vmem:[%s241 + $0x54] sm:$0xf] %vm712, %v669
      %735 = vst.msk [vmem:[%s241 + $0x58] sm:$0xf] %vm712, %v670
      %736 = vst.msk [vmem:[%s241 + $0x5c] sm:$0xf] %vm712, %v671
      %737 = vst.msk [vmem:[%s241 + $0x60] sm:$0xf] %vm712, %v672
      %738 = vst.msk [vmem:[%s241 + $0x64] sm:$0xf] %vm712, %v673
      %739 = vst.msk [vmem:[%s241 + $0x68] sm:$0xf] %vm712, %v674
      %740 = vst.msk [vmem:[%s241 + $0x6c] sm:$0xf] %vm712, %v675
      %741 = vst.msk [vmem:[%s241 + $0x70] sm:$0xf] %vm712, %v676
      %742 = vst.msk [vmem:[%s241 + $0x74] sm:$0xf] %vm712, %v677
      %743 = vst.msk [vmem:[%s241 + $0x78] sm:$0xf] %vm712, %v678
      %744 = vst.msk [vmem:[%s241 + $0x7c] sm:$0xf] %vm712, %v679
      %p745 = scmp.eq.s32.totalorder %s21, 0
      // Predicated region
      $region33: #{bottleneck_forward.6} parent=31 // pred_check
        %p746 = pneg %p745
      $region34: #{bottleneck_forward.6} parent=31 // pred_check_branch
        %748 = sbr.rel (%p746) target = $region36
      $region35: #{bottleneck_forward.6} parent=31 // pred_region
        %vm749 = vcmask 516096
        %750 = vst.msk [vmem:[%s245] sm:$0x1] %vm749, 0.0
      $region36: #{bottleneck_forward.6} parent=31 // pred_fallthru
        _
      %v751 = vld [vmem:[%s245] sm:$0x1]
      %vm752 = vcmask 523264
      %v753 = vsel %vm752, %v458, 0.0
      %v754 = vsel %vm752, %v461, 0.0
      %v755 = vadd.f32 %v753, %v754
      %v756 = vsel %vm752, %v466, 0.0
      %v757 = vadd.f32 %v755, %v756
      %v758 = vsel %vm752, %v469, 0.0
      %v759 = vadd.f32 %v757, %v758
      %v760 = vsel %vm752, %v474, 0.0
      %v761 = vadd.f32 %v759, %v760
      %v762 = vsel %vm752, %v477, 0.0
      %v763 = vadd.f32 %v761, %v762
      %v764 = vsel %vm752, %v482, 0.0
      %v765 = vadd.f32 %v763, %v764
      %v766 = vsel %vm752, %v485, 0.0
      %v767 = vadd.f32 %v765, %v766
      %v768 = vsel %vm752, %v490, 0.0
      %v769 = vadd.f32 %v767, %v768
      %v770 = vsel %vm752, %v493, 0.0
      %v771 = vadd.f32 %v769, %v770
      %v772 = vsel %vm752, %v498, 0.0
      %v773 = vadd.f32 %v771, %v772
      %v774 = vsel %vm752, %v501, 0.0
      %v775 = vadd.f32 %v773, %v774
      %v776 = vsel %vm752, %v506, 0.0
      %v777 = vadd.f32 %v775, %v776
      %v778 = vsel %vm752, %v509, 0.0
      %v779 = vadd.f32 %v777, %v778
      %v780 = vsel %vm752, %v514, 0.0
      %v781 = vadd.f32 %v779, %v780
      %v782 = vsel %vm752, %v517, 0.0
      %v783 = vadd.f32 %v781, %v782
      %v784 = vsel %vm752, %v522, 0.0
      %v785 = vadd.f32 %v783, %v784
      %v786 = vsel %vm752, %v525, 0.0
      %v787 = vadd.f32 %v785, %v786
      %v788 = vsel %vm752, %v530, 0.0
      %v789 = vadd.f32 %v787, %v788
      %v790 = vsel %vm752, %v533, 0.0
      %v791 = vadd.f32 %v789, %v790
      %v792 = vsel %vm752, %v538, 0.0
      %v793 = vadd.f32 %v791, %v792
      %v794 = vsel %vm752, %v541, 0.0
      %v795 = vadd.f32 %v793, %v794
      %v796 = vsel %vm752, %v546, 0.0
      %v797 = vadd.f32 %v795, %v796
      %v798 = vsel %vm752, %v549, 0.0
      %v799 = vadd.f32 %v797, %v798
      %v800 = vsel %vm752, %v554, 0.0
      %v801 = vadd.f32 %v799, %v800
      %v802 = vsel %vm752, %v557, 0.0
      %v803 = vadd.f32 %v801, %v802
      %v804 = vsel %vm752, %v562, 0.0
      %v805 = vadd.f32 %v803, %v804
      %v806 = vsel %vm752, %v565, 0.0
      %v807 = vadd.f32 %v805, %v806
      %v808 = vsel %vm752, %v570, 0.0
      %v809 = vadd.f32 %v807, %v808
      %v810 = vsel %vm752, %v573, 0.0
      %v811 = vadd.f32 %v809, %v810
      %v812 = vsel %vm752, %v578, 0.0
      %v813 = vadd.f32 %v811, %v812
      %v814 = vsel %vm752, %v581, 0.0
      %v815 = vadd.f32 %v813, %v814
      %v816 = vrot.slane %v815, 4
      %v817 = vadd.f32 %v815, %v816
      %v818 = vrot.slane %v817, 2
      %v819 = vadd.f32 %v817, %v818
      %v820 = vrot.slane %v819, 1
      %v821 = vadd.f32 %v819, %v820
      %v822 = vadd.f32 %v751, %v821
      %vm823 = vcmask 516096
      %824 = vst.msk [vmem:[%s245] sm:$0x1] %vm823, %v822
      %s825 = smul.u32 32, %s21
      %p826 = scmp.lt.s32.totalorder %s20, 1
      %s827 = scalar_select %p826, %s20, 1
      %p828 = scmp.lt.s32.totalorder %s825, 31
      %s829 = scalar_select %p828, %s825, 31
      %s830 = smul.addr %s827, 32
      %s831 = sadd.s32 %s829, %s830
      %s832 = smul.addr %s831, 4
      %s833 = scalar_lea.vmem %s3, %s832
      %p834 = scmp.lt.s32.totalorder %s20, 1
      %s835 = scalar_select %p834, %s20, 1
      %s836 = scalar_lea.vmem %s4, %s835
      // Predicated region
      $region37: #{bottleneck_forward.6} parent=31 // pred_check
        %p837 = pneg %p118
      $region38: #{bottleneck_forward.6} parent=31 // pred_check_branch
        %839 = sbr.rel (%p837) target = $region40
      $region39: #{bottleneck_forward.6} parent=31 // pred_region
        %s840 = smul.u32 32, %s21
      $region40: #{bottleneck_forward.6} parent=31 // pred_fallthru
        _
      // Predicated region
      $region41: #{bottleneck_forward.6} parent=31 // pred_check
        %p841 = pneg %p144
      $region42: #{bottleneck_forward.6} parent=31 // pred_check_branch
        %843 = sbr.rel (%p841) target = $region44
      $region43: #{bottleneck_forward.6} parent=31 // pred_region
        _
      $region44: #{bottleneck_forward.6} parent=31 // pred_fallthru
        _
    $region32: #{bottleneck_forward.6} parent=5 // pred_fallthru
      _
    %p844 = scmp.le.s32.totalorder 2, %s11
    // Predicated region
    $region45: #{bottleneck_forward.6} parent=5 // pred_check
      %p845 = pneg %p844
    $region46: #{bottleneck_forward.6} parent=5 // pred_check_branch
      %847 = sbr.rel (%p845) target = $region48
    $region47: #{bottleneck_forward.6} parent=5 // pred_region
      %s848 = ssub.s32 %s11, 2
      // Predicated region
      $region49: #{bottleneck_forward.6} parent=47 // pred_check
        %p849 = pneg %p124
      $region50: #{bottleneck_forward.6} parent=47 // pred_check_branch
        %851 = sbr.rel (%p849) target = $region52
      $region51: #{bottleneck_forward.6} parent=47 // pred_region
        %s852 = smul.u32 32, %s23
        %p853 = scmp.lt.s32.totalorder %s22, 1
        %s854 = scalar_select %p853, %s22, 1
        %p855 = scmp.lt.s32.totalorder %s852, 31
        %s856 = scalar_select %p855, %s852, 31
        %s857 = smul.addr %s854, 32
        %s858 = sadd.s32 %s856, %s857
        %s859 = smul.addr %s858, 4
        %s860 = scalar_lea.vmem %s3, %s859
      $region52: #{bottleneck_forward.6} parent=47 // pred_fallthru
        _
      // Predicated region
      $region53: #{bottleneck_forward.6} parent=47 // pred_check
        %p861 = pneg %p150
      $region54: #{bottleneck_forward.6} parent=47 // pred_check_branch
        %863 = sbr.rel (%p861) target = $region56
      $region55: #{bottleneck_forward.6} parent=47 // pred_region
        %p864 = scmp.lt.s32.totalorder %s22, 1
        %s865 = scalar_select %p864, %s22, 1
        %s866 = scalar_lea.vmem %s4, %s865
      $region56: #{bottleneck_forward.6} parent=47 // pred_fallthru
        _
    $region48: #{bottleneck_forward.6} parent=5 // pred_fallthru
      _
  $region6: #{bottleneck_forward.6} parent=0 // loop_footer
    %s15 = sadd.s32 1, %s11
  $region7: #{bottleneck_forward.6} parent=0 // loop_footer_branch
    %10 = sbr.rel target = $region3
  $region8: #{bottleneck_forward.6} parent=0 // loop_exit
    _

// kernel: bottleneck_forward.4
$region0: #{bottleneck_forward.4}
  #allocation0 [shape = 'u32[]', space=smem, size = 0x4, offset = 0x4, fixed_abs, tag = 'smem constant byte address 0x4 - core index']
  #allocation1 [shape = 'u32[144,128]{1,0:T(1,128)}', space=vmem, size = 0x12000, scoped, tag = 'internal scratch']
  %s0 = inlined_call_operand.vmem [shape: bf16[512,64], index: 0, kind: input, shape index: {}]
  %s1 = inlined_call_operand.vmem [shape: bf16[64,16], index: 1, kind: input, shape index: {}]
  %s2 = inlined_call_operand.vmem [shape: f32[1,16], index: 2, kind: input, shape index: {}]
  %s3 = inlined_call_operand.vmem [shape: bf16[512,16], index: 3, kind: output, shape index: {}]
  %s4 = sld [smem:[#allocation0]]
  $region22: #{bottleneck_forward.4} parent=0
    _
  %s6 = ssub.s32 1, %s4
  %s7 = scalar_select 0, %s6, %s4
  // Predicated region
  $region2: #{bottleneck_forward.4} parent=0 // pred_check
    _
  $region3: #{bottleneck_forward.4} parent=0 // pred_check_branch
    %9 = sbr.rel (0) target = $region5
  $region4: #{bottleneck_forward.4} parent=0 // pred_region
    _
  $region5: #{bottleneck_forward.4} parent=0 // pred_fallthru
    _
  // Predicated region
  $region6: #{bottleneck_forward.4} parent=0 // pred_check
    _
  $region7: #{bottleneck_forward.4} parent=0 // pred_check_branch
    %11 = sbr.rel (0) target = $region9
  $region8: #{bottleneck_forward.4} parent=0 // pred_region
    _
  $region9: #{bottleneck_forward.4} parent=0 // pred_fallthru
    _
  // Predicated region
  $region10: #{bottleneck_forward.4} parent=0 // pred_check
    _
  $region11: #{bottleneck_forward.4} parent=0 // pred_check_branch
    %13 = sbr.rel (0) target = $region13
  $region12: #{bottleneck_forward.4} parent=0 // pred_region
    _
  $region13: #{bottleneck_forward.4} parent=0 // pred_fallthru
    _
  %v15 = vld [vmem:[%s0] sm:$0xf]
  %v16 = vld [vmem:[%s0 + $0x4] sm:$0xf]
  %v17 = vld [vmem:[%s0 + $0x8] sm:$0xf]
  %v18 = vld [vmem:[%s0 + $0xc] sm:$0xf]
  %v19 = vld [vmem:[%s0 + $0x10] sm:$0xf]
  %v20 = vld [vmem:[%s0 + $0x14] sm:$0xf]
  %v21 = vld [vmem:[%s0 + $0x18] sm:$0xf]
  %v22 = vld [vmem:[%s0 + $0x1c] sm:$0xf]
  %v23 = vld [vmem:[%s0 + $0x20] sm:$0xf]
  %v24 = vld [vmem:[%s0 + $0x24] sm:$0xf]
  %v25 = vld [vmem:[%s0 + $0x28] sm:$0xf]
  %v26 = vld [vmem:[%s0 + $0x2c] sm:$0xf]
  %v27 = vld [vmem:[%s0 + $0x30] sm:$0xf]
  %v28 = vld [vmem:[%s0 + $0x34] sm:$0xf]
  %v29 = vld [vmem:[%s0 + $0x38] sm:$0xf]
  %v30 = vld [vmem:[%s0 + $0x3c] sm:$0xf]
  %v31 = vld [vmem:[%s0 + $0x40] sm:$0xf]
  %v32 = vld [vmem:[%s0 + $0x44] sm:$0xf]
  %v33 = vld [vmem:[%s0 + $0x48] sm:$0xf]
  %v34 = vld [vmem:[%s0 + $0x4c] sm:$0xf]
  %v35 = vld [vmem:[%s0 + $0x50] sm:$0xf]
  %v36 = vld [vmem:[%s0 + $0x54] sm:$0xf]
  %v37 = vld [vmem:[%s0 + $0x58] sm:$0xf]
  %v38 = vld [vmem:[%s0 + $0x5c] sm:$0xf]
  %v39 = vld [vmem:[%s0 + $0x60] sm:$0xf]
  %v40 = vld [vmem:[%s0 + $0x64] sm:$0xf]
  %v41 = vld [vmem:[%s0 + $0x68] sm:$0xf]
  %v42 = vld [vmem:[%s0 + $0x6c] sm:$0xf]
  %v43 = vld [vmem:[%s0 + $0x70] sm:$0xf]
  %v44 = vld [vmem:[%s0 + $0x74] sm:$0xf]
  %v45 = vld [vmem:[%s0 + $0x78] sm:$0xf]
  %v46 = vld [vmem:[%s0 + $0x7c] sm:$0xf]
  %v47 = vld [vmem:[%s0 + $0x80] sm:$0xf]
  %v48 = vld [vmem:[%s0 + $0x84] sm:$0xf]
  %v49 = vld [vmem:[%s0 + $0x88] sm:$0xf]
  %v50 = vld [vmem:[%s0 + $0x8c] sm:$0xf]
  %v51 = vld [vmem:[%s0 + $0x90] sm:$0xf]
  %v52 = vld [vmem:[%s0 + $0x94] sm:$0xf]
  %v53 = vld [vmem:[%s0 + $0x98] sm:$0xf]
  %v54 = vld [vmem:[%s0 + $0x9c] sm:$0xf]
  %v55 = vld [vmem:[%s0 + $0xa0] sm:$0xf]
  %v56 = vld [vmem:[%s0 + $0xa4] sm:$0xf]
  %v57 = vld [vmem:[%s0 + $0xa8] sm:$0xf]
  %v58 = vld [vmem:[%s0 + $0xac] sm:$0xf]
  %v59 = vld [vmem:[%s0 + $0xb0] sm:$0xf]
  %v60 = vld [vmem:[%s0 + $0xb4] sm:$0xf]
  %v61 = vld [vmem:[%s0 + $0xb8] sm:$0xf]
  %v62 = vld [vmem:[%s0 + $0xbc] sm:$0xf]
  %v63 = vld [vmem:[%s0 + $0xc0] sm:$0xf]
  %v64 = vld [vmem:[%s0 + $0xc4] sm:$0xf]
  %v65 = vld [vmem:[%s0 + $0xc8] sm:$0xf]
  %v66 = vld [vmem:[%s0 + $0xcc] sm:$0xf]
  %v67 = vld [vmem:[%s0 + $0xd0] sm:$0xf]
  %v68 = vld [vmem:[%s0 + $0xd4] sm:$0xf]
  %v69 = vld [vmem:[%s0 + $0xd8] sm:$0xf]
  %v70 = vld [vmem:[%s0 + $0xdc] sm:$0xf]
  %v71 = vld [vmem:[%s0 + $0xe0] sm:$0xf]
  %v72 = vld [vmem:[%s0 + $0xe4] sm:$0xf]
  %v73 = vld [vmem:[%s0 + $0xe8] sm:$0xf]
  %v74 = vld [vmem:[%s0 + $0xec] sm:$0xf]
  %v75 = vld [vmem:[%s0 + $0xf0] sm:$0xf]
  %v76 = vld [vmem:[%s0 + $0xf4] sm:$0xf]
  %v77 = vld [vmem:[%s0 + $0xf8] sm:$0xf]
  %v78 = vld [vmem:[%s0 + $0xfc] sm:$0xf]
  %v79 = vld [vmem:[%s1] sm:$0xf]
  %v80 = vld [vmem:[%s1 + $0x4] sm:$0xf]
  %v81 = vld [vmem:[%s1 + $0x8] sm:$0xf]
  %v82 = vld [vmem:[%s1 + $0xc] sm:$0xf]
  %v83 = vld [vmem:[%s1 + $0x10] sm:$0xf]
  %v84 = vld [vmem:[%s1 + $0x14] sm:$0xf]
  %v85 = vld [vmem:[%s1 + $0x18] sm:$0xf]
  %v86 = vld [vmem:[%s1 + $0x1c] sm:$0xf]
  %v87 = vld [vmem:[%s2] sm:$0x1]
  %v89 = vlaneseq
  %v90 = vshrl.u32 %v89, 7
  %v91 = vsub.s32 0, %v90
  %v92 = vrot.slane %v87, %v91
  %v158 = vunpack.c.l.b16 %v15
  %v159 = vunpack.c.l.b16 %v16
  %v160 = vunpack.c.l.b16 %v17
  %v161 = vunpack.c.l.b16 %v18
  %v162 = vunpack.c.l.b16 %v19
  %v163 = vunpack.c.l.b16 %v20
  %v164 = vunpack.c.l.b16 %v21
  %v165 = vunpack.c.l.b16 %v22
  %v166 = vunpack.c.l.b16 %v23
  %v167 = vunpack.c.l.b16 %v24
  %v168 = vunpack.c.l.b16 %v25
  %v169 = vunpack.c.l.b16 %v26
  %v170 = vunpack.c.l.b16 %v27
  %v171 = vunpack.c.l.b16 %v28
  %v172 = vunpack.c.l.b16 %v29
  %v173 = vunpack.c.l.b16 %v30
  %v174 = vunpack.c.l.b16 %v31
  %v175 = vunpack.c.l.b16 %v32
  %v176 = vunpack.c.l.b16 %v33
  %v177 = vunpack.c.l.b16 %v34
  %v178 = vunpack.c.l.b16 %v35
  %v179 = vunpack.c.l.b16 %v36
  %v180 = vunpack.c.l.b16 %v37
  %v181 = vunpack.c.l.b16 %v38
  %v182 = vunpack.c.l.b16 %v39
  %v183 = vunpack.c.l.b16 %v40
  %v184 = vunpack.c.l.b16 %v41
  %v185 = vunpack.c.l.b16 %v42
  %v186 = vunpack.c.l.b16 %v43
  %v187 = vunpack.c.l.b16 %v44
  %v188 = vunpack.c.l.b16 %v45
  %v189 = vunpack.c.l.b16 %v46
  %v190 = vunpack.c.l.b16 %v47
  %v191 = vunpack.c.l.b16 %v48
  %v192 = vunpack.c.l.b16 %v49
  %v193 = vunpack.c.l.b16 %v50
  %v194 = vunpack.c.l.b16 %v51
  %v195 = vunpack.c.l.b16 %v52
  %v196 = vunpack.c.l.b16 %v53
  %v197 = vunpack.c.l.b16 %v54
  %v198 = vunpack.c.l.b16 %v55
  %v199 = vunpack.c.l.b16 %v56
  %v200 = vunpack.c.l.b16 %v57
  %v201 = vunpack.c.l.b16 %v58
  %v202 = vunpack.c.l.b16 %v59
  %v203 = vunpack.c.l.b16 %v60
  %v204 = vunpack.c.l.b16 %v61
  %v205 = vunpack.c.l.b16 %v62
  %v206 = vunpack.c.l.b16 %v63
  %v207 = vunpack.c.l.b16 %v64
  %v208 = vunpack.c.l.b16 %v65
  %v209 = vunpack.c.l.b16 %v66
  %v210 = vunpack.c.l.b16 %v67
  %v211 = vunpack.c.l.b16 %v68
  %v212 = vunpack.c.l.b16 %v69
  %v213 = vunpack.c.l.b16 %v70
  %v214 = vunpack.c.l.b16 %v71
  %v215 = vunpack.c.l.b16 %v72
  %v216 = vunpack.c.l.b16 %v73
  %v217 = vunpack.c.l.b16 %v74
  %v218 = vunpack.c.l.b16 %v75
  %v219 = vunpack.c.l.b16 %v76
  %v220 = vunpack.c.l.b16 %v77
  %v221 = vunpack.c.l.b16 %v78
  %v222 = vpack.c.b16 %v159, %v158
  %v223 = vpack.c.b16 %v161, %v160
  %v224 = vpack.c.b16 %v163, %v162
  %v225 = vpack.c.b16 %v165, %v164
  %v226 = vpack.c.b16 %v167, %v166
  %v227 = vpack.c.b16 %v169, %v168
  %v228 = vpack.c.b16 %v171, %v170
  %v229 = vpack.c.b16 %v173, %v172
  %v230 = vpack.c.b16 %v175, %v174
  %v231 = vpack.c.b16 %v177, %v176
  %v232 = vpack.c.b16 %v179, %v178
  %v233 = vpack.c.b16 %v181, %v180
  %v234 = vpack.c.b16 %v183, %v182
  %v235 = vpack.c.b16 %v185, %v184
  %v236 = vpack.c.b16 %v187, %v186
  %v237 = vpack.c.b16 %v189, %v188
  %v238 = vpack.c.b16 %v191, %v190
  %v239 = vpack.c.b16 %v193, %v192
  %v240 = vpack.c.b16 %v195, %v194
  %v241 = vpack.c.b16 %v197, %v196
  %v242 = vpack.c.b16 %v199, %v198
  %v243 = vpack.c.b16 %v201, %v200
  %v244 = vpack.c.b16 %v203, %v202
  %v245 = vpack.c.b16 %v205, %v204
  %v246 = vpack.c.b16 %v207, %v206
  %v247 = vpack.c.b16 %v209, %v208
  %v248 = vpack.c.b16 %v211, %v210
  %v249 = vpack.c.b16 %v213, %v212
  %v250 = vpack.c.b16 %v215, %v214
  %v251 = vpack.c.b16 %v217, %v216
  %v252 = vpack.c.b16 %v219, %v218
  %v253 = vpack.c.b16 %v221, %v220
  %v262 = vunpack.c.l.b16 %v79
  %v263 = vunpack.c.l.b16 %v80
  %v264 = vunpack.c.l.b16 %v81
  %v265 = vunpack.c.l.b16 %v82
  %v266 = vunpack.c.l.b16 %v83
  %v267 = vunpack.c.l.b16 %v84
  %v268 = vunpack.c.l.b16 %v85
  %v269 = vunpack.c.l.b16 %v86
  %v270 = vpack.c.b16 %v263, %v262
  %v271 = vpack.c.b16 %v265, %v264
  %v272 = vpack.c.b16 %v267, %v266
  %v273 = vpack.c.b16 %v269, %v268
  %vm278 = vcmask 523264
  %v280 = vsel %vm278, %v222, 0
  %v283 = vsel %vm278, %v223, 0
  %v286 = vsel %vm278, %v224, 0
  %v289 = vsel %vm278, %v225, 0
  %v292 = vsel %vm278, %v226, 0
  %v295 = vsel %vm278, %v227, 0
  %v298 = vsel %vm278, %v228, 0
  %v301 = vsel %vm278, %v229, 0
  %v304 = vsel %vm278, %v230, 0
  %v307 = vsel %vm278, %v231, 0
  %v310 = vsel %vm278, %v232, 0
  %v313 = vsel %vm278, %v233, 0
  %v316 = vsel %vm278, %v234, 0
  %v319 = vsel %vm278, %v235, 0
  %v322 = vsel %vm278, %v236, 0
  %v325 = vsel %vm278, %v237, 0
  %v328 = vsel %vm278, %v238, 0
  %v331 = vsel %vm278, %v239, 0
  %v334 = vsel %vm278, %v240, 0
  %v337 = vsel %vm278, %v241, 0
  %v340 = vsel %vm278, %v242, 0
  %v343 = vsel %vm278, %v243, 0
  %v346 = vsel %vm278, %v244, 0
  %v349 = vsel %vm278, %v245, 0
  %v352 = vsel %vm278, %v246, 0
  %v355 = vsel %vm278, %v247, 0
  %v358 = vsel %vm278, %v248, 0
  %v361 = vsel %vm278, %v249, 0
  %v364 = vsel %vm278, %v250, 0
  %v367 = vsel %vm278, %v251, 0
  %v370 = vsel %vm278, %v252, 0
  %v373 = vsel %vm278, %v253, 0
  %375 = vmatprep.subr.bf16.mxu0 0
  %376 = vmatpush1.bf16.msra.mxu0 %v270
  %377 = vmatprep.subr.bf16.mxu0 0
  %378 = vmatpush1.bf16.msra.mxu0 %v271
  %379 = vmatprep.subr.bf16.mxu0 0
  %380 = vmatpush1.bf16.msra.mxu0 %v272
  %381 = vmatprep.subr.bf16.mxu0 0
  %382 = vmatpush1.bf16.msra.mxu0 %v273
  %383 = vmatprep.subr.bf16.mxu0 0
  %384 = vmatpush1.bf16.msra.mxu0 0
  %385 = vmatprep.subr.bf16.mxu0 0
  %386 = vmatpush1.bf16.msra.mxu0 0
  %387 = vmatprep.subr.bf16.mxu0 0
  %388 = vmatpush1.bf16.msra.mxu0 0
  %389 = vmatprep.subr.bf16.mxu0 0
  %390 = vmatpush1.bf16.msra.mxu0 0
  %391 = vmatprep.subr.bf16.mxu0 0
  %392 = vmatpush1.bf16.msra.mxu0 0
  %393 = vmatprep.subr.bf16.mxu0 0
  %394 = vmatpush1.bf16.msra.mxu0 0
  %395 = vmatprep.subr.bf16.mxu0 0
  %396 = vmatpush1.bf16.msra.mxu0 0
  %397 = vmatprep.subr.bf16.mxu0 0
  %398 = vmatpush1.bf16.msra.mxu0 0
  %399 = vmatprep.subr.bf16.mxu0 0
  %400 = vmatpush1.bf16.msra.mxu0 0
  %401 = vmatprep.subr.bf16.mxu0 0
  %402 = vmatpush1.bf16.msra.mxu0 0
  %403 = vmatprep.subr.bf16.mxu0 0
  %404 = vmatpush1.bf16.msra.mxu0 0
  %405 = vmatprep.subr.bf16.mxu0 0
  %406 = vmatpush1.bf16.msra.mxu0 0
  %407 = vmatprep.mubr.bf16.mxu0 0
  %408 = vmatmul.mubr.bf16.gmra.mrb[0].mxu0 %v280
  %v409 = vpop.f32.mrb[0].mxu0
  %v410 = vadd.f32 %v92, %v409
  %v411 = vpop.f32.mrb[0].mxu0
  %v412 = vpop.f32.mrb[0].mxu0
  %v413 = vadd.f32 %v92, %v412
  %v414 = vpop.f32.mrb[0].mxu0
  %415 = vmatprep.mubr.bf16.mxu0 0
  %416 = vmatmul.mubr.bf16.gmra.mrb[0].mxu0 %v283
  %v417 = vpop.f32.mrb[0].mxu0
  %v418 = vadd.f32 %v92, %v417
  %v419 = vpop.f32.mrb[0].mxu0
  %v420 = vpop.f32.mrb[0].mxu0
  %v421 = vadd.f32 %v92, %v420
  %v422 = vpop.f32.mrb[0].mxu0
  %423 = vmatprep.mubr.bf16.mxu0 0
  %424 = vmatmul.mubr.bf16.gmra.mrb[0].mxu0 %v286
  %v425 = vpop.f32.mrb[0].mxu0
  %v426 = vadd.f32 %v92, %v425
  %v427 = vpop.f32.mrb[0].mxu0
  %v428 = vpop.f32.mrb[0].mxu0
  %v429 = vadd.f32 %v92, %v428
  %v430 = vpop.f32.mrb[0].mxu0
  %431 = vmatprep.mubr.bf16.mxu0 0
  %432 = vmatmul.mubr.bf16.gmra.mrb[0].mxu0 %v289
  %v433 = vpop.f32.mrb[0].mxu0
  %v434 = vadd.f32 %v92, %v433
  %v435 = vpop.f32.mrb[0].mxu0
  %v436 = vpop.f32.mrb[0].mxu0
  %v437 = vadd.f32 %v92, %v436
  %v438 = vpop.f32.mrb[0].mxu0
  %439 = vmatprep.mubr.bf16.mxu0 0
  %440 = vmatmul.mubr.bf16.gmra.mrb[0].mxu0 %v292
  %v441 = vpop.f32.mrb[0].mxu0
  %v442 = vadd.f32 %v92, %v441
  %v443 = vpop.f32.mrb[0].mxu0
  %v444 = vpop.f32.mrb[0].mxu0
  %v445 = vadd.f32 %v92, %v444
  %v446 = vpop.f32.mrb[0].mxu0
  %447 = vmatprep.mubr.bf16.mxu0 0
  %448 = vmatmul.mubr.bf16.gmra.mrb[0].mxu0 %v295
  %v449 = vpop.f32.mrb[0].mxu0
  %v450 = vadd.f32 %v92, %v449
  %v451 = vpop.f32.mrb[0].mxu0
  %v452 = vpop.f32.mrb[0].mxu0
  %v453 = vadd.f32 %v92, %v452
  %v454 = vpop.f32.mrb[0].mxu0
  %455 = vmatprep.mubr.bf16.mxu0 0
  %456 = vmatmul.mubr.bf16.gmra.mrb[0].mxu0 %v298
  %v457 = vpop.f32.mrb[0].mxu0
  %v458 = vadd.f32 %v92, %v457
  %v459 = vpop.f32.mrb[0].mxu0
  %v460 = vpop.f32.mrb[0].mxu0
  %v461 = vadd.f32 %v92, %v460
  %v462 = vpop.f32.mrb[0].mxu0
  %463 = vmatprep.mubr.bf16.mxu0 0
  %464 = vmatmul.mubr.bf16.gmra.mrb[0].mxu0 %v301
  %v465 = vpop.f32.mrb[0].mxu0
  %v466 = vadd.f32 %v92, %v465
  %v467 = vpop.f32.mrb[0].mxu0
  %v468 = vpop.f32.mrb[0].mxu0
  %v469 = vadd.f32 %v92, %v468
  %v470 = vpop.f32.mrb[0].mxu0
  %471 = vmatprep.mubr.bf16.mxu0 0
  %472 = vmatmul.mubr.bf16.gmra.mrb[0].mxu0 %v304
  %v473 = vpop.f32.mrb[0].mxu0
  %v474 = vadd.f32 %v92, %v473
  %v475 = vpop.f32.mrb[0].mxu0
  %v476 = vpop.f32.mrb[0].mxu0
  %v477 = vadd.f32 %v92, %v476
  %v478 = vpop.f32.mrb[0].mxu0
  %479 = vmatprep.mubr.bf16.mxu0 0
  %480 = vmatmul.mubr.bf16.gmra.mrb[0].mxu0 %v307
  %v481 = vpop.f32.mrb[0].mxu0
  %v482 = vadd.f32 %v92, %v481
  %v483 = vpop.f32.mrb[0].mxu0
  %v484 = vpop.f32.mrb[0].mxu0
  %v485 = vadd.f32 %v92, %v484
  %v486 = vpop.f32.mrb[0].mxu0
  %487 = vmatprep.mubr.bf16.mxu0 0
  %488 = vmatmul.mubr.bf16.gmra.mrb[0].mxu0 %v310
  %v489 = vpop.f32.mrb[0].mxu0
  %v490 = vadd.f32 %v92, %v489
  %v491 = vpop.f32.mrb[0].mxu0
  %v492 = vpop.f32.mrb[0].mxu0
  %v493 = vadd.f32 %v92, %v492
  %v494 = vpop.f32.mrb[0].mxu0
  %495 = vmatprep.mubr.bf16.mxu0 0
  %496 = vmatmul.mubr.bf16.gmra.mrb[0].mxu0 %v313
  %v497 = vpop.f32.mrb[0].mxu0
  %v498 = vadd.f32 %v92, %v497
  %v499 = vpop.f32.mrb[0].mxu0
  %v500 = vpop.f32.mrb[0].mxu0
  %v501 = vadd.f32 %v92, %v500
  %v502 = vpop.f32.mrb[0].mxu0
  %503 = vmatprep.mubr.bf16.mxu0 0
  %504 = vmatmul.mubr.bf16.gmra.mrb[0].mxu0 %v316
  %v505 = vpop.f32.mrb[0].mxu0
  %v506 = vadd.f32 %v92, %v505
  %v507 = vpop.f32.mrb[0].mxu0
  %v508 = vpop.f32.mrb[0].mxu0
  %v509 = vadd.f32 %v92, %v508
  %v510 = vpop.f32.mrb[0].mxu0
  %511 = vmatprep.mubr.bf16.mxu0 0
  %512 = vmatmul.mubr.bf16.gmra.mrb[0].mxu0 %v319
  %v513 = vpop.f32.mrb[0].mxu0
  %v514 = vadd.f32 %v92, %v513
  %v515 = vpop.f32.mrb[0].mxu0
  %v516 = vpop.f32.mrb[0].mxu0
  %v517 = vadd.f32 %v92, %v516
  %v518 = vpop.f32.mrb[0].mxu0
  %519 = vmatprep.mubr.bf16.mxu0 0
  %520 = vmatmul.mubr.bf16.gmra.mrb[0].mxu0 %v322
  %v521 = vpop.f32.mrb[0].mxu0
  %v522 = vadd.f32 %v92, %v521
  %v523 = vpop.f32.mrb[0].mxu0
  %v524 = vpop.f32.mrb[0].mxu0
  %v525 = vadd.f32 %v92, %v524
  %v526 = vpop.f32.mrb[0].mxu0
  %527 = vmatprep.mubr.bf16.mxu0 0
  %528 = vmatmul.mubr.bf16.gmra.mrb[0].mxu0 %v325
  %v529 = vpop.f32.mrb[0].mxu0
  %v530 = vadd.f32 %v92, %v529
  %v531 = vpop.f32.mrb[0].mxu0
  %v532 = vpop.f32.mrb[0].mxu0
  %v533 = vadd.f32 %v92, %v532
  %v534 = vpop.f32.mrb[0].mxu0
  %535 = vmatprep.mubr.bf16.mxu0 0
  %536 = vmatmul.mubr.bf16.gmra.mrb[0].mxu0 %v328
  %v537 = vpop.f32.mrb[0].mxu0
  %v538 = vadd.f32 %v92, %v537
  %v539 = vpop.f32.mrb[0].mxu0
  %v540 = vpop.f32.mrb[0].mxu0
  %v541 = vadd.f32 %v92, %v540
  %v542 = vpop.f32.mrb[0].mxu0
  %543 = vmatprep.mubr.bf16.mxu0 0
  %544 = vmatmul.mubr.bf16.gmra.mrb[0].mxu0 %v331
  %v545 = vpop.f32.mrb[0].mxu0
  %v546 = vadd.f32 %v92, %v545
  %v547 = vpop.f32.mrb[0].mxu0
  %v548 = vpop.f32.mrb[0].mxu0
  %v549 = vadd.f32 %v92, %v548
  %v550 = vpop.f32.mrb[0].mxu0
  %551 = vmatprep.mubr.bf16.mxu0 0
  %552 = vmatmul.mubr.bf16.gmra.mrb[0].mxu0 %v334
  %v553 = vpop.f32.mrb[0].mxu0
  %v554 = vadd.f32 %v92, %v553
  %v555 = vpop.f32.mrb[0].mxu0
  %v556 = vpop.f32.mrb[0].mxu0
  %v557 = vadd.f32 %v92, %v556
  %v558 = vpop.f32.mrb[0].mxu0
  %559 = vmatprep.mubr.bf16.mxu0 0
  %560 = vmatmul.mubr.bf16.gmra.mrb[0].mxu0 %v337
  %v561 = vpop.f32.mrb[0].mxu0
  %v562 = vadd.f32 %v92, %v561
  %v563 = vpop.f32.mrb[0].mxu0
  %v564 = vpop.f32.mrb[0].mxu0
  %v565 = vadd.f32 %v92, %v564
  %v566 = vpop.f32.mrb[0].mxu0
  %567 = vmatprep.mubr.bf16.mxu0 0
  %568 = vmatmul.mubr.bf16.gmra.mrb[0].mxu0 %v340
  %v569 = vpop.f32.mrb[0].mxu0
  %v570 = vadd.f32 %v92, %v569
  %v571 = vpop.f32.mrb[0].mxu0
  %v572 = vpop.f32.mrb[0].mxu0
  %v573 = vadd.f32 %v92, %v572
  %v574 = vpop.f32.mrb[0].mxu0
  %575 = vmatprep.mubr.bf16.mxu0 0
  %576 = vmatmul.mubr.bf16.gmra.mrb[0].mxu0 %v343
  %v577 = vpop.f32.mrb[0].mxu0
  %v578 = vadd.f32 %v92, %v577
  %v579 = vpop.f32.mrb[0].mxu0
  %v580 = vpop.f32.mrb[0].mxu0
  %v581 = vadd.f32 %v92, %v580
  %v582 = vpop.f32.mrb[0].mxu0
  %583 = vmatprep.mubr.bf16.mxu0 0
  %584 = vmatmul.mubr.bf16.gmra.mrb[0].mxu0 %v346
  %v585 = vpop.f32.mrb[0].mxu0
  %v586 = vadd.f32 %v92, %v585
  %v587 = vpop.f32.mrb[0].mxu0
  %v588 = vpop.f32.mrb[0].mxu0
  %v589 = vadd.f32 %v92, %v588
  %v590 = vpop.f32.mrb[0].mxu0
  %591 = vmatprep.mubr.bf16.mxu0 0
  %592 = vmatmul.mubr.bf16.gmra.mrb[0].mxu0 %v349
  %v593 = vpop.f32.mrb[0].mxu0
  %v594 = vadd.f32 %v92, %v593
  %v595 = vpop.f32.mrb[0].mxu0
  %v596 = vpop.f32.mrb[0].mxu0
  %v597 = vadd.f32 %v92, %v596
  %v598 = vpop.f32.mrb[0].mxu0
  %599 = vmatprep.mubr.bf16.mxu0 0
  %600 = vmatmul.mubr.bf16.gmra.mrb[0].mxu0 %v352
  %v601 = vpop.f32.mrb[0].mxu0
  %v602 = vadd.f32 %v92, %v601
  %v603 = vpop.f32.mrb[0].mxu0
  %v604 = vpop.f32.mrb[0].mxu0
  %v605 = vadd.f32 %v92, %v604
  %v606 = vpop.f32.mrb[0].mxu0
  %607 = vmatprep.mubr.bf16.mxu0 0
  %608 = vmatmul.mubr.bf16.gmra.mrb[0].mxu0 %v355
  %v609 = vpop.f32.mrb[0].mxu0
  %v610 = vadd.f32 %v92, %v609
  %v611 = vpop.f32.mrb[0].mxu0
  %v612 = vpop.f32.mrb[0].mxu0
  %v613 = vadd.f32 %v92, %v612
  %v614 = vpop.f32.mrb[0].mxu0
  %615 = vmatprep.mubr.bf16.mxu0 0
  %616 = vmatmul.mubr.bf16.gmra.mrb[0].mxu0 %v358
  %v617 = vpop.f32.mrb[0].mxu0
  %v618 = vadd.f32 %v92, %v617
  %v619 = vpop.f32.mrb[0].mxu0
  %v620 = vpop.f32.mrb[0].mxu0
  %v621 = vadd.f32 %v92, %v620
  %v622 = vpop.f32.mrb[0].mxu0
  %623 = vmatprep.mubr.bf16.mxu0 0
  %624 = vmatmul.mubr.bf16.gmra.mrb[0].mxu0 %v361
  %v625 = vpop.f32.mrb[0].mxu0
  %v626 = vadd.f32 %v92, %v625
  %v627 = vpop.f32.mrb[0].mxu0
  %v628 = vpop.f32.mrb[0].mxu0
  %v629 = vadd.f32 %v92, %v628
  %v630 = vpop.f32.mrb[0].mxu0
  %631 = vmatprep.mubr.bf16.mxu0 0
  %632 = vmatmul.mubr.bf16.gmra.mrb[0].mxu0 %v364
  %v633 = vpop.f32.mrb[0].mxu0
  %v634 = vadd.f32 %v92, %v633
  %v635 = vpop.f32.mrb[0].mxu0
  %v636 = vpop.f32.mrb[0].mxu0
  %v637 = vadd.f32 %v92, %v636
  %v638 = vpop.f32.mrb[0].mxu0
  %639 = vmatprep.mubr.bf16.mxu0 0
  %640 = vmatmul.mubr.bf16.gmra.mrb[0].mxu0 %v367
  %v641 = vpop.f32.mrb[0].mxu0
  %v642 = vadd.f32 %v92, %v641
  %v643 = vpop.f32.mrb[0].mxu0
  %v644 = vpop.f32.mrb[0].mxu0
  %v645 = vadd.f32 %v92, %v644
  %v646 = vpop.f32.mrb[0].mxu0
  %647 = vmatprep.mubr.bf16.mxu0 0
  %648 = vmatmul.mubr.bf16.gmra.mrb[0].mxu0 %v370
  %v649 = vpop.f32.mrb[0].mxu0
  %v650 = vadd.f32 %v92, %v649
  %v651 = vpop.f32.mrb[0].mxu0
  %v652 = vpop.f32.mrb[0].mxu0
  %v653 = vadd.f32 %v92, %v652
  %v654 = vpop.f32.mrb[0].mxu0
  %655 = vmatprep.mubr.bf16.mxu0 0
  %656 = vmatmul.mubr.bf16.gmra.mrb[0].mxu0 %v373
  %v657 = vpop.f32.mrb[0].mxu0
  %v658 = vadd.f32 %v92, %v657
  %v659 = vpop.f32.mrb[0].mxu0
  %v660 = vpop.f32.mrb[0].mxu0
  %v661 = vadd.f32 %v92, %v660
  %v662 = vpop.f32.mrb[0].mxu0
  %663 = vdwg.mxu0
  %v664 = vmax.f32 %v410, 0.0
  %v665 = vmax.f32 %v413, 0.0
  %v666 = vmax.f32 %v418, 0.0
  %v667 = vmax.f32 %v421, 0.0
  %v668 = vmax.f32 %v426, 0.0
  %v669 = vmax.f32 %v429, 0.0
  %v670 = vmax.f32 %v434, 0.0
  %v671 = vmax.f32 %v437, 0.0
  %v672 = vmax.f32 %v442, 0.0
  %v673 = vmax.f32 %v445, 0.0
  %v674 = vmax.f32 %v450, 0.0
  %v675 = vmax.f32 %v453, 0.0
  %v676 = vmax.f32 %v458, 0.0
  %v677 = vmax.f32 %v461, 0.0
  %v678 = vmax.f32 %v466, 0.0
  %v679 = vmax.f32 %v469, 0.0
  %v680 = vmax.f32 %v474, 0.0
  %v681 = vmax.f32 %v477, 0.0
  %v682 = vmax.f32 %v482, 0.0
  %v683 = vmax.f32 %v485, 0.0
  %v684 = vmax.f32 %v490, 0.0
  %v685 = vmax.f32 %v493, 0.0
  %v686 = vmax.f32 %v498, 0.0
  %v687 = vmax.f32 %v501, 0.0
  %v688 = vmax.f32 %v506, 0.0
  %v689 = vmax.f32 %v509, 0.0
  %v690 = vmax.f32 %v514, 0.0
  %v691 = vmax.f32 %v517, 0.0
  %v692 = vmax.f32 %v522, 0.0
  %v693 = vmax.f32 %v525, 0.0
  %v694 = vmax.f32 %v530, 0.0
  %v695 = vmax.f32 %v533, 0.0
  %v696 = vmax.f32 %v538, 0.0
  %v697 = vmax.f32 %v541, 0.0
  %v698 = vmax.f32 %v546, 0.0
  %v699 = vmax.f32 %v549, 0.0
  %v700 = vmax.f32 %v554, 0.0
  %v701 = vmax.f32 %v557, 0.0
  %v702 = vmax.f32 %v562, 0.0
  %v703 = vmax.f32 %v565, 0.0
  %v704 = vmax.f32 %v570, 0.0
  %v705 = vmax.f32 %v573, 0.0
  %v706 = vmax.f32 %v578, 0.0
  %v707 = vmax.f32 %v581, 0.0
  %v708 = vmax.f32 %v586, 0.0
  %v709 = vmax.f32 %v589, 0.0
  %v710 = vmax.f32 %v594, 0.0
  %v711 = vmax.f32 %v597, 0.0
  %v712 = vmax.f32 %v602, 0.0
  %v713 = vmax.f32 %v605, 0.0
  %v714 = vmax.f32 %v610, 0.0
  %v715 = vmax.f32 %v613, 0.0
  %v716 = vmax.f32 %v618, 0.0
  %v717 = vmax.f32 %v621, 0.0
  %v718 = vmax.f32 %v626, 0.0
  %v719 = vmax.f32 %v629, 0.0
  %v720 = vmax.f32 %v634, 0.0
  %v721 = vmax.f32 %v637, 0.0
  %v722 = vmax.f32 %v642, 0.0
  %v723 = vmax.f32 %v645, 0.0
  %v724 = vmax.f32 %v650, 0.0
  %v725 = vmax.f32 %v653, 0.0
  %v726 = vmax.f32 %v658, 0.0
  %v727 = vmax.f32 %v661, 0.0
  %v728 = vpack.c.bf16 %v665, %v664
  %v729 = vpack.c.bf16 %v667, %v666
  %v730 = vpack.c.bf16 %v669, %v668
  %v731 = vpack.c.bf16 %v671, %v670
  %v732 = vpack.c.bf16 %v673, %v672
  %v733 = vpack.c.bf16 %v675, %v674
  %v734 = vpack.c.bf16 %v677, %v676
  %v735 = vpack.c.bf16 %v679, %v678
  %v736 = vpack.c.bf16 %v681, %v680
  %v737 = vpack.c.bf16 %v683, %v682
  %v738 = vpack.c.bf16 %v685, %v684
  %v739 = vpack.c.bf16 %v687, %v686
  %v740 = vpack.c.bf16 %v689, %v688
  %v741 = vpack.c.bf16 %v691, %v690
  %v742 = vpack.c.bf16 %v693, %v692
  %v743 = vpack.c.bf16 %v695, %v694
  %v744 = vpack.c.bf16 %v697, %v696
  %v745 = vpack.c.bf16 %v699, %v698
  %v746 = vpack.c.bf16 %v701, %v700
  %v747 = vpack.c.bf16 %v703, %v702
  %v748 = vpack.c.bf16 %v705, %v704
  %v749 = vpack.c.bf16 %v707, %v706
  %v750 = vpack.c.bf16 %v709, %v708
  %v751 = vpack.c.bf16 %v711, %v710
  %v752 = vpack.c.bf16 %v713, %v712
  %v753 = vpack.c.bf16 %v715, %v714
  %v754 = vpack.c.bf16 %v717, %v716
  %v755 = vpack.c.bf16 %v719, %v718
  %v756 = vpack.c.bf16 %v721, %v720
  %v757 = vpack.c.bf16 %v723, %v722
  %v758 = vpack.c.bf16 %v725, %v724
  %v759 = vpack.c.bf16 %v727, %v726
  %v792 = vunpack.c.l.b16 %v728
  %v793 = vunpack.c.h.b16 %v728
  %v794 = vunpack.c.l.b16 %v729
  %v795 = vunpack.c.h.b16 %v729
  %v796 = vunpack.c.l.b16 %v730
  %v797 = vunpack.c.h.b16 %v730
  %v798 = vunpack.c.l.b16 %v731
  %v799 = vunpack.c.h.b16 %v731
  %v800 = vunpack.c.l.b16 %v732
  %v801 = vunpack.c.h.b16 %v732
  %v802 = vunpack.c.l.b16 %v733
  %v803 = vunpack.c.h.b16 %v733
  %v804 = vunpack.c.l.b16 %v734
  %v805 = vunpack.c.h.b16 %v734
  %v806 = vunpack.c.l.b16 %v735
  %v807 = vunpack.c.h.b16 %v735
  %v808 = vunpack.c.l.b16 %v736
  %v809 = vunpack.c.h.b16 %v736
  %v810 = vunpack.c.l.b16 %v737
  %v811 = vunpack.c.h.b16 %v737
  %v812 = vunpack.c.l.b16 %v738
  %v813 = vunpack.c.h.b16 %v738
  %v814 = vunpack.c.l.b16 %v739
  %v815 = vunpack.c.h.b16 %v739
  %v816 = vunpack.c.l.b16 %v740
  %v817 = vunpack.c.h.b16 %v740
  %v818 = vunpack.c.l.b16 %v741
  %v819 = vunpack.c.h.b16 %v741
  %v820 = vunpack.c.l.b16 %v742
  %v821 = vunpack.c.h.b16 %v742
  %v822 = vunpack.c.l.b16 %v743
  %v823 = vunpack.c.h.b16 %v743
  %v824 = vunpack.c.l.b16 %v744
  %v825 = vunpack.c.h.b16 %v744
  %v826 = vunpack.c.l.b16 %v745
  %v827 = vunpack.c.h.b16 %v745
  %v828 = vunpack.c.l.b16 %v746
  %v829 = vunpack.c.h.b16 %v746
  %v830 = vunpack.c.l.b16 %v747
  %v831 = vunpack.c.h.b16 %v747
  %v832 = vunpack.c.l.b16 %v748
  %v833 = vunpack.c.h.b16 %v748
  %v834 = vunpack.c.l.b16 %v749
  %v835 = vunpack.c.h.b16 %v749
  %v836 = vunpack.c.l.b16 %v750
  %v837 = vunpack.c.h.b16 %v750
  %v838 = vunpack.c.l.b16 %v751
  %v839 = vunpack.c.h.b16 %v751
  %v840 = vunpack.c.l.b16 %v752
  %v841 = vunpack.c.h.b16 %v752
  %v842 = vunpack.c.l.b16 %v753
  %v843 = vunpack.c.h.b16 %v753
  %v844 = vunpack.c.l.b16 %v754
  %v845 = vunpack.c.h.b16 %v754
  %v846 = vunpack.c.l.b16 %v755
  %v847 = vunpack.c.h.b16 %v755
  %v848 = vunpack.c.l.b16 %v756
  %v849 = vunpack.c.h.b16 %v756
  %v850 = vunpack.c.l.b16 %v757
  %v851 = vunpack.c.h.b16 %v757
  %v852 = vunpack.c.l.b16 %v758
  %v853 = vunpack.c.h.b16 %v758
  %v854 = vunpack.c.l.b16 %v759
  %v855 = vunpack.c.h.b16 %v759
  %v856 = vpack.c.b16 %v792, %v792
  %v857 = vpack.c.b16 %v793, %v793
  %v858 = vpack.c.b16 %v794, %v794
  %v859 = vpack.c.b16 %v795, %v795
  %v860 = vpack.c.b16 %v796, %v796
  %v861 = vpack.c.b16 %v797, %v797
  %v862 = vpack.c.b16 %v798, %v798
  %v863 = vpack.c.b16 %v799, %v799
  %v864 = vpack.c.b16 %v800, %v800
  %v865 = vpack.c.b16 %v801, %v801
  %v866 = vpack.c.b16 %v802, %v802
  %v867 = vpack.c.b16 %v803, %v803
  %v868 = vpack.c.b16 %v804, %v804
  %v869 = vpack.c.b16 %v805, %v805
  %v870 = vpack.c.b16 %v806, %v806
  %v871 = vpack.c.b16 %v807, %v807
  %v872 = vpack.c.b16 %v808, %v808
  %v873 = vpack.c.b16 %v809, %v809
  %v874 = vpack.c.b16 %v810, %v810
  %v875 = vpack.c.b16 %v811, %v811
  %v876 = vpack.c.b16 %v812, %v812
  %v877 = vpack.c.b16 %v813, %v813
  %v878 = vpack.c.b16 %v814, %v814
  %v879 = vpack.c.b16 %v815, %v815
  %v880 = vpack.c.b16 %v816, %v816
  %v881 = vpack.c.b16 %v817, %v817
  %v882 = vpack.c.b16 %v818, %v818
  %v883 = vpack.c.b16 %v819, %v819
  %v884 = vpack.c.b16 %v820, %v820
  %v885 = vpack.c.b16 %v821, %v821
  %v886 = vpack.c.b16 %v822, %v822
  %v887 = vpack.c.b16 %v823, %v823
  %v888 = vpack.c.b16 %v824, %v824
  %v889 = vpack.c.b16 %v825, %v825
  %v890 = vpack.c.b16 %v826, %v826
  %v891 = vpack.c.b16 %v827, %v827
  %v892 = vpack.c.b16 %v828, %v828
  %v893 = vpack.c.b16 %v829, %v829
  %v894 = vpack.c.b16 %v830, %v830
  %v895 = vpack.c.b16 %v831, %v831
  %v896 = vpack.c.b16 %v832, %v832
  %v897 = vpack.c.b16 %v833, %v833
  %v898 = vpack.c.b16 %v834, %v834
  %v899 = vpack.c.b16 %v835, %v835
  %v900 = vpack.c.b16 %v836, %v836
  %v901 = vpack.c.b16 %v837, %v837
  %v902 = vpack.c.b16 %v838, %v838
  %v903 = vpack.c.b16 %v839, %v839
  %v904 = vpack.c.b16 %v840, %v840
  %v905 = vpack.c.b16 %v841, %v841
  %v906 = vpack.c.b16 %v842, %v842
  %v907 = vpack.c.b16 %v843, %v843
  %v908 = vpack.c.b16 %v844, %v844
  %v909 = vpack.c.b16 %v845, %v845
  %v910 = vpack.c.b16 %v846, %v846
  %v911 = vpack.c.b16 %v847, %v847
  %v912 = vpack.c.b16 %v848, %v848
  %v913 = vpack.c.b16 %v849, %v849
  %v914 = vpack.c.b16 %v850, %v850
  %v915 = vpack.c.b16 %v851, %v851
  %v916 = vpack.c.b16 %v852, %v852
  %v917 = vpack.c.b16 %v853, %v853
  %v918 = vpack.c.b16 %v854, %v854
  %v919 = vpack.c.b16 %v855, %v855
  %vm984 = vcmask 125952
  %985 = vst.msk [vmem:[%s3] sm:$0xf] %vm984, %v856
  %986 = vst.msk [vmem:[%s3 + $0x4] sm:$0xf] %vm984, %v857
  %987 = vst.msk [vmem:[%s3 + $0x8] sm:$0xf] %vm984, %v858
  %988 = vst.msk [vmem:[%s3 + $0xc] sm:$0xf] %vm984, %v859
  %989 = vst.msk [vmem:[%s3 + $0x10] sm:$0xf] %vm984, %v860
  %990 = vst.msk [vmem:[%s3 + $0x14] sm:$0xf] %vm984, %v861
  %991 = vst.msk [vmem:[%s3 + $0x18] sm:$0xf] %vm984, %v862
  %992 = vst.msk [vmem:[%s3 + $0x1c] sm:$0xf] %vm984, %v863
  %993 = vst.msk [vmem:[%s3 + $0x20] sm:$0xf] %vm984, %v864
  %994 = vst.msk [vmem:[%s3 + $0x24] sm:$0xf] %vm984, %v865
  %995 = vst.msk [vmem:[%s3 + $0x28] sm:$0xf] %vm984, %v866
  %996 = vst.msk [vmem:[%s3 + $0x2c] sm:$0xf] %vm984, %v867
  %997 = vst.msk [vmem:[%s3 + $0x30] sm:$0xf] %vm984, %v868
  %998 = vst.msk [vmem:[%s3 + $0x34] sm:$0xf] %vm984, %v869
  %999 = vst.msk [vmem:[%s3 + $0x38] sm:$0xf] %vm984, %v870
  %1000 = vst.msk [vmem:[%s3 + $0x3c] sm:$0xf] %vm984, %v871
  %1001 = vst.msk [vmem:[%s3 + $0x40] sm:$0xf] %vm984, %v872
  %1002 = vst.msk [vmem:[%s3 + $0x44] sm:$0xf] %vm984, %v873
  %1003 = vst.msk [vmem:[%s3 + $0x48] sm:$0xf] %vm984, %v874
  %1004 = vst.msk [vmem:[%s3 + $0x4c] sm:$0xf] %vm984, %v875
  %1005 = vst.msk [vmem:[%s3 + $0x50] sm:$0xf] %vm984, %v876
  %1006 = vst.msk [vmem:[%s3 + $0x54] sm:$0xf] %vm984, %v877
  %1007 = vst.msk [vmem:[%s3 + $0x58] sm:$0xf] %vm984, %v878
  %1008 = vst.msk [vmem:[%s3 + $0x5c] sm:$0xf] %vm984, %v879
  %1009 = vst.msk [vmem:[%s3 + $0x60] sm:$0xf] %vm984, %v880
  %1010 = vst.msk [vmem:[%s3 + $0x64] sm:$0xf] %vm984, %v881
  %1011 = vst.msk [vmem:[%s3 + $0x68] sm:$0xf] %vm984, %v882
  %1012 = vst.msk [vmem:[%s3 + $0x6c] sm:$0xf] %vm984, %v883
  %1013 = vst.msk [vmem:[%s3 + $0x70] sm:$0xf] %vm984, %v884
  %1014 = vst.msk [vmem:[%s3 + $0x74] sm:$0xf] %vm984, %v885
  %1015 = vst.msk [vmem:[%s3 + $0x78] sm:$0xf] %vm984, %v886
  %1016 = vst.msk [vmem:[%s3 + $0x7c] sm:$0xf] %vm984, %v887
  %1017 = vst.msk [vmem:[%s3 + $0x80] sm:$0xf] %vm984, %v888
  %1018 = vst.msk [vmem:[%s3 + $0x84] sm:$0xf] %vm984, %v889
  %1019 = vst.msk [vmem:[%s3 + $0x88] sm:$0xf] %vm984, %v890
  %1020 = vst.msk [vmem:[%s3 + $0x8c] sm:$0xf] %vm984, %v891
  %1021 = vst.msk [vmem:[%s3 + $0x90] sm:$0xf] %vm984, %v892
  %1022 = vst.msk [vmem:[%s3 + $0x94] sm:$0xf] %vm984, %v893
  %1023 = vst.msk [vmem:[%s3 + $0x98] sm:$0xf] %vm984, %v894
  %1024 = vst.msk [vmem:[%s3 + $0x9c] sm:$0xf] %vm984, %v895
  %1025 = vst.msk [vmem:[%s3 + $0xa0] sm:$0xf] %vm984, %v896
  %1026 = vst.msk [vmem:[%s3 + $0xa4] sm:$0xf] %vm984, %v897
  %1027 = vst.msk [vmem:[%s3 + $0xa8] sm:$0xf] %vm984, %v898
  %1028 = vst.msk [vmem:[%s3 + $0xac] sm:$0xf] %vm984, %v899
  %1029 = vst.msk [vmem:[%s3 + $0xb0] sm:$0xf] %vm984, %v900
  %1030 = vst.msk [vmem:[%s3 + $0xb4] sm:$0xf] %vm984, %v901
  %1031 = vst.msk [vmem:[%s3 + $0xb8] sm:$0xf] %vm984, %v902
  %1032 = vst.msk [vmem:[%s3 + $0xbc] sm:$0xf] %vm984, %v903
  %1033 = vst.msk [vmem:[%s3 + $0xc0] sm:$0xf] %vm984, %v904
  %1034 = vst.msk [vmem:[%s3 + $0xc4] sm:$0xf] %vm984, %v905
  %1035 = vst.msk [vmem:[%s3 + $0xc8] sm:$0xf] %vm984, %v906
  %1036 = vst.msk [vmem:[%s3 + $0xcc] sm:$0xf] %vm984, %v907
  %1037 = vst.msk [vmem:[%s3 + $0xd0] sm:$0xf] %vm984, %v908
  %1038 = vst.msk [vmem:[%s3 + $0xd4] sm:$0xf] %vm984, %v909
  %1039 = vst.msk [vmem:[%s3 + $0xd8] sm:$0xf] %vm984, %v910
  %1040 = vst.msk [vmem:[%s3 + $0xdc] sm:$0xf] %vm984, %v911
  %1041 = vst.msk [vmem:[%s3 + $0xe0] sm:$0xf] %vm984, %v912
  %1042 = vst.msk [vmem:[%s3 + $0xe4] sm:$0xf] %vm984, %v913
  %1043 = vst.msk [vmem:[%s3 + $0xe8] sm:$0xf] %vm984, %v914
  %1044 = vst.msk [vmem:[%s3 + $0xec] sm:$0xf] %vm984, %v915
  %1045 = vst.msk [vmem:[%s3 + $0xf0] sm:$0xf] %vm984, %v916
  %1046 = vst.msk [vmem:[%s3 + $0xf4] sm:$0xf] %vm984, %v917
  %1047 = vst.msk [vmem:[%s3 + $0xf8] sm:$0xf] %vm984, %v918
  %1048 = vst.msk [vmem:[%s3 + $0xfc] sm:$0xf] %vm984, %v919
  // Predicated region
  $region14: #{bottleneck_forward.4} parent=0 // pred_check
    _
  $region15: #{bottleneck_forward.4} parent=0 // pred_check_branch
    %1050 = sbr.rel (0) target = $region17
  $region16: #{bottleneck_forward.4} parent=0 // pred_region
    _
  $region17: #{bottleneck_forward.4} parent=0 // pred_fallthru
    _
  // Predicated region
  $region18: #{bottleneck_forward.4} parent=0 // pred_check
    _
  $region19: #{bottleneck_forward.4} parent=0 // pred_check_branch
    %1052 = sbr.rel (0) target = $region21
  $region20: #{bottleneck_forward.4} parent=0 // pred_region
    _
  $region21: #{bottleneck_forward.4} parent=0 // pred_fallthru
    _

// kernel: bottleneck_forward.5
$region0: #{bottleneck_forward.5}
  #allocation0 [shape = 'u32[]', space=smem, size = 0x4, offset = 0x4, fixed_abs, tag = 'smem constant byte address 0x4 - core index']
  #allocation1 [shape = 'u32[144,128]{1,0:T(1,128)}', space=vmem, size = 0x12000, scoped, tag = 'internal scratch']
  %s0 = inlined_call_operand.vmem [shape: bf16[2,18,18,16], index: 0, kind: input, shape index: {}]
  %s1 = inlined_call_operand.vmem [shape: bf16[1,3,48,16], index: 1, kind: input, shape index: {}]
  %s2 = inlined_call_operand.vmem [shape: f32[1,16], index: 2, kind: input, shape index: {}]
  %s3 = inlined_call_operand.vmem [shape: bf16[2,16,16,16], index: 3, kind: output, shape index: {}]
  %s4 = sld [smem:[#allocation0]]
  $region45: #{bottleneck_forward.5} parent=0
    _
  %s6 = ssub.s32 1, %s4
  %s7 = scalar_select 0, %s6, %s4
  loop: start=0, step=1, limit=6
  $region2: #{bottleneck_forward.5} parent=0 // loop_pre_header
    _
  $region3: #{bottleneck_forward.5} parent=0 // loop_header
    %s9 = sphi 0, %s13
    %p10 = scmp.ge.s32.totalorder %s9, 6
    %s16 = sphi 0, %s28
    %s17 = sphi 0, %s24
    %s18 = sphi 0, %s16
    %s19 = sphi 0, %s17
    %s20 = sphi 0, %s18
    %s21 = sphi 0, %s19
    %s31 = sphi 0, %s33
    %s34 = sphi 0, %s31
    %s35 = sphi 0, %s34
    %s51 = sphi 0, %s35
    %s55 = sphi 0, %s55
    %s57 = sphi 0, %s55
    %s58 = sphi 0, %s57
    %s72 = sphi 0, %s58
    %s76 = sphi 0, %s76
    %s78 = sphi 0, %s76
    %s79 = sphi 0, %s78
    %s93 = sphi 0, %s79
    %s101 = sphi 0, %s103
    %s104 = sphi 0, %s101
    %s105 = sphi 0, %s104
    %s121 = sphi 0, %s105
  $region4: #{bottleneck_forward.5} parent=0 // loop_header_branch
    %12 = sbr.rel (%p10) target = $region8
  $region5: #{bottleneck_forward.5} parent=0 // loop_body
    %s14 = ssub.s32 %s9, 1
    %s15 = ssub.s32 %s9, 2
    %s22 = sadd.s32 1, %s17
    %p23 = scmp.ge.s32.totalorder %s22, 2
    %s24 = scalar_select %p23, 0, %s22
    %s25 = sadd.s32 1, %s16
    %s26 = scalar_select %p23, %s25, %s16
    %p27 = scmp.ge.s32.totalorder %s26, 2
    %s28 = scalar_select %p27, 0, %s26
    %s29 = ssub.s32 %s16, %s28
    %p30 = scmp.eq.s32.totalorder %s29, 0
    %s32 = sadd.s32 %s31, 1
    %s33 = scalar_select %p30, %s31, %s32
    %p36 = pneg %p30
    %p37 = scmp.eq.s32.totalorder %s9, 3
    %p38 = por %p36, %p37
    %p39 = scmp.ne.s32.totalorder %s31, %s34
    %p40 = scmp.eq.s32.totalorder %s9, 0
    %p41 = por %p39, %p40
    %p42 = scmp.ne.s32.totalorder %s31, %s34
    %p43 = scmp.eq.s32.totalorder %s14, 3
    %p44 = por %p42, %p43
    %p45 = scmp.ne.s32.totalorder %s34, %s35
    %p46 = scmp.eq.s32.totalorder %s14, 0
    %p47 = por %p45, %p46
    %p48 = scmp.ne.s32.totalorder %s34, %s35
    %p49 = scmp.eq.s32.totalorder %s15, 3
    %p50 = por %p48, %p49
    %p52 = scmp.ne.s32.totalorder %s35, %s51
    %p53 = scmp.eq.s32.totalorder %s15, 0
    %p54 = por %p52, %p53
    %s56 = sadd.s32 %s55, 1
    %p59 = scmp.eq.s32.totalorder %s9, 3
    %p60 = scmp.ne.s32.totalorder %s55, %s57
    %p61 = scmp.eq.s32.totalorder %s9, 0
    %p62 = por %p60, %p61
    %p63 = scmp.ne.s32.totalorder %s55, %s57
    %p64 = scmp.eq.s32.totalorder %s14, 3
    %p65 = por %p63, %p64
    %p66 = scmp.ne.s32.totalorder %s57, %s58
    %p67 = scmp.eq.s32.totalorder %s14, 0
    %p68 = por %p66, %p67
    %p69 = scmp.ne.s32.totalorder %s57, %s58
    %p70 = scmp.eq.s32.totalorder %s15, 3
    %p71 = por %p69, %p70
    %p73 = scmp.ne.s32.totalorder %s58, %s72
    %p74 = scmp.eq.s32.totalorder %s15, 0
    %p75 = por %p73, %p74
    %s77 = sadd.s32 %s76, 1
    %p80 = scmp.eq.s32.totalorder %s9, 3
    %p81 = scmp.ne.s32.totalorder %s76, %s78
    %p82 = scmp.eq.s32.totalorder %s9, 0
    %p83 = por %p81, %p82
    %p84 = scmp.ne.s32.totalorder %s76, %s78
    %p85 = scmp.eq.s32.totalorder %s14, 3
    %p86 = por %p84, %p85
    %p87 = scmp.ne.s32.totalorder %s78, %s79
    %p88 = scmp.eq.s32.totalorder %s14, 0
    %p89 = por %p87, %p88
    %p90 = scmp.ne.s32.totalorder %s78, %s79
    %p91 = scmp.eq.s32.totalorder %s15, 3
    %p92 = por %p90, %p91
    %p94 = scmp.ne.s32.totalorder %s79, %s93
    %p95 = scmp.eq.s32.totalorder %s15, 0
    %p96 = por %p94, %p95
    %s97 = ssub.s32 %s16, %s28
    %s98 = ssub.s32 %s17, %s24
    %s99 = sor.u32 %s97, %s98
    %p100 = scmp.eq.s32.totalorder %s99, 0
    %s102 = sadd.s32 %s101, 1
    %s103 = scalar_select %p100, %s101, %s102
    %p106 = pneg %p100
    %p107 = scmp.eq.s32.totalorder %s9, 3
    %p108 = por %p106, %p107
    %p109 = scmp.ne.s32.totalorder %s101, %s104
    %p110 = scmp.eq.s32.totalorder %s9, 0
    %p111 = por %p109, %p110
    %p112 = scmp.ne.s32.totalorder %s101, %s104
    %p113 = scmp.eq.s32.totalorder %s14, 3
    %p114 = por %p112, %p113
    %p115 = scmp.ne.s32.totalorder %s104, %s105
    %p116 = scmp.eq.s32.totalorder %s14, 0
    %p117 = por %p115, %p116
    %p118 = scmp.ne.s32.totalorder %s104, %s105
    %p119 = scmp.eq.s32.totalorder %s15, 3
    %p120 = por %p118, %p119
    %p122 = scmp.ne.s32.totalorder %s105, %s121
    %p123 = scmp.eq.s32.totalorder %s15, 0
    %p124 = por %p122, %p123
    %p125 = scmp.le.s32.totalorder 1, %s9
    %p126 = scmp.lt.s32.totalorder %s9, 5
    %p127 = pnand %p125, %p126
    %p128 = pneg %p127
    // Predicated region
    $region9: #{bottleneck_forward.5} parent=5 // pred_check
      _
    $region10: #{bottleneck_forward.5} parent=5 // pred_check_branch
      %130 = sbr.rel (%p127) target = $region12
    $region11: #{bottleneck_forward.5} parent=5 // pred_region
      %s131 = ssub.s32 %s9, 1
      // Predicated region
      $region13: #{bottleneck_forward.5} parent=11 // pred_check
        %p132 = pneg %p68
      $region14: #{bottleneck_forward.5} parent=11 // pred_check_branch
        %134 = sbr.rel (%p132) target = $region16
      $region15: #{bottleneck_forward.5} parent=11 // pred_region
        _
      $region16: #{bottleneck_forward.5} parent=11 // pred_fallthru
        _
      // Predicated region
      $region17: #{bottleneck_forward.5} parent=11 // pred_check
        %p135 = pneg %p89
      $region18: #{bottleneck_forward.5} parent=11 // pred_check_branch
        %137 = sbr.rel (%p135) target = $region20
      $region19: #{bottleneck_forward.5} parent=11 // pred_region
        _
      $region20: #{bottleneck_forward.5} parent=11 // pred_fallthru
        _
    $region12: #{bottleneck_forward.5} parent=5 // pred_fallthru
      _
    %p138 = scmp.lt.s32.totalorder %s9, 4
    // Predicated region
    $region21: #{bottleneck_forward.5} parent=5 // pred_check
      %p139 = pneg %p138
    $region22: #{bottleneck_forward.5} parent=5 // pred_check_branch
      %141 = sbr.rel (%p139) target = $region24
    $region23: #{bottleneck_forward.5} parent=5 // pred_region
      // Predicated region
      $region25: #{bottleneck_forward.5} parent=23 // pred_check
        %p142 = pneg %p41
      $region26: #{bottleneck_forward.5} parent=23 // pred_check_branch
        %144 = sbr.rel (%p142) target = $region28
      $region27: #{bottleneck_forward.5} parent=23 // pred_region
        %p145 = scmp.lt.s32.totalorder %s16, 1
        %s146 = scalar_select %p145, %s16, 1
        %s147 = smul.addr %s146, 54
        %s148 = smul.addr %s147, 4
        %s149 = scalar_lea.vmem %s0, %s148
      $region28: #{bottleneck_forward.5} parent=23 // pred_fallthru
        _
    $region24: #{bottleneck_forward.5} parent=5 // pred_fallthru
      _
    %p150 = scmp.le.s32.totalorder 1, %s9
    %p151 = scmp.lt.s32.totalorder %s9, 5
    %p152 = pnand %p150, %p151
    %p153 = pneg %p152
    // Predicated region
    $region29: #{bottleneck_forward.5} parent=5 // pred_check
      _
    $region30: #{bottleneck_forward.5} parent=5 // pred_check_branch
      %155 = sbr.rel (%p152) target = $region32
    $region31: #{bottleneck_forward.5} parent=5 // pred_region
      %s156 = ssub.s32 %s9, 1
      %p157 = scmp.lt.s32.totalorder %s18, 1
      %s158 = scalar_select %p157, %s18, 1
      %s159 = smul.addr %s158, 54
      %s160 = smul.addr %s159, 4
      %s161 = scalar_lea.vmem %s0, %s160
      %p162 = pneg %p47
      %p163 = pneg %p44
      %p164 = pneg %p68
      %p165 = pneg %p65
      %p166 = pneg %p89
      %p167 = pneg %p86
      %p168 = pneg %p117
      %p169 = pneg %p114
      %s170 = smul.u32 8, %s19
      %p171 = scmp.lt.s32.totalorder %s18, 1
      %s172 = scalar_select %p171, %s18, 1
      %p173 = scmp.lt.s32.totalorder %s170, 15
      %s174 = scalar_select %p173, %s170, 15
      %s175 = smul.addr %s174, 2
      %s176 = smul.addr %s172, 32
      %s177 = sadd.s32 %s175, %s176
      %s178 = smul.addr %s177, 4
      %s179 = scalar_lea.vmem %s3, %s178
      %p180 = scmp.lt.s32.totalorder %s18, 1
      %s181 = scalar_select %p180, %s18, 1
      %s182 = smul.addr %s181, 54
      %s183 = smul.addr %s182, 4
      %s184 = scalar_lea.vmem %s0, %s183
      %s185 = smul.u32 8, %s19
      %p186 = scmp.lt.s32.totalorder %s18, 1
      %s187 = scalar_select %p186, %s18, 1
      %p188 = scmp.lt.s32.totalorder %s185, 15
      %s189 = scalar_select %p188, %s185, 15
      %s190 = smul.addr %s189, 2
      %s191 = smul.addr %s187, 32
      %s192 = sadd.s32 %s190, %s191
      %s193 = smul.addr %s192, 4
      %s194 = scalar_lea.vmem %s3, %s193
      %s195 = smul.u32 8, %s19
      %s197 = smul.u32 %s19, 8
      %s198 = smul.u32 %s197, 3
      %s199 = smul.addr %s198, 4
      %s200 = scalar_lea.vmem %s184, %s199
      %v201 = vld [vmem:[%s200] sm:$0xf]
      %v202 = vld [vmem:[%s200 + $0x4] sm:$0xf]
      %v203 = vld [vmem:[%s200 + $0x8] sm:$0x1]
      %v204 = vld [vmem:[%s200 + $0xc] sm:$0xf]
      %v205 = vld [vmem:[%s200 + $0x10] sm:$0xf]
      %v206 = vld [vmem:[%s200 + $0x14] sm:$0x1]
      %v207 = vld [vmem:[%s200 + $0x18] sm:$0xf]
      %v208 = vld [vmem:[%s200 + $0x1c] sm:$0xf]
      %v209 = vld [vmem:[%s200 + $0x20] sm:$0x1]
      %v210 = vld [vmem:[%s200 + $0x24] sm:$0xf]
      %v211 = vld [vmem:[%s200 + $0x28] sm:$0xf]
      %v212 = vld [vmem:[%s200 + $0x2c] sm:$0x1]
      %v213 = vld [vmem:[%s200 + $0x30] sm:$0xf]
      %v214 = vld [vmem:[%s200 + $0x34] sm:$0xf]
      %v215 = vld [vmem:[%s200 + $0x38] sm:$0x1]
      %v216 = vld [vmem:[%s200 + $0x3c] sm:$0xf]
      %v217 = vld [vmem:[%s200 + $0x40] sm:$0xf]
      %v218 = vld [vmem:[%s200 + $0x44] sm:$0x1]
      %v219 = vld [vmem:[%s200 + $0x48] sm:$0xf]
      %v220 = vld [vmem:[%s200 + $0x4c] sm:$0xf]
      %v221 = vld [vmem:[%s200 + $0x50] sm:$0x1]
      %v222 = vld [vmem:[%s200 + $0x54] sm:$0xf]
      %v223 = vld [vmem:[%s200 + $0x58] sm:$0xf]
      %v224 = vld [vmem:[%s200 + $0x5c] sm:$0x1]
      %v241 = vunpack.c.l.b16 %v201
      %v242 = vunpack.c.l.b16 %v202
      %v243 = vunpack.c.l.b16 %v204
      %v244 = vunpack.c.l.b16 %v205
      %v245 = vunpack.c.l.b16 %v207
      %v246 = vunpack.c.l.b16 %v208
      %v247 = vunpack.c.l.b16 %v210
      %v248 = vunpack.c.l.b16 %v211
      %v249 = vunpack.c.l.b16 %v213
      %v250 = vunpack.c.l.b16 %v214
      %v251 = vunpack.c.l.b16 %v216
      %v252 = vunpack.c.l.b16 %v217
      %v253 = vunpack.c.l.b16 %v219
      %v254 = vunpack.c.l.b16 %v220
      %v255 = vunpack.c.l.b16 %v222
      %v256 = vunpack.c.l.b16 %v223
      %v257 = vpack.c.b16 %v242, %v241
      %v258 = vpack.c.b16 %v244, %v243
      %v259 = vpack.c.b16 %v246, %v245
      %v260 = vpack.c.b16 %v248, %v247
      %v261 = vpack.c.b16 %v250, %v249
      %v262 = vpack.c.b16 %v252, %v251
      %v263 = vpack.c.b16 %v254, %v253
      %v264 = vpack.c.b16 %v256, %v255
      %v273 = vunpack.c.l.b16 %v203
      %v274 = vunpack.c.l.b16 %v206
      %v275 = vunpack.c.l.b16 %v209
      %v276 = vunpack.c.l.b16 %v212
      %v277 = vunpack.c.l.b16 %v215
      %v278 = vunpack.c.l.b16 %v218
      %v279 = vunpack.c.l.b16 %v221
      %v280 = vunpack.c.l.b16 %v224
      %v281 = vpack.c.b16 %v273, %v273
      %v282 = vpack.c.b16 %v274, %v274
      %v283 = vpack.c.b16 %v275, %v275
      %v284 = vpack.c.b16 %v276, %v276
      %v285 = vpack.c.b16 %v277, %v277
      %v286 = vpack.c.b16 %v278, %v278
      %v287 = vpack.c.b16 %v279, %v279
      %v288 = vpack.c.b16 %v280, %v280
      %vm289 = vsmask.f32 7424
      %v291 = vshrl.u32 %v257, 16
      %v293 = vshll.u32 %v257, 16
      %v295 = vrot.slane %v293, 1
      %v296 = vor.u32 %v291, %v295
      %v298 = vshll.u32 %v281, 16
      %v300 = vrot.slane %v298, 1
      %v301 = vsel %vm289, %v296, %v300
      %v303 = vshrl.u32 %v258, 16
      %v305 = vshll.u32 %v258, 16
      %v307 = vrot.slane %v305, 1
      %v308 = vor.u32 %v303, %v307
      %v310 = vshll.u32 %v282, 16
      %v312 = vrot.slane %v310, 1
      %v313 = vsel %vm289, %v308, %v312
      %v315 = vshrl.u32 %v259, 16
      %v317 = vshll.u32 %v259, 16
      %v319 = vrot.slane %v317, 1
      %v320 = vor.u32 %v315, %v319
      %v322 = vshll.u32 %v283, 16
      %v324 = vrot.slane %v322, 1
      %v325 = vsel %vm289, %v320, %v324
      %v327 = vshrl.u32 %v260, 16
      %v329 = vshll.u32 %v260, 16
      %v331 = vrot.slane %v329, 1
      %v332 = vor.u32 %v327, %v331
      %v334 = vshll.u32 %v284, 16
      %v336 = vrot.slane %v334, 1
      %v337 = vsel %vm289, %v332, %v336
      %v339 = vshrl.u32 %v261, 16
      %v341 = vshll.u32 %v261, 16
      %v343 = vrot.slane %v341, 1
      %v344 = vor.u32 %v339, %v343
      %v346 = vshll.u32 %v285, 16
      %v348 = vrot.slane %v346, 1
      %v349 = vsel %vm289, %v344, %v348
      %v351 = vshrl.u32 %v262, 16
      %v353 = vshll.u32 %v262, 16
      %v355 = vrot.slane %v353, 1
      %v356 = vor.u32 %v351, %v355
      %v358 = vshll.u32 %v286, 16
      %v360 = vrot.slane %v358, 1
      %v361 = vsel %vm289, %v356, %v360
      %v363 = vshrl.u32 %v263, 16
      %v365 = vshll.u32 %v263, 16
      %v367 = vrot.slane %v365, 1
      %v368 = vor.u32 %v363, %v367
      %v370 = vshll.u32 %v287, 16
      %v372 = vrot.slane %v370, 1
      %v373 = vsel %vm289, %v368, %v372
      %v375 = vshrl.u32 %v264, 16
      %v377 = vshll.u32 %v264, 16
      %v379 = vrot.slane %v377, 1
      %v380 = vor.u32 %v375, %v379
      %v382 = vshll.u32 %v288, 16
      %v384 = vrot.slane %v382, 1
      %v385 = vsel %vm289, %v380, %v384
      %386 = vrot.lane.b32.xlu0 %v301, 16
      %v387 = vpop.permute.xlu0 %386
      %388 = vrot.lane.b32.xlu0 %v313, 16
      %v389 = vpop.permute.xlu0 %388
      %390 = vrot.lane.b32.xlu0 %v325, 16
      %v391 = vpop.permute.xlu0 %390
      %392 = vrot.lane.b32.xlu0 %v337, 16
      %v393 = vpop.permute.xlu0 %392
      %394 = vrot.lane.b32.xlu0 %v349, 16
      %v395 = vpop.permute.xlu0 %394
      %396 = vrot.lane.b32.xlu0 %v361, 16
      %v397 = vpop.permute.xlu0 %396
      %398 = vrot.lane.b32.xlu0 %v373, 16
      %v399 = vpop.permute.xlu0 %398
      %400 = vrot.lane.b32.xlu0 %v385, 16
      %v401 = vpop.permute.xlu0 %400
      %vm402 = vcmask 1046528
      %v403 = vrot.slane %v257, 1
      %v404 = vrot.slane %v281, 1
      %v405 = vsel %vm402, %v403, %v404
      %v406 = vrot.slane %v258, 1
      %v407 = vrot.slane %v282, 1
      %v408 = vsel %vm402, %v406, %v407
      %v409 = vrot.slane %v259, 1
      %v410 = vrot.slane %v283, 1
      %v411 = vsel %vm402, %v409, %v410
      %v412 = vrot.slane %v260, 1
      %v413 = vrot.slane %v284, 1
      %v414 = vsel %vm402, %v412, %v413
      %v415 = vrot.slane %v261, 1
      %v416 = vrot.slane %v285, 1
      %v417 = vsel %vm402, %v415, %v416
      %v418 = vrot.slane %v262, 1
      %v419 = vrot.slane %v286, 1
      %v420 = vsel %vm402, %v418, %v419
      %v421 = vrot.slane %v263, 1
      %v422 = vrot.slane %v287, 1
      %v423 = vsel %vm402, %v421, %v422
      %v424 = vrot.slane %v264, 1
      %v425 = vrot.slane %v288, 1
      %v426 = vsel %vm402, %v424, %v425
      %427 = vrot.lane.b32.xlu0 %v405, 32
      %v428 = vpop.permute.xlu0 %427
      %429 = vrot.lane.b32.xlu0 %v408, 32
      %v430 = vpop.permute.xlu0 %429
      %431 = vrot.lane.b32.xlu0 %v411, 32
      %v432 = vpop.permute.xlu0 %431
      %433 = vrot.lane.b32.xlu0 %v414, 32
      %v434 = vpop.permute.xlu0 %433
      %435 = vrot.lane.b32.xlu0 %v417, 32
      %v436 = vpop.permute.xlu0 %435
      %437 = vrot.lane.b32.xlu0 %v420, 32
      %v438 = vpop.permute.xlu0 %437
      %439 = vrot.lane.b32.xlu0 %v423, 32
      %v440 = vpop.permute.xlu0 %439
      %441 = vrot.lane.b32.xlu0 %v426, 32
      %v442 = vpop.permute.xlu0 %441
      %vm443 = vcmask 130048
      %v445 = vsel %vm443, %v257, %v387
      %v447 = vsel %vm443, %v258, %v389
      %v449 = vsel %vm443, %v259, %v391
      %v451 = vsel %vm443, %v260, %v393
      %v453 = vsel %vm443, %v261, %v395
      %v455 = vsel %vm443, %v262, %v397
      %v457 = vsel %vm443, %v263, %v399
      %v459 = vsel %vm443, %v264, %v401
      %vm460 = vcmask 261120
      %v462 = vsel %vm460, %v445, %v428
      %v464 = vsel %vm460, %v447, %v430
      %v466 = vsel %vm460, %v449, %v432
      %v468 = vsel %vm460, %v451, %v434
      %v470 = vsel %vm460, %v453, %v436
      %v472 = vsel %vm460, %v455, %v438
      %v474 = vsel %vm460, %v457, %v440
      %v476 = vsel %vm460, %v459, %v442
      %v477 = vld [vmem:[%s1] sm:$0xf]
      %v478 = vld [vmem:[%s1 + $0x4] sm:$0xf]
      %v479 = vld [vmem:[%s1 + $0x8] sm:$0xf]
      %v480 = vld [vmem:[%s1 + $0xc] sm:$0xf]
      %v481 = vld [vmem:[%s1 + $0x10] sm:$0xf]
      %v482 = vld [vmem:[%s1 + $0x14] sm:$0xf]
      %s483 = sadd.s32 %s197, 1
      %s484 = smul.u32 %s483, 3
      %s485 = smul.addr %s484, 4
      %s486 = scalar_lea.vmem %s184, %s485
      %v487 = vld [vmem:[%s486] sm:$0xf]
      %v488 = vld [vmem:[%s486 + $0x4] sm:$0xf]
      %v489 = vld [vmem:[%s486 + $0x8] sm:$0x1]
      %v490 = vld [vmem:[%s486 + $0xc] sm:$0xf]
      %v491 = vld [vmem:[%s486 + $0x10] sm:$0xf]
      %v492 = vld [vmem:[%s486 + $0x14] sm:$0x1]
      %v493 = vld [vmem:[%s486 + $0x18] sm:$0xf]
      %v494 = vld [vmem:[%s486 + $0x1c] sm:$0xf]
      %v495 = vld [vmem:[%s486 + $0x20] sm:$0x1]
      %v496 = vld [vmem:[%s486 + $0x24] sm:$0xf]
      %v497 = vld [vmem:[%s486 + $0x28] sm:$0xf]
      %v498 = vld [vmem:[%s486 + $0x2c] sm:$0x1]
      %v499 = vld [vmem:[%s486 + $0x30] sm:$0xf]
      %v500 = vld [vmem:[%s486 + $0x34] sm:$0xf]
      %v501 = vld [vmem:[%s486 + $0x38] sm:$0x1]
      %v502 = vld [vmem:[%s486 + $0x3c] sm:$0xf]
      %v503 = vld [vmem:[%s486 + $0x40] sm:$0xf]
      %v504 = vld [vmem:[%s486 + $0x44] sm:$0x1]
      %v505 = vld [vmem:[%s486 + $0x48] sm:$0xf]
      %v506 = vld [vmem:[%s486 + $0x4c] sm:$0xf]
      %v507 = vld [vmem:[%s486 + $0x50] sm:$0x1]
      %v508 = vld [vmem:[%s486 + $0x54] sm:$0xf]
      %v509 = vld [vmem:[%s486 + $0x58] sm:$0xf]
      %v510 = vld [vmem:[%s486 + $0x5c] sm:$0x1]
      %v527 = vunpack.c.l.b16 %v487
      %v528 = vunpack.c.l.b16 %v488
      %v529 = vunpack.c.l.b16 %v490
      %v530 = vunpack.c.l.b16 %v491
      %v531 = vunpack.c.l.b16 %v493
      %v532 = vunpack.c.l.b16 %v494
      %v533 = vunpack.c.l.b16 %v496
      %v534 = vunpack.c.l.b16 %v497
      %v535 = vunpack.c.l.b16 %v499
      %v536 = vunpack.c.l.b16 %v500
      %v537 = vunpack.c.l.b16 %v502
      %v538 = vunpack.c.l.b16 %v503
      %v539 = vunpack.c.l.b16 %v505
      %v540 = vunpack.c.l.b16 %v506
      %v541 = vunpack.c.l.b16 %v508
      %v542 = vunpack.c.l.b16 %v509
      %v543 = vpack.c.b16 %v528, %v527
      %v544 = vpack.c.b16 %v530, %v529
      %v545 = vpack.c.b16 %v532, %v531
      %v546 = vpack.c.b16 %v534, %v533
      %v547 = vpack.c.b16 %v536, %v535
      %v548 = vpack.c.b16 %v538, %v537
      %v549 = vpack.c.b16 %v540, %v539
      %v550 = vpack.c.b16 %v542, %v541
      %v559 = vunpack.c.l.b16 %v489
      %v560 = vunpack.c.l.b16 %v492
      %v561 = vunpack.c.l.b16 %v495
      %v562 = vunpack.c.l.b16 %v498
      %v563 = vunpack.c.l.b16 %v501
      %v564 = vunpack.c.l.b16 %v504
      %v565 = vunpack.c.l.b16 %v507
      %v566 = vunpack.c.l.b16 %v510
      %v567 = vpack.c.b16 %v559, %v559
      %v568 = vpack.c.b16 %v560, %v560
      %v569 = vpack.c.b16 %v561, %v561
      %v570 = vpack.c.b16 %v562, %v562
      %v571 = vpack.c.b16 %v563, %v563
      %v572 = vpack.c.b16 %v564, %v564
      %v573 = vpack.c.b16 %v565, %v565
      %v574 = vpack.c.b16 %v566, %v566
      %v576 = vshrl.u32 %v543, 16
      %v578 = vshll.u32 %v543, 16
      %v580 = vrot.slane %v578, 1
      %v581 = vor.u32 %v576, %v580
      %v583 = vshll.u32 %v567, 16
      %v585 = vrot.slane %v583, 1
      %v586 = vsel %vm289, %v581, %v585
      %v588 = vshrl.u32 %v544, 16
      %v590 = vshll.u32 %v544, 16
      %v592 = vrot.slane %v590, 1
      %v593 = vor.u32 %v588, %v592
      %v595 = vshll.u32 %v568, 16
      %v597 = vrot.slane %v595, 1
      %v598 = vsel %vm289, %v593, %v597
      %v600 = vshrl.u32 %v545, 16
      %v602 = vshll.u32 %v545, 16
      %v604 = vrot.slane %v602, 1
      %v605 = vor.u32 %v600, %v604
      %v607 = vshll.u32 %v569, 16
      %v609 = vrot.slane %v607, 1
      %v610 = vsel %vm289, %v605, %v609
      %v612 = vshrl.u32 %v546, 16
      %v614 = vshll.u32 %v546, 16
      %v616 = vrot.slane %v614, 1
      %v617 = vor.u32 %v612, %v616
      %v619 = vshll.u32 %v570, 16
      %v621 = vrot.slane %v619, 1
      %v622 = vsel %vm289, %v617, %v621
      %v624 = vshrl.u32 %v547, 16
      %v626 = vshll.u32 %v547, 16
      %v628 = vrot.slane %v626, 1
      %v629 = vor.u32 %v624, %v628
      %v631 = vshll.u32 %v571, 16
      %v633 = vrot.slane %v631, 1
      %v634 = vsel %vm289, %v629, %v633
      %v636 = vshrl.u32 %v548, 16
      %v638 = vshll.u32 %v548, 16
      %v640 = vrot.slane %v638, 1
      %v641 = vor.u32 %v636, %v640
      %v643 = vshll.u32 %v572, 16
      %v645 = vrot.slane %v643, 1
      %v646 = vsel %vm289, %v641, %v645
      %v648 = vshrl.u32 %v549, 16
      %v650 = vshll.u32 %v549, 16
      %v652 = vrot.slane %v650, 1
      %v653 = vor.u32 %v648, %v652
      %v655 = vshll.u32 %v573, 16
      %v657 = vrot.slane %v655, 1
      %v658 = vsel %vm289, %v653, %v657
      %v660 = vshrl.u32 %v550, 16
      %v662 = vshll.u32 %v550, 16
      %v664 = vrot.slane %v662, 1
      %v665 = vor.u32 %v660, %v664
      %v667 = vshll.u32 %v574, 16
      %v669 = vrot.slane %v667, 1
      %v670 = vsel %vm289, %v665, %v669
      %671 = vrot.lane.b32.xlu0 %v586, 16
      %v672 = vpop.permute.xlu0 %671
      %673 = vrot.lane.b32.xlu0 %v598, 16
      %v674 = vpop.permute.xlu0 %673
      %675 = vrot.lane.b32.xlu0 %v610, 16
      %v676 = vpop.permute.xlu0 %675
      %677 = vrot.lane.b32.xlu0 %v622, 16
      %v678 = vpop.permute.xlu0 %677
      %679 = vrot.lane.b32.xlu0 %v634, 16
      %v680 = vpop.permute.xlu0 %679
      %681 = vrot.lane.b32.xlu0 %v646, 16
      %v682 = vpop.permute.xlu0 %681
      %683 = vrot.lane.b32.xlu0 %v658, 16
      %v684 = vpop.permute.xlu0 %683
      %685 = vrot.lane.b32.xlu0 %v670, 16
      %v686 = vpop.permute.xlu0 %685
      %v687 = vrot.slane %v543, 1
      %v688 = vrot.slane %v567, 1
      %v689 = vsel %vm402, %v687, %v688
      %v690 = vrot.slane %v544, 1
      %v691 = vrot.slane %v568, 1
      %v692 = vsel %vm402, %v690, %v691
      %v693 = vrot.slane %v545, 1
      %v694 = vrot.slane %v569, 1
      %v695 = vsel %vm402, %v693, %v694
      %v696 = vrot.slane %v546, 1
      %v697 = vrot.slane %v570, 1
      %v698 = vsel %vm402, %v696, %v697
      %v699 = vrot.slane %v547, 1
      %v700 = vrot.slane %v571, 1
      %v701 = vsel %vm402, %v699, %v700
      %v702 = vrot.slane %v548, 1
      %v703 = vrot.slane %v572, 1
      %v704 = vsel %vm402, %v702, %v703
      %v705 = vrot.slane %v549, 1
      %v706 = vrot.slane %v573, 1
      %v707 = vsel %vm402, %v705, %v706
      %v708 = vrot.slane %v550, 1
      %v709 = vrot.slane %v574, 1
      %v710 = vsel %vm402, %v708, %v709
      %711 = vrot.lane.b32.xlu0 %v689, 32
      %v712 = vpop.permute.xlu0 %711
      %713 = vrot.lane.b32.xlu0 %v692, 32
      %v714 = vpop.permute.xlu0 %713
      %715 = vrot.lane.b32.xlu0 %v695, 32
      %v716 = vpop.permute.xlu0 %715
      %717 = vrot.lane.b32.xlu0 %v698, 32
      %v718 = vpop.permute.xlu0 %717
      %719 = vrot.lane.b32.xlu0 %v701, 32
      %v720 = vpop.permute.xlu0 %719
      %721 = vrot.lane.b32.xlu0 %v704, 32
      %v722 = vpop.permute.xlu0 %721
      %723 = vrot.lane.b32.xlu0 %v707, 32
      %v724 = vpop.permute.xlu0 %723
      %725 = vrot.lane.b32.xlu0 %v710, 32
      %v726 = vpop.permute.xlu0 %725
      %v728 = vsel %vm443, %v543, %v672
      %v730 = vsel %vm443, %v544, %v674
      %v732 = vsel %vm443, %v545, %v676
      %v734 = vsel %vm443, %v546, %v678
      %v736 = vsel %vm443, %v547, %v680
      %v738 = vsel %vm443, %v548, %v682
      %v740 = vsel %vm443, %v549, %v684
      %v742 = vsel %vm443, %v550, %v686
      %v744 = vsel %vm460, %v728, %v712
      %v746 = vsel %vm460, %v730, %v714
      %v748 = vsel %vm460, %v732, %v716
      %v750 = vsel %vm460, %v734, %v718
      %v752 = vsel %vm460, %v736, %v720
      %v754 = vsel %vm460, %v738, %v722
      %v756 = vsel %vm460, %v740, %v724
      %v758 = vsel %vm460, %v742, %v726
      %s759 = scalar_lea.vmem %s1, 24
      %v760 = vld [vmem:[%s759] sm:$0xf]
      %v761 = vld [vmem:[%s759 + $0x4] sm:$0xf]
      %v762 = vld [vmem:[%s759 + $0x8] sm:$0xf]
      %v763 = vld [vmem:[%s759 + $0xc] sm:$0xf]
      %v764 = vld [vmem:[%s759 + $0x10] sm:$0xf]
      %v765 = vld [vmem:[%s759 + $0x14] sm:$0xf]
      %v772 = vunpack.c.l.b16 %v760
      %v773 = vunpack.c.l.b16 %v761
      %v774 = vunpack.c.l.b16 %v762
      %v775 = vunpack.c.l.b16 %v763
      %v776 = vunpack.c.l.b16 %v764
      %v777 = vunpack.c.l.b16 %v765
      %v778 = vpack.c.b16 %v773, %v772
      %v779 = vpack.c.b16 %v775, %v774
      %v780 = vpack.c.b16 %v777, %v776
      %vm784 = vcmask 392192
      %v785 = vsel %vm784, %v744, 0
      %v787 = vsel %vm784, %v746, 0
      %v789 = vsel %vm784, %v748, 0
      %v791 = vsel %vm784, %v750, 0
      %v793 = vsel %vm784, %v752, 0
      %v795 = vsel %vm784, %v754, 0
      %v797 = vsel %vm784, %v756, 0
      %v799 = vsel %vm784, %v758, 0
      %801 = vmatprep.subr.bf16.mxu0 0
      %802 = vmatpush1.bf16.msra.mxu0 %v778
      %803 = vmatprep.subr.bf16.mxu0 0
      %804 = vmatpush1.bf16.msra.mxu0 %v779
      %805 = vmatprep.subr.bf16.mxu0 0
      %806 = vmatpush1.bf16.msra.mxu0 %v780
      %807 = vmatprep.subr.bf16.mxu0 0
      %808 = vmatpush1.bf16.msra.mxu0 0
      %809 = vmatprep.subr.bf16.mxu0 0
      %810 = vmatpush1.bf16.msra.mxu0 0
      %811 = vmatprep.subr.bf16.mxu0 0
      %812 = vmatpush1.bf16.msra.mxu0 0
      %813 = vmatprep.subr.bf16.mxu0 0
      %814 = vmatpush1.bf16.msra.mxu0 0
      %815 = vmatprep.subr.bf16.mxu0 0
      %816 = vmatpush1.bf16.msra.mxu0 0
      %817 = vmatprep.subr.bf16.mxu0 0
      %818 = vmatpush1.bf16.msra.mxu0 0
      %819 = vmatprep.subr.bf16.mxu0 0
      %820 = vmatpush1.bf16.msra.mxu0 0
      %821 = vmatprep.subr.bf16.mxu0 0
      %822 = vmatpush1.bf16.msra.mxu0 0
      %823 = vmatprep.subr.bf16.mxu0 0
      %824 = vmatpush1.bf16.msra.mxu0 0
      %825 = vmatprep.subr.bf16.mxu0 0
      %826 = vmatpush1.bf16.msra.mxu0 0
      %827 = vmatprep.subr.bf16.mxu0 0
      %828 = vmatpush1.bf16.msra.mxu0 0
      %829 = vmatprep.subr.bf16.mxu0 0
      %830 = vmatpush1.bf16.msra.mxu0 0
      %831 = vmatprep.subr.bf16.mxu0 0
      %832 = vmatpush1.bf16.msra.mxu0 0
      %833 = vmatprep.mubr.bf16.mxu0 0
      %834 = vmatmul.mubr.bf16.gmra.mrb[0].mxu0 %v785
      %v835 = vpop.f32.mrb[0].mxu0
      %v836 = vadd.f32 0.0, %v835
      %v837 = vpop.f32.mrb[0].mxu0
      %v838 = vpop.f32.mrb[0].mxu0
      %v839 = vadd.f32 0.0, %v838
      %v840 = vpop.f32.mrb[0].mxu0
      %841 = vmatprep.mubr.bf16.mxu0 0
      %842 = vmatmul.mubr.bf16.gmra.mrb[0].mxu0 %v787
      %v843 = vpop.f32.mrb[0].mxu0
      %v844 = vadd.f32 0.0, %v843
      %v845 = vpop.f32.mrb[0].mxu0
      %v846 = vpop.f32.mrb[0].mxu0
      %v847 = vadd.f32 0.0, %v846
      %v848 = vpop.f32.mrb[0].mxu0
      %849 = vmatprep.mubr.bf16.mxu0 0
      %850 = vmatmul.mubr.bf16.gmra.mrb[0].mxu0 %v789
      %v851 = vpop.f32.mrb[0].mxu0
      %v852 = vadd.f32 0.0, %v851
      %v853 = vpop.f32.mrb[0].mxu0
      %v854 = vpop.f32.mrb[0].mxu0
      %v855 = vadd.f32 0.0, %v854
      %v856 = vpop.f32.mrb[0].mxu0
      %857 = vmatprep.mubr.bf16.mxu0 0
      %858 = vmatmul.mubr.bf16.gmra.mrb[0].mxu0 %v791
      %v859 = vpop.f32.mrb[0].mxu0
      %v860 = vadd.f32 0.0, %v859
      %v861 = vpop.f32.mrb[0].mxu0
      %v862 = vpop.f32.mrb[0].mxu0
      %v863 = vadd.f32 0.0, %v862
      %v864 = vpop.f32.mrb[0].mxu0
      %865 = vmatprep.mubr.bf16.mxu0 0
      %866 = vmatmul.mubr.bf16.gmra.mrb[0].mxu0 %v793
      %v867 = vpop.f32.mrb[0].mxu0
      %v868 = vadd.f32 0.0, %v867
      %v869 = vpop.f32.mrb[0].mxu0
      %v870 = vpop.f32.mrb[0].mxu0
      %v871 = vadd.f32 0.0, %v870
      %v872 = vpop.f32.mrb[0].mxu0
      %873 = vmatprep.mubr.bf16.mxu0 0
      %874 = vmatmul.mubr.bf16.gmra.mrb[0].mxu0 %v795
      %v875 = vpop.f32.mrb[0].mxu0
      %v876 = vadd.f32 0.0, %v875
      %v877 = vpop.f32.mrb[0].mxu0
      %v878 = vpop.f32.mrb[0].mxu0
      %v879 = vadd.f32 0.0, %v878
      %v880 = vpop.f32.mrb[0].mxu0
      %881 = vmatprep.mubr.bf16.mxu0 0
      %882 = vmatmul.mubr.bf16.gmra.mrb[0].mxu0 %v797
      %v883 = vpop.f32.mrb[0].mxu0
      %v884 = vadd.f32 0.0, %v883
      %v885 = vpop.f32.mrb[0].mxu0
      %v886 = vpop.f32.mrb[0].mxu0
      %v887 = vadd.f32 0.0, %v886
      %v888 = vpop.f32.mrb[0].mxu0
      %889 = vmatprep.mubr.bf16.mxu0 0
      %890 = vmatmul.mubr.bf16.gmra.mrb[0].mxu0 %v799
      %v891 = vpop.f32.mrb[0].mxu0
      %v892 = vadd.f32 0.0, %v891
      %v893 = vpop.f32.mrb[0].mxu0
      %v894 = vpop.f32.mrb[0].mxu0
      %v895 = vadd.f32 0.0, %v894
      %v896 = vpop.f32.mrb[0].mxu0
      %897 = vdwg.mxu0
      %v904 = vunpack.c.l.b16 %v477
      %v905 = vunpack.c.l.b16 %v478
      %v906 = vunpack.c.l.b16 %v479
      %v907 = vunpack.c.l.b16 %v480
      %v908 = vunpack.c.l.b16 %v481
      %v909 = vunpack.c.l.b16 %v482
      %v910 = vpack.c.b16 %v905, %v904
      %v911 = vpack.c.b16 %v907, %v906
      %v912 = vpack.c.b16 %v909, %v908
      %v916 = vsel %vm784, %v462, 0
      %v918 = vsel %vm784, %v464, 0
      %v920 = vsel %vm784, %v466, 0
      %v922 = vsel %vm784, %v468, 0
      %v924 = vsel %vm784, %v470, 0
      %v926 = vsel %vm784, %v472, 0
      %v928 = vsel %vm784, %v474, 0
      %v930 = vsel %vm784, %v476, 0
      %932 = vmatprep.subr.bf16.mxu0 0
      %933 = vmatpush1.bf16.msra.mxu0 %v910
      %934 = vmatprep.subr.bf16.mxu0 0
      %935 = vmatpush1.bf16.msra.mxu0 %v911
      %936 = vmatprep.subr.bf16.mxu0 0
      %937 = vmatpush1.bf16.msra.mxu0 %v912
      %938 = vmatprep.subr.bf16.mxu0 0
      %939 = vmatpush1.bf16.msra.mxu0 0
      %940 = vmatprep.subr.bf16.mxu0 0
      %941 = vmatpush1.bf16.msra.mxu0 0
      %942 = vmatprep.subr.bf16.mxu0 0
      %943 = vmatpush1.bf16.msra.mxu0 0
      %944 = vmatprep.subr.bf16.mxu0 0
      %945 = vmatpush1.bf16.msra.mxu0 0
      %946 = vmatprep.subr.bf16.mxu0 0
      %947 = vmatpush1.bf16.msra.mxu0 0
      %948 = vmatprep.subr.bf16.mxu0 0
      %949 = vmatpush1.bf16.msra.mxu0 0
      %950 = vmatprep.subr.bf16.mxu0 0
      %951 = vmatpush1.bf16.msra.mxu0 0
      %952 = vmatprep.subr.bf16.mxu0 0
      %953 = vmatpush1.bf16.msra.mxu0 0
      %954 = vmatprep.subr.bf16.mxu0 0
      %955 = vmatpush1.bf16.msra.mxu0 0
      %956 = vmatprep.subr.bf16.mxu0 0
      %957 = vmatpush1.bf16.msra.mxu0 0
      %958 = vmatprep.subr.bf16.mxu0 0
      %959 = vmatpush1.bf16.msra.mxu0 0
      %960 = vmatprep.subr.bf16.mxu0 0
      %961 = vmatpush1.bf16.msra.mxu0 0
      %962 = vmatprep.subr.bf16.mxu0 0
      %963 = vmatpush1.bf16.msra.mxu0 0
      %964 = vmatprep.mubr.bf16.mxu0 0
      %965 = vmatmul.mubr.bf16.gmra.mrb[0].mxu0 %v916
      %v966 = vpop.f32.mrb[0].mxu0
      %v967 = vadd.f32 %v836, %v966
      %v968 = vpop.f32.mrb[0].mxu0
      %v969 = vpop.f32.mrb[0].mxu0
      %v970 = vadd.f32 %v839, %v969
      %v971 = vpop.f32.mrb[0].mxu0
      %972 = vmatprep.mubr.bf16.mxu0 0
      %973 = vmatmul.mubr.bf16.gmra.mrb[0].mxu0 %v918
      %v974 = vpop.f32.mrb[0].mxu0
      %v975 = vadd.f32 %v844, %v974
      %v976 = vpop.f32.mrb[0].mxu0
      %v977 = vpop.f32.mrb[0].mxu0
      %v978 = vadd.f32 %v847, %v977
      %v979 = vpop.f32.mrb[0].mxu0
      %980 = vmatprep.mubr.bf16.mxu0 0
      %981 = vmatmul.mubr.bf16.gmra.mrb[0].mxu0 %v920
      %v982 = vpop.f32.mrb[0].mxu0
      %v983 = vadd.f32 %v852, %v982
      %v984 = vpop.f32.mrb[0].mxu0
      %v985 = vpop.f32.mrb[0].mxu0
      %v986 = vadd.f32 %v855, %v985
      %v987 = vpop.f32.mrb[0].mxu0
      %988 = vmatprep.mubr.bf16.mxu0 0
      %989 = vmatmul.mubr.bf16.gmra.mrb[0].mxu0 %v922
      %v990 = vpop.f32.mrb[0].mxu0
      %v991 = vadd.f32 %v860, %v990
      %v992 = vpop.f32.mrb[0].mxu0
      %v993 = vpop.f32.mrb[0].mxu0
      %v994 = vadd.f32 %v863, %v993
      %v995 = vpop.f32.mrb[0].mxu0
      %996 = vmatprep.mubr.bf16.mxu0 0
      %997 = vmatmul.mubr.bf16.gmra.mrb[0].mxu0 %v924
      %v998 = vpop.f32.mrb[0].mxu0
      %v999 = vadd.f32 %v868, %v998
      %v1000 = vpop.f32.mrb[0].mxu0
      %v1001 = vpop.f32.mrb[0].mxu0
      %v1002 = vadd.f32 %v871, %v1001
      %v1003 = vpop.f32.mrb[0].mxu0
      %1004 = vmatprep.mubr.bf16.mxu0 0
      %1005 = vmatmul.mubr.bf16.gmra.mrb[0].mxu0 %v926
      %v1006 = vpop.f32.mrb[0].mxu0
      %v1007 = vadd.f32 %v876, %v1006
      %v1008 = vpop.f32.mrb[0].mxu0
      %v1009 = vpop.f32.mrb[0].mxu0
      %v1010 = vadd.f32 %v879, %v1009
      %v1011 = vpop.f32.mrb[0].mxu0
      %1012 = vmatprep.mubr.bf16.mxu0 0
      %1013 = vmatmul.mubr.bf16.gmra.mrb[0].mxu0 %v928
      %v1014 = vpop.f32.mrb[0].mxu0
      %v1015 = vadd.f32 %v884, %v1014
      %v1016 = vpop.f32.mrb[0].mxu0
      %v1017 = vpop.f32.mrb[0].mxu0
      %v1018 = vadd.f32 %v887, %v1017
      %v1019 = vpop.f32.mrb[0].mxu0
      %1020 = vmatprep.mubr.bf16.mxu0 0
      %1021 = vmatmul.mubr.bf16.gmra.mrb[0].mxu0 %v930
      %v1022 = vpop.f32.mrb[0].mxu0
      %v1023 = vadd.f32 %v892, %v1022
      %v1024 = vpop.f32.mrb[0].mxu0
      %v1025 = vpop.f32.mrb[0].mxu0
      %v1026 = vadd.f32 %v895, %v1025
      %v1027 = vpop.f32.mrb[0].mxu0
      %1028 = vdwg.mxu0
      %s1029 = sadd.s32 %s197, 2
      %s1030 = smul.u32 %s1029, 3
      %s1031 = smul.addr %s1030, 4
      %s1032 = scalar_lea.vmem %s184, %s1031
      %v1033 = vld [vmem:[%s1032] sm:$0xf]
      %v1034 = vld [vmem:[%s1032 + $0x4] sm:$0xf]
      %v1035 = vld [vmem:[%s1032 + $0x8] sm:$0x1]
      %v1036 = vld [vmem:[%s1032 + $0xc] sm:$0xf]
      %v1037 = vld [vmem:[%s1032 + $0x10] sm:$0xf]
      %v1038 = vld [vmem:[%s1032 + $0x14] sm:$0x1]
      %v1039 = vld [vmem:[%s1032 + $0x18] sm:$0xf]
      %v1040 = vld [vmem:[%s1032 + $0x1c] sm:$0xf]
      %v1041 = vld [vmem:[%s1032 + $0x20] sm:$0x1]
      %v1042 = vld [vmem:[%s1032 + $0x24] sm:$0xf]
      %v1043 = vld [vmem:[%s1032 + $0x28] sm:$0xf]
      %v1044 = vld [vmem:[%s1032 + $0x2c] sm:$0x1]
      %v1045 = vld [vmem:[%s1032 + $0x30] sm:$0xf]
      %v1046 = vld [vmem:[%s1032 + $0x34] sm:$0xf]
      %v1047 = vld [vmem:[%s1032 + $0x38] sm:$0x1]
      %v1048 = vld [vmem:[%s1032 + $0x3c] sm:$0xf]
      %v1049 = vld [vmem:[%s1032 + $0x40] sm:$0xf]
      %v1050 = vld [vmem:[%s1032 + $0x44] sm:$0x1]
      %v1051 = vld [vmem:[%s1032 + $0x48] sm:$0xf]
      %v1052 = vld [vmem:[%s1032 + $0x4c] sm:$0xf]
      %v1053 = vld [vmem:[%s1032 + $0x50] sm:$0x1]
      %v1054 = vld [vmem:[%s1032 + $0x54] sm:$0xf]
      %v1055 = vld [vmem:[%s1032 + $0x58] sm:$0xf]
      %v1056 = vld [vmem:[%s1032 + $0x5c] sm:$0x1]
      %v1073 = vunpack.c.l.b16 %v1033
      %v1074 = vunpack.c.l.b16 %v1034
      %v1075 = vunpack.c.l.b16 %v1036
      %v1076 = vunpack.c.l.b16 %v1037
      %v1077 = vunpack.c.l.b16 %v1039
      %v1078 = vunpack.c.l.b16 %v1040
      %v1079 = vunpack.c.l.b16 %v1042
      %v1080 = vunpack.c.l.b16 %v1043
      %v1081 = vunpack.c.l.b16 %v1045
      %v1082 = vunpack.c.l.b16 %v1046
      %v1083 = vunpack.c.l.b16 %v1048
      %v1084 = vunpack.c.l.b16 %v1049
      %v1085 = vunpack.c.l.b16 %v1051
      %v1086 = vunpack.c.l.b16 %v1052
      %v1087 = vunpack.c.l.b16 %v1054
      %v1088 = vunpack.c.l.b16 %v1055
      %v1089 = vpack.c.b16 %v1074, %v1073
      %v1090 = vpack.c.b16 %v1076, %v1075
      %v1091 = vpack.c.b16 %v1078, %v1077
      %v1092 = vpack.c.b16 %v1080, %v1079
      %v1093 = vpack.c.b16 %v1082, %v1081
      %v1094 = vpack.c.b16 %v1084, %v1083
      %v1095 = vpack.c.b16 %v1086, %v1085
      %v1096 = vpack.c.b16 %v1088, %v1087
      %v1105 = vunpack.c.l.b16 %v1035
      %v1106 = vunpack.c.l.b16 %v1038
      %v1107 = vunpack.c.l.b16 %v1041
      %v1108 = vunpack.c.l.b16 %v1044
      %v1109 = vunpack.c.l.b16 %v1047
      %v1110 = vunpack.c.l.b16 %v1050
      %v1111 = vunpack.c.l.b16 %v1053
      %v1112 = vunpack.c.l.b16 %v1056
      %v1113 = vpack.c.b16 %v1105, %v1105
      %v1114 = vpack.c.b16 %v1106, %v1106
      %v1115 = vpack.c.b16 %v1107, %v1107
      %v1116 = vpack.c.b16 %v1108, %v1108
      %v1117 = vpack.c.b16 %v1109, %v1109
      %v1118 = vpack.c.b16 %v1110, %v1110
      %v1119 = vpack.c.b16 %v1111, %v1111
      %v1120 = vpack.c.b16 %v1112, %v1112
      %v1122 = vshrl.u32 %v1089, 16
      %v1124 = vshll.u32 %v1089, 16
      %v1126 = vrot.slane %v1124, 1
      %v1127 = vor.u32 %v1122, %v1126
      %v1129 = vshll.u32 %v1113, 16
      %v1131 = vrot.slane %v1129, 1
      %v1132 = vsel %vm289, %v1127, %v1131
      %v1134 = vshrl.u32 %v1090, 16
      %v1136 = vshll.u32 %v1090, 16
      %v1138 = vrot.slane %v1136, 1
      %v1139 = vor.u32 %v1134, %v1138
      %v1141 = vshll.u32 %v1114, 16
      %v1143 = vrot.slane %v1141, 1
      %v1144 = vsel %vm289, %v1139, %v1143
      %v1146 = vshrl.u32 %v1091, 16
      %v1148 = vshll.u32 %v1091, 16
      %v1150 = vrot.slane %v1148, 1
      %v1151 = vor.u32 %v1146, %v1150
      %v1153 = vshll.u32 %v1115, 16
      %v1155 = vrot.slane %v1153, 1
      %v1156 = vsel %vm289, %v1151, %v1155
      %v1158 = vshrl.u32 %v1092, 16
      %v1160 = vshll.u32 %v1092, 16
      %v1162 = vrot.slane %v1160, 1
      %v1163 = vor.u32 %v1158, %v1162
      %v1165 = vshll.u32 %v1116, 16
      %v1167 = vrot.slane %v1165, 1
      %v1168 = vsel %vm289, %v1163, %v1167
      %v1170 = vshrl.u32 %v1093, 16
      %v1172 = vshll.u32 %v1093, 16
      %v1174 = vrot.slane %v1172, 1
      %v1175 = vor.u32 %v1170, %v1174
      %v1177 = vshll.u32 %v1117, 16
      %v1179 = vrot.slane %v1177, 1
      %v1180 = vsel %vm289, %v1175, %v1179
      %v1182 = vshrl.u32 %v1094, 16
      %v1184 = vshll.u32 %v1094, 16
      %v1186 = vrot.slane %v1184, 1
      %v1187 = vor.u32 %v1182, %v1186
      %v1189 = vshll.u32 %v1118, 16
      %v1191 = vrot.slane %v1189, 1
      %v1192 = vsel %vm289, %v1187, %v1191
      %v1194 = vshrl.u32 %v1095, 16
      %v1196 = vshll.u32 %v1095, 16
      %v1198 = vrot.slane %v1196, 1
      %v1199 = vor.u32 %v1194, %v1198
      %v1201 = vshll.u32 %v1119, 16
      %v1203 = vrot.slane %v1201, 1
      %v1204 = vsel %vm289, %v1199, %v1203
      %v1206 = vshrl.u32 %v1096, 16
      %v1208 = vshll.u32 %v1096, 16
      %v1210 = vrot.slane %v1208, 1
      %v1211 = vor.u32 %v1206, %v1210
      %v1213 = vshll.u32 %v1120, 16
      %v1215 = vrot.slane %v1213, 1
      %v1216 = vsel %vm289, %v1211, %v1215
      %1217 = vrot.lane.b32.xlu0 %v1132, 16
      %v1218 = vpop.permute.xlu0 %1217
      %1219 = vrot.lane.b32.xlu0 %v1144, 16
      %v1220 = vpop.permute.xlu0 %1219
      %1221 = vrot.lane.b32.xlu0 %v1156, 16
      %v1222 = vpop.permute.xlu0 %1221
      %1223 = vrot.lane.b32.xlu0 %v1168, 16
      %v1224 = vpop.permute.xlu0 %1223
      %1225 = vrot.lane.b32.xlu0 %v1180, 16
      %v1226 = vpop.permute.xlu0 %1225
      %1227 = vrot.lane.b32.xlu0 %v1192, 16
      %v1228 = vpop.permute.xlu0 %1227
      %1229 = vrot.lane.b32.xlu0 %v1204, 16
      %v1230 = vpop.permute.xlu0 %1229
      %1231 = vrot.lane.b32.xlu0 %v1216, 16
      %v1232 = vpop.permute.xlu0 %1231
      %v1233 = vrot.slane %v1089, 1
      %v1234 = vrot.slane %v1113, 1
      %v1235 = vsel %vm402, %v1233, %v1234
      %v1236 = vrot.slane %v1090, 1
      %v1237 = vrot.slane %v1114, 1
      %v1238 = vsel %vm402, %v1236, %v1237
      %v1239 = vrot.slane %v1091, 1
      %v1240 = vrot.slane %v1115, 1
      %v1241 = vsel %vm402, %v1239, %v1240
      %v1242 = vrot.slane %v1092, 1
      %v1243 = vrot.slane %v1116, 1
      %v1244 = vsel %vm402, %v1242, %v1243
      %v1245 = vrot.slane %v1093, 1
      %v1246 = vrot.slane %v1117, 1
      %v1247 = vsel %vm402, %v1245, %v1246
      %v1248 = vrot.slane %v1094, 1
      %v1249 = vrot.slane %v1118, 1
      %v1250 = vsel %vm402, %v1248, %v1249
      %v1251 = vrot.slane %v1095, 1
      %v1252 = vrot.slane %v1119, 1
      %v1253 = vsel %vm402, %v1251, %v1252
      %v1254 = vrot.slane %v1096, 1
      %v1255 = vrot.slane %v1120, 1
      %v1256 = vsel %vm402, %v1254, %v1255
      %1257 = vrot.lane.b32.xlu0 %v1235, 32
      %v1258 = vpop.permute.xlu0 %1257
      %1259 = vrot.lane.b32.xlu0 %v1238, 32
      %v1260 = vpop.permute.xlu0 %1259
      %1261 = vrot.lane.b32.xlu0 %v1241, 32
      %v1262 = vpop.permute.xlu0 %1261
      %1263 = vrot.lane.b32.xlu0 %v1244, 32
      %v1264 = vpop.permute.xlu0 %1263
      %1265 = vrot.lane.b32.xlu0 %v1247, 32
      %v1266 = vpop.permute.xlu0 %1265
      %1267 = vrot.lane.b32.xlu0 %v1250, 32
      %v1268 = vpop.permute.xlu0 %1267
      %1269 = vrot.lane.b32.xlu0 %v1253, 32
      %v1270 = vpop.permute.xlu0 %1269
      %1271 = vrot.lane.b32.xlu0 %v1256, 32
      %v1272 = vpop.permute.xlu0 %1271
      %v1274 = vsel %vm443, %v1089, %v1218
      %v1276 = vsel %vm443, %v1090, %v1220
      %v1278 = vsel %vm443, %v1091, %v1222
      %v1280 = vsel %vm443, %v1092, %v1224
      %v1282 = vsel %vm443, %v1093, %v1226
      %v1284 = vsel %vm443, %v1094, %v1228
      %v1286 = vsel %vm443, %v1095, %v1230
      %v1288 = vsel %vm443, %v1096, %v1232
      %v1290 = vsel %vm460, %v1274, %v1258
      %v1292 = vsel %vm460, %v1276, %v1260
      %v1294 = vsel %vm460, %v1278, %v1262
      %v1296 = vsel %vm460, %v1280, %v1264
      %v1298 = vsel %vm460, %v1282, %v1266
      %v1300 = vsel %vm460, %v1284, %v1268
      %v1302 = vsel %vm460, %v1286, %v1270
      %v1304 = vsel %vm460, %v1288, %v1272
      %s1305 = scalar_lea.vmem %s1, 48
      %v1306 = vld [vmem:[%s1305] sm:$0xf]
      %v1307 = vld [vmem:[%s1305 + $0x4] sm:$0xf]
      %v1308 = vld [vmem:[%s1305 + $0x8] sm:$0xf]
      %v1309 = vld [vmem:[%s1305 + $0xc] sm:$0xf]
      %v1310 = vld [vmem:[%s1305 + $0x10] sm:$0xf]
      %v1311 = vld [vmem:[%s1305 + $0x14] sm:$0xf]
      %v1318 = vunpack.c.l.b16 %v1306
      %v1319 = vunpack.c.l.b16 %v1307
      %v1320 = vunpack.c.l.b16 %v1308
      %v1321 = vunpack.c.l.b16 %v1309
      %v1322 = vunpack.c.l.b16 %v1310
      %v1323 = vunpack.c.l.b16 %v1311
      %v1324 = vpack.c.b16 %v1319, %v1318
      %v1325 = vpack.c.b16 %v1321, %v1320
      %v1326 = vpack.c.b16 %v1323, %v1322
      %v1330 = vsel %vm784, %v1290, 0
      %v1332 = vsel %vm784, %v1292, 0
      %v1334 = vsel %vm784, %v1294, 0
      %v1336 = vsel %vm784, %v1296, 0
      %v1338 = vsel %vm784, %v1298, 0
      %v1340 = vsel %vm784, %v1300, 0
      %v1342 = vsel %vm784, %v1302, 0
      %v1344 = vsel %vm784, %v1304, 0
      %1346 = vmatprep.subr.bf16.mxu0 0
      %1347 = vmatpush1.bf16.msra.mxu0 %v1324
      %1348 = vmatprep.subr.bf16.mxu0 0
      %1349 = vmatpush1.bf16.msra.mxu0 %v1325
      %1350 = vmatprep.subr.bf16.mxu0 0
      %1351 = vmatpush1.bf16.msra.mxu0 %v1326
      %1352 = vmatprep.subr.bf16.mxu0 0
      %1353 = vmatpush1.bf16.msra.mxu0 0
      %1354 = vmatprep.subr.bf16.mxu0 0
      %1355 = vmatpush1.bf16.msra.mxu0 0
      %1356 = vmatprep.subr.bf16.mxu0 0
      %1357 = vmatpush1.bf16.msra.mxu0 0
      %1358 = vmatprep.subr.bf16.mxu0 0
      %1359 = vmatpush1.bf16.msra.mxu0 0
      %1360 = vmatprep.subr.bf16.mxu0 0
      %1361 = vmatpush1.bf16.msra.mxu0 0
      %1362 = vmatprep.subr.bf16.mxu0 0
      %1363 = vmatpush1.bf16.msra.mxu0 0
      %1364 = vmatprep.subr.bf16.mxu0 0
      %1365 = vmatpush1.bf16.msra.mxu0 0
      %1366 = vmatprep.subr.bf16.mxu0 0
      %1367 = vmatpush1.bf16.msra.mxu0 0
      %1368 = vmatprep.subr.bf16.mxu0 0
      %1369 = vmatpush1.bf16.msra.mxu0 0
      %1370 = vmatprep.subr.bf16.mxu0 0
      %1371 = vmatpush1.bf16.msra.mxu0 0
      %1372 = vmatprep.subr.bf16.mxu0 0
      %1373 = vmatpush1.bf16.msra.mxu0 0
      %1374 = vmatprep.subr.bf16.mxu0 0
      %1375 = vmatpush1.bf16.msra.mxu0 0
      %1376 = vmatprep.subr.bf16.mxu0 0
      %1377 = vmatpush1.bf16.msra.mxu0 0
      %1378 = vmatprep.mubr.bf16.mxu0 0
      %1379 = vmatmul.mubr.bf16.gmra.mrb[0].mxu0 %v1330
      %v1380 = vpop.f32.mrb[0].mxu0
      %v1381 = vadd.f32 0.0, %v1380
      %v1382 = vpop.f32.mrb[0].mxu0
      %v1383 = vpop.f32.mrb[0].mxu0
      %v1384 = vadd.f32 0.0, %v1383
      %v1385 = vpop.f32.mrb[0].mxu0
      %1386 = vmatprep.mubr.bf16.mxu0 0
      %1387 = vmatmul.mubr.bf16.gmra.mrb[0].mxu0 %v1332
      %v1388 = vpop.f32.mrb[0].mxu0
      %v1389 = vadd.f32 0.0, %v1388
      %v1390 = vpop.f32.mrb[0].mxu0
      %v1391 = vpop.f32.mrb[0].mxu0
      %v1392 = vadd.f32 0.0, %v1391
      %v1393 = vpop.f32.mrb[0].mxu0
      %1394 = vmatprep.mubr.bf16.mxu0 0
      %1395 = vmatmul.mubr.bf16.gmra.mrb[0].mxu0 %v1334
      %v1396 = vpop.f32.mrb[0].mxu0
      %v1397 = vadd.f32 0.0, %v1396
      %v1398 = vpop.f32.mrb[0].mxu0
      %v1399 = vpop.f32.mrb[0].mxu0
      %v1400 = vadd.f32 0.0, %v1399
      %v1401 = vpop.f32.mrb[0].mxu0
      %1402 = vmatprep.mubr.bf16.mxu0 0
      %1403 = vmatmul.mubr.bf16.gmra.mrb[0].mxu0 %v1336
      %v1404 = vpop.f32.mrb[0].mxu0
      %v1405 = vadd.f32 0.0, %v1404
      %v1406 = vpop.f32.mrb[0].mxu0
      %v1407 = vpop.f32.mrb[0].mxu0
      %v1408 = vadd.f32 0.0, %v1407
      %v1409 = vpop.f32.mrb[0].mxu0
      %1410 = vmatprep.mubr.bf16.mxu0 0
      %1411 = vmatmul.mubr.bf16.gmra.mrb[0].mxu0 %v1338
      %v1412 = vpop.f32.mrb[0].mxu0
      %v1413 = vadd.f32 0.0, %v1412
      %v1414 = vpop.f32.mrb[0].mxu0
      %v1415 = vpop.f32.mrb[0].mxu0
      %v1416 = vadd.f32 0.0, %v1415
      %v1417 = vpop.f32.mrb[0].mxu0
      %1418 = vmatprep.mubr.bf16.mxu0 0
      %1419 = vmatmul.mubr.bf16.gmra.mrb[0].mxu0 %v1340
      %v1420 = vpop.f32.mrb[0].mxu0
      %v1421 = vadd.f32 0.0, %v1420
      %v1422 = vpop.f32.mrb[0].mxu0
      %v1423 = vpop.f32.mrb[0].mxu0
      %v1424 = vadd.f32 0.0, %v1423
      %v1425 = vpop.f32.mrb[0].mxu0
      %1426 = vmatprep.mubr.bf16.mxu0 0
      %1427 = vmatmul.mubr.bf16.gmra.mrb[0].mxu0 %v1342
      %v1428 = vpop.f32.mrb[0].mxu0
      %v1429 = vadd.f32 0.0, %v1428
      %v1430 = vpop.f32.mrb[0].mxu0
      %v1431 = vpop.f32.mrb[0].mxu0
      %v1432 = vadd.f32 0.0, %v1431
      %v1433 = vpop.f32.mrb[0].mxu0
      %1434 = vmatprep.mubr.bf16.mxu0 0
      %1435 = vmatmul.mubr.bf16.gmra.mrb[0].mxu0 %v1344
      %v1436 = vpop.f32.mrb[0].mxu0
      %v1437 = vadd.f32 0.0, %v1436
      %v1438 = vpop.f32.mrb[0].mxu0
      %v1439 = vpop.f32.mrb[0].mxu0
      %v1440 = vadd.f32 0.0, %v1439
      %v1441 = vpop.f32.mrb[0].mxu0
      %1442 = vdwg.mxu0
      %v1443 = vadd.f32 %v967, %v1381
      %v1444 = vadd.f32 %v970, %v1384
      %v1445 = vadd.f32 %v975, %v1389
      %v1446 = vadd.f32 %v978, %v1392
      %v1447 = vadd.f32 %v983, %v1397
      %v1448 = vadd.f32 %v986, %v1400
      %v1449 = vadd.f32 %v991, %v1405
      %v1450 = vadd.f32 %v994, %v1408
      %v1451 = vadd.f32 %v999, %v1413
      %v1452 = vadd.f32 %v1002, %v1416
      %v1453 = vadd.f32 %v1007, %v1421
      %v1454 = vadd.f32 %v1010, %v1424
      %v1455 = vadd.f32 %v1015, %v1429
      %v1456 = vadd.f32 %v1018, %v1432
      %v1457 = vadd.f32 %v1023, %v1437
      %v1458 = vadd.f32 %v1026, %v1440
      %v1459 = vld [vmem:[%s2] sm:$0x1]
      %v1461 = vlaneseq
      %v1462 = vshrl.u32 %v1461, 7
      %v1463 = vsub.s32 0, %v1462
      %v1464 = vrot.slane %v1459, %v1463
      %v1466 = vadd.f32 %v1443, %v1464
      %v1467 = vadd.f32 %v1444, %v1464
      %v1468 = vadd.f32 %v1445, %v1464
      %v1469 = vadd.f32 %v1446, %v1464
      %v1470 = vadd.f32 %v1447, %v1464
      %v1471 = vadd.f32 %v1448, %v1464
      %v1472 = vadd.f32 %v1449, %v1464
      %v1473 = vadd.f32 %v1450, %v1464
      %v1474 = vadd.f32 %v1451, %v1464
      %v1475 = vadd.f32 %v1452, %v1464
      %v1476 = vadd.f32 %v1453, %v1464
      %v1477 = vadd.f32 %v1454, %v1464
      %v1478 = vadd.f32 %v1455, %v1464
      %v1479 = vadd.f32 %v1456, %v1464
      %v1480 = vadd.f32 %v1457, %v1464
      %v1481 = vadd.f32 %v1458, %v1464
      %v1482 = vmax.f32 %v1466, 0.0
      %v1483 = vmax.f32 %v1467, 0.0
      %v1484 = vmax.f32 %v1468, 0.0
      %v1485 = vmax.f32 %v1469, 0.0
      %v1486 = vmax.f32 %v1470, 0.0
      %v1487 = vmax.f32 %v1471, 0.0
      %v1488 = vmax.f32 %v1472, 0.0
      %v1489 = vmax.f32 %v1473, 0.0
      %v1490 = vmax.f32 %v1474, 0.0
      %v1491 = vmax.f32 %v1475, 0.0
      %v1492 = vmax.f32 %v1476, 0.0
      %v1493 = vmax.f32 %v1477, 0.0
      %v1494 = vmax.f32 %v1478, 0.0
      %v1495 = vmax.f32 %v1479, 0.0
      %v1496 = vmax.f32 %v1480, 0.0
      %v1497 = vmax.f32 %v1481, 0.0
      %v1498 = vpack.c.bf16 %v1483, %v1482
      %v1499 = vpack.c.bf16 %v1485, %v1484
      %v1500 = vpack.c.bf16 %v1487, %v1486
      %v1501 = vpack.c.bf16 %v1489, %v1488
      %v1502 = vpack.c.bf16 %v1491, %v1490
      %v1503 = vpack.c.bf16 %v1493, %v1492
      %v1504 = vpack.c.bf16 %v1495, %v1494
      %v1505 = vpack.c.bf16 %v1497, %v1496
      %v1514 = vunpack.c.l.b16 %v1498
      %v1515 = vunpack.c.h.b16 %v1498
      %v1516 = vunpack.c.l.b16 %v1499
      %v1517 = vunpack.c.h.b16 %v1499
      %v1518 = vunpack.c.l.b16 %v1500
      %v1519 = vunpack.c.h.b16 %v1500
      %v1520 = vunpack.c.l.b16 %v1501
      %v1521 = vunpack.c.h.b16 %v1501
      %v1522 = vunpack.c.l.b16 %v1502
      %v1523 = vunpack.c.h.b16 %v1502
      %v1524 = vunpack.c.l.b16 %v1503
      %v1525 = vunpack.c.h.b16 %v1503
      %v1526 = vunpack.c.l.b16 %v1504
      %v1527 = vunpack.c.h.b16 %v1504
      %v1528 = vunpack.c.l.b16 %v1505
      %v1529 = vunpack.c.h.b16 %v1505
      %v1530 = vpack.c.b16 %v1514, %v1514
      %v1531 = vpack.c.b16 %v1515, %v1515
      %v1532 = vpack.c.b16 %v1516, %v1516
      %v1533 = vpack.c.b16 %v1517, %v1517
      %v1534 = vpack.c.b16 %v1518, %v1518
      %v1535 = vpack.c.b16 %v1519, %v1519
      %v1536 = vpack.c.b16 %v1520, %v1520
      %v1537 = vpack.c.b16 %v1521, %v1521
      %v1538 = vpack.c.b16 %v1522, %v1522
      %v1539 = vpack.c.b16 %v1523, %v1523
      %v1540 = vpack.c.b16 %v1524, %v1524
      %v1541 = vpack.c.b16 %v1525, %v1525
      %v1542 = vpack.c.b16 %v1526, %v1526
      %v1543 = vpack.c.b16 %v1527, %v1527
      %v1544 = vpack.c.b16 %v1528, %v1528
      %v1545 = vpack.c.b16 %v1529, %v1529
      %vm1562 = vcmask 125952
      %1563 = vst.msk [vmem:[%s194] sm:$0xf] %vm1562, %v1530
      %1564 = vst.msk [vmem:[%s194 + $0x4] sm:$0xf] %vm1562, %v1531
      %1565 = vst.msk [vmem:[%s194 + $0x8] sm:$0xf] %vm1562, %v1532
      %1566 = vst.msk [vmem:[%s194 + $0xc] sm:$0xf] %vm1562, %v1533
      %1567 = vst.msk [vmem:[%s194 + $0x10] sm:$0xf] %vm1562, %v1534
      %1568 = vst.msk [vmem:[%s194 + $0x14] sm:$0xf] %vm1562, %v1535
      %1569 = vst.msk [vmem:[%s194 + $0x18] sm:$0xf] %vm1562, %v1536
      %1570 = vst.msk [vmem:[%s194 + $0x1c] sm:$0xf] %vm1562, %v1537
      %1571 = vst.msk [vmem:[%s194 + $0x20] sm:$0xf] %vm1562, %v1538
      %1572 = vst.msk [vmem:[%s194 + $0x24] sm:$0xf] %vm1562, %v1539
      %1573 = vst.msk [vmem:[%s194 + $0x28] sm:$0xf] %vm1562, %v1540
      %1574 = vst.msk [vmem:[%s194 + $0x2c] sm:$0xf] %vm1562, %v1541
      %1575 = vst.msk [vmem:[%s194 + $0x30] sm:$0xf] %vm1562, %v1542
      %1576 = vst.msk [vmem:[%s194 + $0x34] sm:$0xf] %vm1562, %v1543
      %1577 = vst.msk [vmem:[%s194 + $0x38] sm:$0xf] %vm1562, %v1544
      %1578 = vst.msk [vmem:[%s194 + $0x3c] sm:$0xf] %vm1562, %v1545
      %s1579 = smul.u32 8, %s19
      %p1580 = scmp.lt.s32.totalorder %s18, 1
      %s1581 = scalar_select %p1580, %s18, 1
      %p1582 = scmp.lt.s32.totalorder %s1579, 15
      %s1583 = scalar_select %p1582, %s1579, 15
      %s1584 = smul.addr %s1583, 2
      %s1585 = smul.addr %s1581, 32
      %s1586 = sadd.s32 %s1584, %s1585
      %s1587 = smul.addr %s1586, 4
      %s1588 = scalar_lea.vmem %s3, %s1587
      // Predicated region
      $region33: #{bottleneck_forward.5} parent=31 // pred_check
        %p1589 = pneg %p114
      $region34: #{bottleneck_forward.5} parent=31 // pred_check_branch
        %1591 = sbr.rel (%p1589) target = $region36
      $region35: #{bottleneck_forward.5} parent=31 // pred_region
        %s1592 = smul.u32 8, %s19
      $region36: #{bottleneck_forward.5} parent=31 // pred_fallthru
        _
    $region32: #{bottleneck_forward.5} parent=5 // pred_fallthru
      _
    %p1593 = scmp.le.s32.totalorder 2, %s9
    // Predicated region
    $region37: #{bottleneck_forward.5} parent=5 // pred_check
      %p1594 = pneg %p1593
    $region38: #{bottleneck_forward.5} parent=5 // pred_check_branch
      %1596 = sbr.rel (%p1594) target = $region40
    $region39: #{bottleneck_forward.5} parent=5 // pred_region
      %s1597 = ssub.s32 %s9, 2
      // Predicated region
      $region41: #{bottleneck_forward.5} parent=39 // pred_check
        %p1598 = pneg %p120
      $region42: #{bottleneck_forward.5} parent=39 // pred_check_branch
        %1600 = sbr.rel (%p1598) target = $region44
      $region43: #{bottleneck_forward.5} parent=39 // pred_region
        %s1601 = smul.u32 8, %s21
        %p1602 = scmp.lt.s32.totalorder %s20, 1
        %s1603 = scalar_select %p1602, %s20, 1
        %p1604 = scmp.lt.s32.totalorder %s1601, 15
        %s1605 = scalar_select %p1604, %s1601, 15
        %s1606 = smul.addr %s1605, 2
        %s1607 = smul.addr %s1603, 32
        %s1608 = sadd.s32 %s1606, %s1607
        %s1609 = smul.addr %s1608, 4
        %s1610 = scalar_lea.vmem %s3, %s1609
      $region44: #{bottleneck_forward.5} parent=39 // pred_fallthru
        _
    $region40: #{bottleneck_forward.5} parent=5 // pred_fallthru
      _
  $region6: #{bottleneck_forward.5} parent=0 // loop_footer
    %s13 = sadd.s32 1, %s9
  $region7: #{bottleneck_forward.5} parent=0 // loop_footer_branch
    %8 = sbr.rel target = $region3
  $region8: #{bottleneck_forward.5} parent=0 // loop_exit
    _

// kernel: bottleneck_forward.7
$region0: #{bottleneck_forward.7}
  #allocation0 [shape = 'u32[]', space=smem, size = 0x4, offset = 0x4, fixed_abs, tag = 'smem constant byte address 0x4 - core index']
  #allocation1 [shape = 'u32[144,128]{1,0:T(1,128)}', space=vmem, size = 0x12000, scoped, tag = 'internal scratch']
  %s0 = inlined_call_operand.vmem [shape: bf16[2,256,64], index: 0, kind: input, shape index: {}]
  %s1 = inlined_call_operand.vmem [shape: bf16[2,256,64], index: 1, kind: input, shape index: {}]
  %s2 = inlined_call_operand.vmem [shape: f32[2,1,64], index: 2, kind: input, shape index: {}]
  %s3 = inlined_call_operand.vmem [shape: bf16[2,256,64], index: 3, kind: output, shape index: {}]
  %s4 = sld [smem:[#allocation0]]
  $region45: #{bottleneck_forward.7} parent=0
    _
  %s6 = ssub.s32 1, %s4
  %s7 = scalar_select 0, %s6, %s4
  loop: start=0, step=1, limit=4
  $region2: #{bottleneck_forward.7} parent=0 // loop_pre_header
    _
  $region3: #{bottleneck_forward.7} parent=0 // loop_header
    %s9 = sphi 0, %s13
    %p10 = scmp.ge.s32.totalorder %s9, 4
    %s16 = sphi 0, %s28
    %s17 = sphi 0, %s24
    %s18 = sphi 0, %s16
    %s19 = sphi 0, %s17
    %s20 = sphi 0, %s18
    %s21 = sphi 0, %s19
    %s33 = sphi 0, %s35
    %s36 = sphi 0, %s33
    %s37 = sphi 0, %s36
    %s53 = sphi 0, %s37
    %s61 = sphi 0, %s63
    %s64 = sphi 0, %s61
    %s65 = sphi 0, %s64
    %s81 = sphi 0, %s65
    %s87 = sphi 0, %s89
    %s90 = sphi 0, %s87
    %s91 = sphi 0, %s90
    %s107 = sphi 0, %s91
    %s115 = sphi 0, %s117
    %s118 = sphi 0, %s115
    %s119 = sphi 0, %s118
    %s135 = sphi 0, %s119
  $region4: #{bottleneck_forward.7} parent=0 // loop_header_branch
    %12 = sbr.rel (%p10) target = $region8
  $region5: #{bottleneck_forward.7} parent=0 // loop_body
    %s14 = ssub.s32 %s9, 1
    %s15 = ssub.s32 %s9, 2
    %s22 = sadd.s32 1, %s17
    %p23 = scmp.ge.s32.totalorder %s22, 1
    %s24 = scalar_select %p23, 0, %s22
    %s25 = sadd.s32 1, %s16
    %s26 = scalar_select %p23, %s25, %s16
    %p27 = scmp.ge.s32.totalorder %s26, 2
    %s28 = scalar_select %p27, 0, %s26
    %s29 = ssub.s32 %s16, %s28
    %s30 = ssub.s32 %s17, %s24
    %s31 = sor.u32 %s29, %s30
    %p32 = scmp.eq.s32.totalorder %s31, 0
    %s34 = sadd.s32 %s33, 1
    %s35 = scalar_select %p32, %s33, %s34
    %p38 = pneg %p32
    %p39 = scmp.eq.s32.totalorder %s9, 1
    %p40 = por %p38, %p39
    %p41 = scmp.ne.s32.totalorder %s33, %s36
    %p42 = scmp.eq.s32.totalorder %s9, 0
    %p43 = por %p41, %p42
    %p44 = scmp.ne.s32.totalorder %s33, %s36
    %p45 = scmp.eq.s32.totalorder %s14, 1
    %p46 = por %p44, %p45
    %p47 = scmp.ne.s32.totalorder %s36, %s37
    %p48 = scmp.eq.s32.totalorder %s14, 0
    %p49 = por %p47, %p48
    %p50 = scmp.ne.s32.totalorder %s36, %s37
    %p51 = scmp.eq.s32.totalorder %s15, 1
    %p52 = por %p50, %p51
    %p54 = scmp.ne.s32.totalorder %s37, %s53
    %p55 = scmp.eq.s32.totalorder %s15, 0
    %p56 = por %p54, %p55
    %s57 = ssub.s32 %s16, %s28
    %s58 = ssub.s32 %s17, %s24
    %s59 = sor.u32 %s57, %s58
    %p60 = scmp.eq.s32.totalorder %s59, 0
    %s62 = sadd.s32 %s61, 1
    %s63 = scalar_select %p60, %s61, %s62
    %p66 = pneg %p60
    %p67 = scmp.eq.s32.totalorder %s9, 1
    %p68 = por %p66, %p67
    %p69 = scmp.ne.s32.totalorder %s61, %s64
    %p70 = scmp.eq.s32.totalorder %s9, 0
    %p71 = por %p69, %p70
    %p72 = scmp.ne.s32.totalorder %s61, %s64
    %p73 = scmp.eq.s32.totalorder %s14, 1
    %p74 = por %p72, %p73
    %p75 = scmp.ne.s32.totalorder %s64, %s65
    %p76 = scmp.eq.s32.totalorder %s14, 0
    %p77 = por %p75, %p76
    %p78 = scmp.ne.s32.totalorder %s64, %s65
    %p79 = scmp.eq.s32.totalorder %s15, 1
    %p80 = por %p78, %p79
    %p82 = scmp.ne.s32.totalorder %s65, %s81
    %p83 = scmp.eq.s32.totalorder %s15, 0
    %p84 = por %p82, %p83
    %s85 = ssub.s32 %s16, %s28
    %p86 = scmp.eq.s32.totalorder %s85, 0
    %s88 = sadd.s32 %s87, 1
    %s89 = scalar_select %p86, %s87, %s88
    %p92 = pneg %p86
    %p93 = scmp.eq.s32.totalorder %s9, 1
    %p94 = por %p92, %p93
    %p95 = scmp.ne.s32.totalorder %s87, %s90
    %p96 = scmp.eq.s32.totalorder %s9, 0
    %p97 = por %p95, %p96
    %p98 = scmp.ne.s32.totalorder %s87, %s90
    %p99 = scmp.eq.s32.totalorder %s14, 1
    %p100 = por %p98, %p99
    %p101 = scmp.ne.s32.totalorder %s90, %s91
    %p102 = scmp.eq.s32.totalorder %s14, 0
    %p103 = por %p101, %p102
    %p104 = scmp.ne.s32.totalorder %s90, %s91
    %p105 = scmp.eq.s32.totalorder %s15, 1
    %p106 = por %p104, %p105
    %p108 = scmp.ne.s32.totalorder %s91, %s107
    %p109 = scmp.eq.s32.totalorder %s15, 0
    %p110 = por %p108, %p109
    %s111 = ssub.s32 %s16, %s28
    %s112 = ssub.s32 %s17, %s24
    %s113 = sor.u32 %s111, %s112
    %p114 = scmp.eq.s32.totalorder %s113, 0
    %s116 = sadd.s32 %s115, 1
    %s117 = scalar_select %p114, %s115, %s116
    %p120 = pneg %p114
    %p121 = scmp.eq.s32.totalorder %s9, 1
    %p122 = por %p120, %p121
    %p123 = scmp.ne.s32.totalorder %s115, %s118
    %p124 = scmp.eq.s32.totalorder %s9, 0
    %p125 = por %p123, %p124
    %p126 = scmp.ne.s32.totalorder %s115, %s118
    %p127 = scmp.eq.s32.totalorder %s14, 1
    %p128 = por %p126, %p127
    %p129 = scmp.ne.s32.totalorder %s118, %s119
    %p130 = scmp.eq.s32.totalorder %s14, 0
    %p131 = por %p129, %p130
    %p132 = scmp.ne.s32.totalorder %s118, %s119
    %p133 = scmp.eq.s32.totalorder %s15, 1
    %p134 = por %p132, %p133
    %p136 = scmp.ne.s32.totalorder %s119, %s135
    %p137 = scmp.eq.s32.totalorder %s15, 0
    %p138 = por %p136, %p137
    %p139 = scmp.le.s32.totalorder 1, %s9
    %p140 = scmp.lt.s32.totalorder %s9, 3
    %p141 = pnand %p139, %p140
    %p142 = pneg %p141
    // Predicated region
    $region9: #{bottleneck_forward.7} parent=5 // pred_check
      _
    $region10: #{bottleneck_forward.7} parent=5 // pred_check_branch
      %144 = sbr.rel (%p141) target = $region12
    $region11: #{bottleneck_forward.7} parent=5 // pred_region
      %s145 = ssub.s32 %s9, 1
    $region12: #{bottleneck_forward.7} parent=5 // pred_fallthru
      _
    %p146 = scmp.lt.s32.totalorder %s9, 2
    // Predicated region
    $region13: #{bottleneck_forward.7} parent=5 // pred_check
      %p147 = pneg %p146
    $region14: #{bottleneck_forward.7} parent=5 // pred_check_branch
      %149 = sbr.rel (%p147) target = $region16
    $region15: #{bottleneck_forward.7} parent=5 // pred_region
      // Predicated region
      $region17: #{bottleneck_forward.7} parent=15 // pred_check
        %p150 = pneg %p43
      $region18: #{bottleneck_forward.7} parent=15 // pred_check_branch
        %152 = sbr.rel (%p150) target = $region20
      $region19: #{bottleneck_forward.7} parent=15 // pred_region
        %s153 = smul.u32 32, %s17
        %p154 = scmp.lt.s32.totalorder %s16, 1
        %s155 = scalar_select %p154, %s16, 1
        %p156 = scmp.lt.s32.totalorder %s153, 31
        %s157 = scalar_select %p156, %s153, 31
        %s158 = smul.addr %s155, 32
        %s159 = sadd.s32 %s157, %s158
        %s160 = smul.addr %s159, 4
        %s161 = scalar_lea.vmem %s0, %s160
        %s162 = smul.u32 32, %s17
      $region20: #{bottleneck_forward.7} parent=15 // pred_fallthru
        _
      // Predicated region
      $region21: #{bottleneck_forward.7} parent=15 // pred_check
        %p163 = pneg %p71
      $region22: #{bottleneck_forward.7} parent=15 // pred_check_branch
        %165 = sbr.rel (%p163) target = $region24
      $region23: #{bottleneck_forward.7} parent=15 // pred_region
        %s166 = smul.u32 32, %s17
        %p167 = scmp.lt.s32.totalorder %s16, 1
        %s168 = scalar_select %p167, %s16, 1
        %p169 = scmp.lt.s32.totalorder %s166, 31
        %s170 = scalar_select %p169, %s166, 31
        %s171 = smul.addr %s168, 32
        %s172 = sadd.s32 %s170, %s171
        %s173 = smul.addr %s172, 4
        %s174 = scalar_lea.vmem %s1, %s173
        %s175 = smul.u32 32, %s17
      $region24: #{bottleneck_forward.7} parent=15 // pred_fallthru
        _
      // Predicated region
      $region25: #{bottleneck_forward.7} parent=15 // pred_check
        %p176 = pneg %p97
      $region26: #{bottleneck_forward.7} parent=15 // pred_check_branch
        %178 = sbr.rel (%p176) target = $region28
      $region27: #{bottleneck_forward.7} parent=15 // pred_region
        %p179 = scmp.lt.s32.totalorder %s16, 1
        %s180 = scalar_select %p179, %s16, 1
        %s181 = scalar_lea.vmem %s2, %s180
      $region28: #{bottleneck_forward.7} parent=15 // pred_fallthru
        _
    $region16: #{bottleneck_forward.7} parent=5 // pred_fallthru
      _
    %p182 = scmp.le.s32.totalorder 1, %s9
    %p183 = scmp.lt.s32.totalorder %s9, 3
    %p184 = pnand %p182, %p183
    %p185 = pneg %p184
    // Predicated region
    $region29: #{bottleneck_forward.7} parent=5 // pred_check
      _
    $region30: #{bottleneck_forward.7} parent=5 // pred_check_branch
      %187 = sbr.rel (%p184) target = $region32
    $region31: #{bottleneck_forward.7} parent=5 // pred_region
      %s188 = ssub.s32 %s9, 1
      %s189 = smul.u32 32, %s19
      %p190 = scmp.lt.s32.totalorder %s18, 1
      %s191 = scalar_select %p190, %s18, 1
      %p192 = scmp.lt.s32.totalorder %s189, 31
      %s193 = scalar_select %p192, %s189, 31
      %s194 = smul.addr %s191, 32
      %s195 = sadd.s32 %s193, %s194
      %s196 = smul.addr %s195, 4
      %s197 = scalar_lea.vmem %s0, %s196
      %p198 = pneg %p49
      %p199 = pneg %p46
      %s200 = smul.u32 32, %s19
      %p201 = scmp.lt.s32.totalorder %s18, 1
      %s202 = scalar_select %p201, %s18, 1
      %p203 = scmp.lt.s32.totalorder %s200, 31
      %s204 = scalar_select %p203, %s200, 31
      %s205 = smul.addr %s202, 32
      %s206 = sadd.s32 %s204, %s205
      %s207 = smul.addr %s206, 4
      %s208 = scalar_lea.vmem %s1, %s207
      %p209 = pneg %p77
      %p210 = pneg %p74
      %p211 = scmp.lt.s32.totalorder %s18, 1
      %s212 = scalar_select %p211, %s18, 1
      %s213 = scalar_lea.vmem %s2, %s212
      %p214 = pneg %p103
      %p215 = pneg %p100
      %p216 = pneg %p131
      %p217 = pneg %p128
      %s218 = smul.u32 32, %s19
      %p219 = scmp.lt.s32.totalorder %s18, 1
      %s220 = scalar_select %p219, %s18, 1
      %p221 = scmp.lt.s32.totalorder %s218, 31
      %s222 = scalar_select %p221, %s218, 31
      %s223 = smul.addr %s220, 32
      %s224 = sadd.s32 %s222, %s223
      %s225 = smul.addr %s224, 4
      %s226 = scalar_lea.vmem %s3, %s225
      %s227 = smul.u32 32, %s19
      %p228 = scmp.lt.s32.totalorder %s18, 1
      %s229 = scalar_select %p228, %s18, 1
      %p230 = scmp.lt.s32.totalorder %s227, 31
      %s231 = scalar_select %p230, %s227, 31
      %s232 = smul.addr %s229, 32
      %s233 = sadd.s32 %s231, %s232
      %s234 = smul.addr %s233, 4
      %s235 = scalar_lea.vmem %s0, %s234
      %s236 = smul.u32 32, %s19
      %s237 = smul.u32 32, %s19
      %p238 = scmp.lt.s32.totalorder %s18, 1
      %s239 = scalar_select %p238, %s18, 1
      %p240 = scmp.lt.s32.totalorder %s237, 31
      %s241 = scalar_select %p240, %s237, 31
      %s242 = smul.addr %s239, 32
      %s243 = sadd.s32 %s241, %s242
      %s244 = smul.addr %s243, 4
      %s245 = scalar_lea.vmem %s1, %s244
      %s246 = smul.u32 32, %s19
      %p247 = scmp.lt.s32.totalorder %s18, 1
      %s248 = scalar_select %p247, %s18, 1
      %s249 = scalar_lea.vmem %s2, %s248
      %s250 = smul.u32 32, %s19
      %p251 = scmp.lt.s32.totalorder %s18, 1
      %s252 = scalar_select %p251, %s18, 1
      %p253 = scmp.lt.s32.totalorder %s250, 31
      %s254 = scalar_select %p253, %s250, 31
      %s255 = smul.addr %s252, 32
      %s256 = sadd.s32 %s254, %s255
      %s257 = smul.addr %s256, 4
      %s258 = scalar_lea.vmem %s3, %s257
      %s259 = smul.u32 32, %s19
      %v260 = vld [vmem:[%s235] sm:$0xf]
      %v261 = vld [vmem:[%s235 + $0x4] sm:$0xf]
      %v262 = vld [vmem:[%s235 + $0x8] sm:$0xf]
      %v263 = vld [vmem:[%s235 + $0xc] sm:$0xf]
      %v264 = vld [vmem:[%s235 + $0x10] sm:$0xf]
      %v265 = vld [vmem:[%s235 + $0x14] sm:$0xf]
      %v266 = vld [vmem:[%s235 + $0x18] sm:$0xf]
      %v267 = vld [vmem:[%s235 + $0x1c] sm:$0xf]
      %v268 = vld [vmem:[%s235 + $0x20] sm:$0xf]
      %v269 = vld [vmem:[%s235 + $0x24] sm:$0xf]
      %v270 = vld [vmem:[%s235 + $0x28] sm:$0xf]
      %v271 = vld [vmem:[%s235 + $0x2c] sm:$0xf]
      %v272 = vld [vmem:[%s235 + $0x30] sm:$0xf]
      %v273 = vld [vmem:[%s235 + $0x34] sm:$0xf]
      %v274 = vld [vmem:[%s235 + $0x38] sm:$0xf]
      %v275 = vld [vmem:[%s235 + $0x3c] sm:$0xf]
      %v276 = vld [vmem:[%s235 + $0x40] sm:$0xf]
      %v277 = vld [vmem:[%s235 + $0x44] sm:$0xf]
      %v278 = vld [vmem:[%s235 + $0x48] sm:$0xf]
      %v279 = vld [vmem:[%s235 + $0x4c] sm:$0xf]
      %v280 = vld [vmem:[%s235 + $0x50] sm:$0xf]
      %v281 = vld [vmem:[%s235 + $0x54] sm:$0xf]
      %v282 = vld [vmem:[%s235 + $0x58] sm:$0xf]
      %v283 = vld [vmem:[%s235 + $0x5c] sm:$0xf]
      %v284 = vld [vmem:[%s235 + $0x60] sm:$0xf]
      %v285 = vld [vmem:[%s235 + $0x64] sm:$0xf]
      %v286 = vld [vmem:[%s235 + $0x68] sm:$0xf]
      %v287 = vld [vmem:[%s235 + $0x6c] sm:$0xf]
      %v288 = vld [vmem:[%s235 + $0x70] sm:$0xf]
      %v289 = vld [vmem:[%s235 + $0x74] sm:$0xf]
      %v290 = vld [vmem:[%s235 + $0x78] sm:$0xf]
      %v291 = vld [vmem:[%s235 + $0x7c] sm:$0xf]
      %v292 = vunpack.c.l.bf16 %v260
      %v293 = vunpack.c.l.bf16 %v261
      %v294 = vunpack.c.l.bf16 %v262
      %v295 = vunpack.c.l.bf16 %v263
      %v296 = vunpack.c.l.bf16 %v264
      %v297 = vunpack.c.l.bf16 %v265
      %v298 = vunpack.c.l.bf16 %v266
      %v299 = vunpack.c.l.bf16 %v267
      %v300 = vunpack.c.l.bf16 %v268
      %v301 = vunpack.c.l.bf16 %v269
      %v302 = vunpack.c.l.bf16 %v270
      %v303 = vunpack.c.l.bf16 %v271
      %v304 = vunpack.c.l.bf16 %v272
      %v305 = vunpack.c.l.bf16 %v273
      %v306 = vunpack.c.l.bf16 %v274
      %v307 = vunpack.c.l.bf16 %v275
      %v308 = vunpack.c.l.bf16 %v276
      %v309 = vunpack.c.l.bf16 %v277
      %v310 = vunpack.c.l.bf16 %v278
      %v311 = vunpack.c.l.bf16 %v279
      %v312 = vunpack.c.l.bf16 %v280
      %v313 = vunpack.c.l.bf16 %v281
      %v314 = vunpack.c.l.bf16 %v282
      %v315 = vunpack.c.l.bf16 %v283
      %v316 = vunpack.c.l.bf16 %v284
      %v317 = vunpack.c.l.bf16 %v285
      %v318 = vunpack.c.l.bf16 %v286
      %v319 = vunpack.c.l.bf16 %v287
      %v320 = vunpack.c.l.bf16 %v288
      %v321 = vunpack.c.l.bf16 %v289
      %v322 = vunpack.c.l.bf16 %v290
      %v323 = vunpack.c.l.bf16 %v291
      %v324 = vld [vmem:[%s249] sm:$0x1]
      %v326 = vlaneseq
      %v327 = vshrl.u32 %v326, 7
      %v328 = vsub.s32 0, %v327
      %v329 = vrot.slane %v324, %v328
      %v331 = vmul.f32 %v292, %v329
      %v332 = vmul.f32 %v293, %v329
      %v333 = vmul.f32 %v294, %v329
      %v334 = vmul.f32 %v295, %v329
      %v335 = vmul.f32 %v296, %v329
      %v336 = vmul.f32 %v297, %v329
      %v337 = vmul.f32 %v298, %v329
      %v338 = vmul.f32 %v299, %v329
      %v339 = vmul.f32 %v300, %v329
      %v340 = vmul.f32 %v301, %v329
      %v341 = vmul.f32 %v302, %v329
      %v342 = vmul.f32 %v303, %v329
      %v343 = vmul.f32 %v304, %v329
      %v344 = vmul.f32 %v305, %v329
      %v345 = vmul.f32 %v306, %v329
      %v346 = vmul.f32 %v307, %v329
      %v347 = vmul.f32 %v308, %v329
      %v348 = vmul.f32 %v309, %v329
      %v349 = vmul.f32 %v310, %v329
      %v350 = vmul.f32 %v311, %v329
      %v351 = vmul.f32 %v312, %v329
      %v352 = vmul.f32 %v313, %v329
      %v353 = vmul.f32 %v314, %v329
      %v354 = vmul.f32 %v315, %v329
      %v355 = vmul.f32 %v316, %v329
      %v356 = vmul.f32 %v317, %v329
      %v357 = vmul.f32 %v318, %v329
      %v358 = vmul.f32 %v319, %v329
      %v359 = vmul.f32 %v320, %v329
      %v360 = vmul.f32 %v321, %v329
      %v361 = vmul.f32 %v322, %v329
      %v362 = vmul.f32 %v323, %v329
      %v363 = vld [vmem:[%s245] sm:$0xf]
      %v364 = vld [vmem:[%s245 + $0x4] sm:$0xf]
      %v365 = vld [vmem:[%s245 + $0x8] sm:$0xf]
      %v366 = vld [vmem:[%s245 + $0xc] sm:$0xf]
      %v367 = vld [vmem:[%s245 + $0x10] sm:$0xf]
      %v368 = vld [vmem:[%s245 + $0x14] sm:$0xf]
      %v369 = vld [vmem:[%s245 + $0x18] sm:$0xf]
      %v370 = vld [vmem:[%s245 + $0x1c] sm:$0xf]
      %v371 = vld [vmem:[%s245 + $0x20] sm:$0xf]
      %v372 = vld [vmem:[%s245 + $0x24] sm:$0xf]
      %v373 = vld [vmem:[%s245 + $0x28] sm:$0xf]
      %v374 = vld [vmem:[%s245 + $0x2c] sm:$0xf]
      %v375 = vld [vmem:[%s245 + $0x30] sm:$0xf]
      %v376 = vld [vmem:[%s245 + $0x34] sm:$0xf]
      %v377 = vld [vmem:[%s245 + $0x38] sm:$0xf]
      %v378 = vld [vmem:[%s245 + $0x3c] sm:$0xf]
      %v379 = vld [vmem:[%s245 + $0x40] sm:$0xf]
      %v380 = vld [vmem:[%s245 + $0x44] sm:$0xf]
      %v381 = vld [vmem:[%s245 + $0x48] sm:$0xf]
      %v382 = vld [vmem:[%s245 + $0x4c] sm:$0xf]
      %v383 = vld [vmem:[%s245 + $0x50] sm:$0xf]
      %v384 = vld [vmem:[%s245 + $0x54] sm:$0xf]
      %v385 = vld [vmem:[%s245 + $0x58] sm:$0xf]
      %v386 = vld [vmem:[%s245 + $0x5c] sm:$0xf]
      %v387 = vld [vmem:[%s245 + $0x60] sm:$0xf]
      %v388 = vld [vmem:[%s245 + $0x64] sm:$0xf]
      %v389 = vld [vmem:[%s245 + $0x68] sm:$0xf]
      %v390 = vld [vmem:[%s245 + $0x6c] sm:$0xf]
      %v391 = vld [vmem:[%s245 + $0x70] sm:$0xf]
      %v392 = vld [vmem:[%s245 + $0x74] sm:$0xf]
      %v393 = vld [vmem:[%s245 + $0x78] sm:$0xf]
      %v394 = vld [vmem:[%s245 + $0x7c] sm:$0xf]
      %v395 = vunpack.c.l.bf16 %v363
      %v396 = vunpack.c.l.bf16 %v364
      %v397 = vunpack.c.l.bf16 %v365
      %v398 = vunpack.c.l.bf16 %v366
      %v399 = vunpack.c.l.bf16 %v367
      %v400 = vunpack.c.l.bf16 %v368
      %v401 = vunpack.c.l.bf16 %v369
      %v402 = vunpack.c.l.bf16 %v370
      %v403 = vunpack.c.l.bf16 %v371
      %v404 = vunpack.c.l.bf16 %v372
      %v405 = vunpack.c.l.bf16 %v373
      %v406 = vunpack.c.l.bf16 %v374
      %v407 = vunpack.c.l.bf16 %v375
      %v408 = vunpack.c.l.bf16 %v376
      %v409 = vunpack.c.l.bf16 %v377
      %v410 = vunpack.c.l.bf16 %v378
      %v411 = vunpack.c.l.bf16 %v379
      %v412 = vunpack.c.l.bf16 %v380
      %v413 = vunpack.c.l.bf16 %v381
      %v414 = vunpack.c.l.bf16 %v382
      %v415 = vunpack.c.l.bf16 %v383
      %v416 = vunpack.c.l.bf16 %v384
      %v417 = vunpack.c.l.bf16 %v385
      %v418 = vunpack.c.l.bf16 %v386
      %v419 = vunpack.c.l.bf16 %v387
      %v420 = vunpack.c.l.bf16 %v388
      %v421 = vunpack.c.l.bf16 %v389
      %v422 = vunpack.c.l.bf16 %v390
      %v423 = vunpack.c.l.bf16 %v391
      %v424 = vunpack.c.l.bf16 %v392
      %v425 = vunpack.c.l.bf16 %v393
      %v426 = vunpack.c.l.bf16 %v394
      %v427 = vadd.f32 %v331, %v395
      %v428 = vadd.f32 %v332, %v396
      %v429 = vadd.f32 %v333, %v397
      %v430 = vadd.f32 %v334, %v398
      %v431 = vadd.f32 %v335, %v399
      %v432 = vadd.f32 %v336, %v400
      %v433 = vadd.f32 %v337, %v401
      %v434 = vadd.f32 %v338, %v402
      %v435 = vadd.f32 %v339, %v403
      %v436 = vadd.f32 %v340, %v404
      %v437 = vadd.f32 %v341, %v405
      %v438 = vadd.f32 %v342, %v406
      %v439 = vadd.f32 %v343, %v407
      %v440 = vadd.f32 %v344, %v408
      %v441 = vadd.f32 %v345, %v409
      %v442 = vadd.f32 %v346, %v410
      %v443 = vadd.f32 %v347, %v411
      %v444 = vadd.f32 %v348, %v412
      %v445 = vadd.f32 %v349, %v413
      %v446 = vadd.f32 %v350, %v414
      %v447 = vadd.f32 %v351, %v415
      %v448 = vadd.f32 %v352, %v416
      %v449 = vadd.f32 %v353, %v417
      %v450 = vadd.f32 %v354, %v418
      %v451 = vadd.f32 %v355, %v419
      %v452 = vadd.f32 %v356, %v420
      %v453 = vadd.f32 %v357, %v421
      %v454 = vadd.f32 %v358, %v422
      %v455 = vadd.f32 %v359, %v423
      %v456 = vadd.f32 %v360, %v424
      %v457 = vadd.f32 %v361, %v425
      %v458 = vadd.f32 %v362, %v426
      %v459 = vmax.f32 %v427, 0.0
      %v460 = vmax.f32 %v428, 0.0
      %v461 = vmax.f32 %v429, 0.0
      %v462 = vmax.f32 %v430, 0.0
      %v463 = vmax.f32 %v431, 0.0
      %v464 = vmax.f32 %v432, 0.0
      %v465 = vmax.f32 %v433, 0.0
      %v466 = vmax.f32 %v434, 0.0
      %v467 = vmax.f32 %v435, 0.0
      %v468 = vmax.f32 %v436, 0.0
      %v469 = vmax.f32 %v437, 0.0
      %v470 = vmax.f32 %v438, 0.0
      %v471 = vmax.f32 %v439, 0.0
      %v472 = vmax.f32 %v440, 0.0
      %v473 = vmax.f32 %v441, 0.0
      %v474 = vmax.f32 %v442, 0.0
      %v475 = vmax.f32 %v443, 0.0
      %v476 = vmax.f32 %v444, 0.0
      %v477 = vmax.f32 %v445, 0.0
      %v478 = vmax.f32 %v446, 0.0
      %v479 = vmax.f32 %v447, 0.0
      %v480 = vmax.f32 %v448, 0.0
      %v481 = vmax.f32 %v449, 0.0
      %v482 = vmax.f32 %v450, 0.0
      %v483 = vmax.f32 %v451, 0.0
      %v484 = vmax.f32 %v452, 0.0
      %v485 = vmax.f32 %v453, 0.0
      %v486 = vmax.f32 %v454, 0.0
      %v487 = vmax.f32 %v455, 0.0
      %v488 = vmax.f32 %v456, 0.0
      %v489 = vmax.f32 %v457, 0.0
      %v490 = vmax.f32 %v458, 0.0
      %v491 = vpack.c.bf16 %v460, %v459
      %v492 = vpack.c.bf16 %v462, %v461
      %v493 = vpack.c.bf16 %v464, %v463
      %v494 = vpack.c.bf16 %v466, %v465
      %v495 = vpack.c.bf16 %v468, %v467
      %v496 = vpack.c.bf16 %v470, %v469
      %v497 = vpack.c.bf16 %v472, %v471
      %v498 = vpack.c.bf16 %v474, %v473
      %v499 = vpack.c.bf16 %v476, %v475
      %v500 = vpack.c.bf16 %v478, %v477
      %v501 = vpack.c.bf16 %v480, %v479
      %v502 = vpack.c.bf16 %v482, %v481
      %v503 = vpack.c.bf16 %v484, %v483
      %v504 = vpack.c.bf16 %v486, %v485
      %v505 = vpack.c.bf16 %v488, %v487
      %v506 = vpack.c.bf16 %v490, %v489
      %v523 = vunpack.c.l.b16 %v491
      %v524 = vunpack.c.h.b16 %v491
      %v525 = vunpack.c.l.b16 %v492
      %v526 = vunpack.c.h.b16 %v492
      %v527 = vunpack.c.l.b16 %v493
      %v528 = vunpack.c.h.b16 %v493
      %v529 = vunpack.c.l.b16 %v494
      %v530 = vunpack.c.h.b16 %v494
      %v531 = vunpack.c.l.b16 %v495
      %v532 = vunpack.c.h.b16 %v495
      %v533 = vunpack.c.l.b16 %v496
      %v534 = vunpack.c.h.b16 %v496
      %v535 = vunpack.c.l.b16 %v497
      %v536 = vunpack.c.h.b16 %v497
      %v537 = vunpack.c.l.b16 %v498
      %v538 = vunpack.c.h.b16 %v498
      %v539 = vunpack.c.l.b16 %v499
      %v540 = vunpack.c.h.b16 %v499
      %v541 = vunpack.c.l.b16 %v500
      %v542 = vunpack.c.h.b16 %v500
      %v543 = vunpack.c.l.b16 %v501
      %v544 = vunpack.c.h.b16 %v501
      %v545 = vunpack.c.l.b16 %v502
      %v546 = vunpack.c.h.b16 %v502
      %v547 = vunpack.c.l.b16 %v503
      %v548 = vunpack.c.h.b16 %v503
      %v549 = vunpack.c.l.b16 %v504
      %v550 = vunpack.c.h.b16 %v504
      %v551 = vunpack.c.l.b16 %v505
      %v552 = vunpack.c.h.b16 %v505
      %v553 = vunpack.c.l.b16 %v506
      %v554 = vunpack.c.h.b16 %v506
      %v555 = vpack.c.b16 %v523, %v523
      %v556 = vpack.c.b16 %v524, %v524
      %v557 = vpack.c.b16 %v525, %v525
      %v558 = vpack.c.b16 %v526, %v526
      %v559 = vpack.c.b16 %v527, %v527
      %v560 = vpack.c.b16 %v528, %v528
      %v561 = vpack.c.b16 %v529, %v529
      %v562 = vpack.c.b16 %v530, %v530
      %v563 = vpack.c.b16 %v531, %v531
      %v564 = vpack.c.b16 %v532, %v532
      %v565 = vpack.c.b16 %v533, %v533
      %v566 = vpack.c.b16 %v534, %v534
      %v567 = vpack.c.b16 %v535, %v535
      %v568 = vpack.c.b16 %v536, %v536
      %v569 = vpack.c.b16 %v537, %v537
      %v570 = vpack.c.b16 %v538, %v538
      %v571 = vpack.c.b16 %v539, %v539
      %v572 = vpack.c.b16 %v540, %v540
      %v573 = vpack.c.b16 %v541, %v541
      %v574 = vpack.c.b16 %v542, %v542
      %v575 = vpack.c.b16 %v543, %v543
      %v576 = vpack.c.b16 %v544, %v544
      %v577 = vpack.c.b16 %v545, %v545
      %v578 = vpack.c.b16 %v546, %v546
      %v579 = vpack.c.b16 %v547, %v547
      %v580 = vpack.c.b16 %v548, %v548
      %v581 = vpack.c.b16 %v549, %v549
      %v582 = vpack.c.b16 %v550, %v550
      %v583 = vpack.c.b16 %v551, %v551
      %v584 = vpack.c.b16 %v552, %v552
      %v585 = vpack.c.b16 %v553, %v553
      %v586 = vpack.c.b16 %v554, %v554
      %vm619 = vcmask 519168
      %620 = vst.msk [vmem:[%s258] sm:$0xf] %vm619, %v555
      %621 = vst.msk [vmem:[%s258 + $0x4] sm:$0xf] %vm619, %v556
      %622 = vst.msk [vmem:[%s258 + $0x8] sm:$0xf] %vm619, %v557
      %623 = vst.msk [vmem:[%s258 + $0xc] sm:$0xf] %vm619, %v558
      %624 = vst.msk [vmem:[%s258 + $0x10] sm:$0xf] %vm619, %v559
      %625 = vst.msk [vmem:[%s258 + $0x14] sm:$0xf] %vm619, %v560
      %626 = vst.msk [vmem:[%s258 + $0x18] sm:$0xf] %vm619, %v561
      %627 = vst.msk [vmem:[%s258 + $0x1c] sm:$0xf] %vm619, %v562
      %628 = vst.msk [vmem:[%s258 + $0x20] sm:$0xf] %vm619, %v563
      %629 = vst.msk [vmem:[%s258 + $0x24] sm:$0xf] %vm619, %v564
      %630 = vst.msk [vmem:[%s258 + $0x28] sm:$0xf] %vm619, %v565
      %631 = vst.msk [vmem:[%s258 + $0x2c] sm:$0xf] %vm619, %v566
      %632 = vst.msk [vmem:[%s258 + $0x30] sm:$0xf] %vm619, %v567
      %633 = vst.msk [vmem:[%s258 + $0x34] sm:$0xf] %vm619, %v568
      %634 = vst.msk [vmem:[%s258 + $0x38] sm:$0xf] %vm619, %v569
      %635 = vst.msk [vmem:[%s258 + $0x3c] sm:$0xf] %vm619, %v570
      %636 = vst.msk [vmem:[%s258 + $0x40] sm:$0xf] %vm619, %v571
      %637 = vst.msk [vmem:[%s258 + $0x44] sm:$0xf] %vm619, %v572
      %638 = vst.msk [vmem:[%s258 + $0x48] sm:$0xf] %vm619, %v573
      %639 = vst.msk [vmem:[%s258 + $0x4c] sm:$0xf] %vm619, %v574
      %640 = vst.msk [vmem:[%s258 + $0x50] sm:$0xf] %vm619, %v575
      %641 = vst.msk [vmem:[%s258 + $0x54] sm:$0xf] %vm619, %v576
      %642 = vst.msk [vmem:[%s258 + $0x58] sm:$0xf] %vm619, %v577
      %643 = vst.msk [vmem:[%s258 + $0x5c] sm:$0xf] %vm619, %v578
      %644 = vst.msk [vmem:[%s258 + $0x60] sm:$0xf] %vm619, %v579
      %645 = vst.msk [vmem:[%s258 + $0x64] sm:$0xf] %vm619, %v580
      %646 = vst.msk [vmem:[%s258 + $0x68] sm:$0xf] %vm619, %v581
      %647 = vst.msk [vmem:[%s258 + $0x6c] sm:$0xf] %vm619, %v582
      %648 = vst.msk [vmem:[%s258 + $0x70] sm:$0xf] %vm619, %v583
      %649 = vst.msk [vmem:[%s258 + $0x74] sm:$0xf] %vm619, %v584
      %650 = vst.msk [vmem:[%s258 + $0x78] sm:$0xf] %vm619, %v585
      %651 = vst.msk [vmem:[%s258 + $0x7c] sm:$0xf] %vm619, %v586
      %s652 = smul.u32 32, %s19
      %p653 = scmp.lt.s32.totalorder %s18, 1
      %s654 = scalar_select %p653, %s18, 1
      %p655 = scmp.lt.s32.totalorder %s652, 31
      %s656 = scalar_select %p655, %s652, 31
      %s657 = smul.addr %s654, 32
      %s658 = sadd.s32 %s656, %s657
      %s659 = smul.addr %s658, 4
      %s660 = scalar_lea.vmem %s3, %s659
      // Predicated region
      $region33: #{bottleneck_forward.7} parent=31 // pred_check
        %p661 = pneg %p128
      $region34: #{bottleneck_forward.7} parent=31 // pred_check_branch
        %663 = sbr.rel (%p661) target = $region36
      $region35: #{bottleneck_forward.7} parent=31 // pred_region
        %s664 = smul.u32 32, %s19
      $region36: #{bottleneck_forward.7} parent=31 // pred_fallthru
        _
    $region32: #{bottleneck_forward.7} parent=5 // pred_fallthru
      _
    %p665 = scmp.le.s32.totalorder 2, %s9
    // Predicated region
    $region37: #{bottleneck_forward.7} parent=5 // pred_check
      %p666 = pneg %p665
    $region38: #{bottleneck_forward.7} parent=5 // pred_check_branch
      %668 = sbr.rel (%p666) target = $region40
    $region39: #{bottleneck_forward.7} parent=5 // pred_region
      %s669 = ssub.s32 %s9, 2
      // Predicated region
      $region41: #{bottleneck_forward.7} parent=39 // pred_check
        %p670 = pneg %p134
      $region42: #{bottleneck_forward.7} parent=39 // pred_check_branch
        %672 = sbr.rel (%p670) target = $region44
      $region43: #{bottleneck_forward.7} parent=39 // pred_region
        %s673 = smul.u32 32, %s21
        %p674 = scmp.lt.s32.totalorder %s20, 1
        %s675 = scalar_select %p674, %s20, 1
        %p676 = scmp.lt.s32.totalorder %s673, 31
        %s677 = scalar_select %p676, %s673, 31
        %s678 = smul.addr %s675, 32
        %s679 = sadd.s32 %s677, %s678
        %s680 = smul.addr %s679, 4
        %s681 = scalar_lea.vmem %s3, %s680
      $region44: #{bottleneck_forward.7} parent=39 // pred_fallthru
        _
    $region40: #{bottleneck_forward.7} parent=5 // pred_fallthru
      _
  $region6: #{bottleneck_forward.7} parent=0 // loop_footer
    %s13 = sadd.s32 1, %s9
  $region7: #{bottleneck_forward.7} parent=0 // loop_footer_branch
    %8 = sbr.rel target = $region3
  $region8: #{bottleneck_forward.7} parent=0 // loop_exit
    _

</llo_original>
